<compile_context>
chip_gen: v6e
topology: v6e:2x2x1
jax: 0.10.0
libtpu: 0.0.40
codegen_flags: <defaults>
</compile_context>

<pallas_src>
import functools

import jax
import jax.numpy as jnp
import numpy as np
from jax import lax
from jax.experimental import pallas as pl
from jax.experimental.pallas import tpu as pltpu


def _sigmoid(x):
    # 1 EUP op (tanh) + 2 cheap VALU ops, instead of exp + reciprocal (2 EUP
    # ops).  Also accurate enough for the final detection scores.
    return 0.5 * jnp.tanh(0.5 * x) + 0.5


def _classifier_kernel(num_layers, H, W, C, CP, AKP,
                       feat_ref, wbase_ref, scale_ref, shift_ref,
                       hwf_ref, hpb_ref, out_ref, xpad, xcol):
    """One (pyramid level, batch image) per grid step (both axes 'parallel').

    feat_ref  : (H, W, C)           bf16 input feature map (NHWC, C unpadded)
    wbase_ref : (L, 9*CP, CP)       bf16 level-invariant dw*pw weights (im2col layout)
    scale_ref : (L, CP)             f32  per-level BN scale   (padded chans: 0)
    shift_ref : (L, CP)             f32  per-level pw_b*scale + BN shift (padded: 0)
    hwf_ref   : (9*CP, AKP)         bf16 fused header weights (AK padded to 128)
    hpb_ref   : (1, AKP)            f32  header bias (padded with 0)
    out_ref   : (H, W, AKP)         bf16 sigmoid scores, lane-dense last dim
    xpad      : VMEM (H+2, W+2, CP) bf16 zero-padded activations (halo + chan pad)
    xcol      : VMEM (H*W, 9*CP)    bf16 im2col buffer (one fused-K matmul / layer)
    """
    N = H * W

    # Zero halo + channel padding, then drop the features into the interior.
    # Re-done every grid step -> correct under megacore sharding of the grid
    # (each core owns a private, uninitialised scratch).
    xpad[...] = jnp.zeros_like(xpad)
    xpad[1:H + 1, 1:W + 1, 0:C] = feat_ref[...]

    def build_im2col():
        # One im2col build per layer: the 9 sublane-shifted slices feed a
        # single wide matmul instead of 9 slice+reshape relayouts -> 9 shallow
        # matmuls -> 8 VPU adds.
        for t in range(9):
            ky, kx = divmod(t, 3)
            xcol[:, t * CP:(t + 1) * CP] = (
                xpad[ky:ky + H, kx:kx + W, :].reshape(N, CP))

    for i in range(num_layers):
        build_im2col()
        # Single fused matmul, contraction depth 9*CP: tap accumulation happens
        # inside the MXU; f32 accumulation via preferred_element_type.
        y = jnp.dot(xcol[...], wbase_ref[i],
                    preferred_element_type=jnp.float32)          # (N, CP) f32
        # Per-level BN scale + (pw bias * scale + BN shift), post-matmul in f32
        # so the conv weights stay level-invariant.
        y = y * scale_ref[i] + shift_ref[i]
        y = y * _sigmoid(y)                                       # swish
        xpad[1:H + 1, 1:W + 1, :] = y.reshape(H, W, CP).astype(xpad.dtype)

    # Header separable conv (no norm / activation) + final sigmoid.
    build_im2col()
    y = jnp.dot(xcol[...], hwf_ref[...],
                preferred_element_type=jnp.float32) + hpb_ref[0]
    out_ref[...] = _sigmoid(y).reshape(H, W, AKP).astype(out_ref.dtype)


def _round_up(x, m):
    return ((x + m - 1) // m) * m


def _fold_params(params, num_layers, CP, AKP):
    """Fold depthwise->pointwise (level-invariant), BN affine, lane padding."""
    dw_w, pw_w, pw_b, bn_scale, bn_shift, hdr_dw, hdr_pw, hdr_pb = params
    L = num_layers
    C = pw_w.shape[1]
    AK = hdr_pw.shape[1]
    nlev = bn_scale.shape[0]

    # Level-invariant fused depthwise*pointwise in im2col layout:
    #   wbase[i, t*CP + c, d] = dw[i, t, c] * pw[i, c, d]   (zero-padded to CP)
    dw9 = dw_w.reshape(L, 9, C)
    wf = dw9[:, :, :, None] * pw_w[:, None, :, :]                     # (L,9,C,C)
    wbase = jnp.zeros((L, 9, CP, CP), jnp.float32).at[:, :, :C, :C].set(wf)
    wbase = wbase.reshape(L, 9 * CP, CP).astype(jnp.bfloat16)

    # Per-(level, layer) affine, applied post-matmul in f32.  Padded channels'
    # shift is 0 so swish keeps them at exactly 0.
    scale = jnp.zeros((nlev, L, CP), jnp.float32).at[:, :, :C].set(bn_scale)
    shift = jnp.zeros((nlev, L, CP), jnp.float32).at[:, :, :C].set(
        pw_b[None] * bn_scale + bn_shift)

    # Header: fold depthwise into pointwise; pad C->CP and AK->AKP (lane-dense).
    hwf = jnp.zeros((9, CP, AKP), jnp.float32).at[:, :C, :AK].set(
        hdr_dw.reshape(9, C)[:, :, None] * hdr_pw[None, :, :])
    hwf = hwf.reshape(9 * CP, AKP).astype(jnp.bfloat16)
    hpb = jnp.zeros((1, AKP), jnp.float32).at[:, :AK].set(hdr_pb)
    return wbase, scale, shift, hwf, hpb


def classifier_forward(feats_nchw, params, num_layers):
    """feats_nchw: (num_levels, B, C, H, W) f32 -> (num_levels*B, A*K, H, W) f32."""
    nlev, B, C, H, W = feats_nchw.shape
    AK = params[6].shape[1]
    CP = _round_up(C, 128)
    AKP = _round_up(AK, 128)

    wbase, scale, shift, hwf, hpb = _fold_params(params, num_layers, CP, AKP)

    # TODO(synk): real EfficientDet levels have different (H, W) and level 0 is
    # large; production shapes need a per-level call plus a row-blocked grid
    # axis whose 1-row halo is filled with real neighbour rows (overlapping DMA
    # or recompute), with per-generation tile sizes (v7x: 64 MiB VMEM).  Taking
    # NHWC upstream would also remove these bracketing HBM transposes.
    feats = jnp.transpose(feats_nchw, (0, 1, 3, 4, 2)).astype(jnp.bfloat16)

    kernel = functools.partial(_classifier_kernel, num_layers, H, W, C, CP, AKP)

    out = pl.pallas_call(
        kernel,
        out_shape=jax.ShapeDtypeStruct((nlev, B, H, W, AKP), jnp.bfloat16),
        grid=(nlev, B),
        in_specs=[
            pl.BlockSpec((None, None, H, W, C), lambda l, b: (l, b, 0, 0, 0)),
            # Level-invariant weights: constant index map -> fetched once.
            pl.BlockSpec((num_layers, 9 * CP, CP), lambda l, b: (0, 0, 0)),
            pl.BlockSpec((None, num_layers, CP), lambda l, b: (l, 0, 0)),
            pl.BlockSpec((None, num_layers, CP), lambda l, b: (l, 0, 0)),
            pl.BlockSpec((9 * CP, AKP), lambda l, b: (0, 0)),
            pl.BlockSpec((1, AKP), lambda l, b: (0, 0)),
        ],
        out_specs=pl.BlockSpec((None, None, H, W, AKP),
                               lambda l, b: (l, b, 0, 0, 0)),
        scratch_shapes=[
            pltpu.VMEM((H + 2, W + 2, CP), jnp.bfloat16),   # padded activations
            pltpu.VMEM((H * W, 9 * CP), jnp.bfloat16),      # im2col buffer
        ],
        compiler_params=pltpu.CompilerParams(
            dimension_semantics=("parallel", "parallel"),
            vmem_limit_bytes=32 * 1024 * 1024),
    )(feats, wbase, scale, shift, hwf, hpb)

    # Drop lane padding and match torch: per-level NCHW tensors, cat along dim 0.
    out = out[..., :AK].astype(jnp.float32)
    return jnp.transpose(out, (0, 1, 4, 2, 3)).reshape(nlev * B, AK, H, W)


def classifier_reference(feats_nchw, params, num_layers):
    """Pure-JAX f32 reference (lax convolutions) for correctness checking."""
    dw_w, pw_w, pw_b, bn_scale, bn_shift, hdr_dw, hdr_pw, hdr_pb = params
    nlev, B, C, H, W = feats_nchw.shape
    x = jnp.transpose(feats_nchw, (0, 1, 3, 4, 2)).astype(jnp.float32)
    dn = ('NHWC', 'HWIO', 'NHWC')
    outs = []
    for l in range(nlev):
        y = x[l]
        for i in range(num_layers):
            y = lax.conv_general_dilated(
                y, dw_w[i][:, :, None, :], (1, 1), 'SAME',
                dimension_numbers=dn, feature_group_count=C,
                precision=lax.Precision.HIGHEST)
            y = jnp.einsum('bhwc,cd->bhwd', y, pw_w[i],
                           precision=lax.Precision.HIGHEST) + pw_b[i]
            y = y * bn_scale[l, i] + bn_shift[l, i]
            y = y * jax.nn.sigmoid(y)
        y = lax.conv_general_dilated(
            y, hdr_dw[:, :, None, :], (1, 1), 'SAME',
            dimension_numbers=dn, feature_group_count=C,
            precision=lax.Precision.HIGHEST)
        y = jnp.einsum('bhwc,cd->bhwd', y, hdr_pw,
                       precision=lax.Precision.HIGHEST) + hdr_pb[0]
        outs.append(jnp.transpose(jax.nn.sigmoid(y), (0, 3, 1, 2)))
    return jnp.concatenate(outs, axis=0)


if __name__ == "__main__":
    # Small synthetic config consistent with Classifier(in_channels, A, K, L).
    B, C, H, W = 2, 32, 8, 8
    num_anchors, num_classes, num_layers, num_levels = 3, 4, 2, 5
    AK = num_anchors * num_classes

    key = jax.random.PRNGKey(0)
    ks = jax.random.split(key, 12)
    feats = 0.5 * jax.random.normal(ks[0], (num_levels, B, C, H, W), jnp.float32)

    # Deterministic synthetic parameters (shapes follow the module's __init__).
    dw_w = 0.2 * jax.random.normal(ks[1], (num_layers, 3, 3, C), jnp.float32)
    pw_w = jax.random.normal(ks[2], (num_layers, C, C), jnp.float32) / jnp.sqrt(C)
    pw_b = 0.05 * jax.random.normal(ks[3], (num_layers, C), jnp.float32)
    gamma = 1.0 + 0.1 * jax.random.normal(ks[4], (num_levels, num_layers, C), jnp.float32)
    beta = 0.05 * jax.random.normal(ks[5], (num_levels, num_layers, C), jnp.float32)
    r_mean = 0.1 * jax.random.normal(ks[6], (num_levels, num_layers, C), jnp.float32)
    r_var = 1.0 + 0.1 * jnp.abs(jax.random.normal(ks[7], (num_levels, num_layers, C), jnp.float32))
    # BatchNorm2d in inference mode (eps=0.001), folded to scale/shift.
    eps = 0.001
    bn_scale = gamma / jnp.sqrt(r_var + eps)
    bn_shift = beta - r_mean * bn_scale
    hdr_dw = 0.2 * jax.random.normal(ks[8], (3, 3, C), jnp.float32)
    hdr_pw = jax.random.normal(ks[9], (C, AK), jnp.float32) / jnp.sqrt(C)
    hdr_pb = 0.05 * jax.random.normal(ks[10], (1, AK), jnp.float32)

    params = (dw_w, pw_w, pw_b, bn_scale, bn_shift, hdr_dw, hdr_pw, hdr_pb)

    out = classifier_forward(feats, params, num_layers)
    out = jax.block_until_ready(out)
    assert out.shape == (num_levels * B, AK, H, W)

    ref = classifier_reference(feats, params, num_layers)
    # Kernel uses bf16 matmul operands / bf16 writeback (f32 accumulation and
    # f32 per-level affine), so compare against the f32 reference with a
    # bf16-level tolerance.
    np.testing.assert_allclose(np.asarray(out), np.asarray(ref), rtol=1e-2, atol=1e-2)

    print("KERNEL_OK")
</pallas_src>

<mosaic_0001>
module attributes {stable_mosaic.version = 11 : i64} {
  func.func @_classifier_kernel(%arg0: i32, %arg1: i32, %arg2: memref<1x1x8x8x32xbf16, #tpu.memory_space<vmem>>, %arg3: memref<2x1152x128xbf16, #tpu.memory_space<vmem>>, %arg4: memref<1x2x128xf32, #tpu.memory_space<vmem>>, %arg5: memref<1x2x128xf32, #tpu.memory_space<vmem>>, %arg6: memref<1152x128xbf16, #tpu.memory_space<vmem>>, %arg7: memref<1x128xf32, #tpu.memory_space<vmem>>, %arg8: memref<1x1x8x8x128xbf16, #tpu.memory_space<vmem>>, %arg9: memref<10x10x128xbf16, #tpu.memory_space<vmem>>, %arg10: memref<64x1152xbf16, #tpu.memory_space<vmem>>) attributes {dimension_semantics = [#tpu.dimension_semantics<parallel>, #tpu.dimension_semantics<parallel>], iteration_bounds = array<i64: 5, 2>, scalar_prefetch = 0 : i64, scratch_operands = 2 : i64, tpu.core_type = #tpu.core_type<tc>, window_params = [{transform_indices = @transform_0, window_bounds = array<i64: 1, 1, 8, 8, 32>}, {pipeline_mode = #tpu.pipeline_mode<synchronous>, transform_indices = @transform_1, window_bounds = array<i64: 2, 1152, 128>}, {transform_indices = @transform_2, window_bounds = array<i64: 1, 2, 128>}, {transform_indices = @transform_3, window_bounds = array<i64: 1, 2, 128>}, {pipeline_mode = #tpu.pipeline_mode<synchronous>, transform_indices = @transform_4, window_bounds = array<i64: 1152, 128>}, {pipeline_mode = #tpu.pipeline_mode<synchronous>, transform_indices = @transform_5, window_bounds = array<i64: 1, 128>}, {transform_indices = @transform_6, window_bounds = array<i64: 1, 1, 8, 8, 128>}]} {
    %cst = arith.constant 0.000000e+00 : bf16
    %0 = vector.broadcast %cst : bf16 to vector<10x10x128xbf16>
    %c0 = arith.constant 0 : index
    %c0_0 = arith.constant 0 : index
    %c0_1 = arith.constant 0 : index
    %1 = vector.load %arg9[%c0, %c0_0, %c0_1] : memref<10x10x128xbf16, #tpu.memory_space<vmem>>, vector<10x10x128xbf16>
    tpu.vector_store %arg9[%c0, %c0_0, %c0_1], %0 {strides = array<i32>} : memref<10x10x128xbf16, #tpu.memory_space<vmem>>, vector<10x10x128xbf16>,
    %c0_2 = arith.constant 0 : index
    %c0_3 = arith.constant 0 : index
    %c0_4 = arith.constant 0 : index
    %c0_5 = arith.constant 0 : index
    %c0_6 = arith.constant 0 : index
    %2 = vector.load %arg2[%c0_2, %c0_3, %c0_4, %c0_5, %c0_6] : memref<1x1x8x8x32xbf16, #tpu.memory_space<vmem>>, vector<1x1x8x8x32xbf16>
    %3 = vector.shape_cast %2 : vector<1x1x8x8x32xbf16> to vector<8x8x32xbf16>
    %c1 = arith.constant 1 : index
    %c1_7 = arith.constant 1 : index
    %c0_8 = arith.constant 0 : index
    %4 = vector.load %arg9[%c1, %c1_7, %c0_8] : memref<10x10x128xbf16, #tpu.memory_space<vmem>>, vector<8x8x32xbf16>
    tpu.vector_store %arg9[%c1, %c1_7, %c0_8], %3 {strides = array<i32>} : memref<10x10x128xbf16, #tpu.memory_space<vmem>>, vector<8x8x32xbf16>,
    %c0_9 = arith.constant 0 : index
    %c0_10 = arith.constant 0 : index
    %c0_11 = arith.constant 0 : index
    %5 = vector.load %arg9[%c0_9, %c0_10, %c0_11] : memref<10x10x128xbf16, #tpu.memory_space<vmem>>, vector<8x8x128xbf16>
    %6 = vector.shape_cast %5 : vector<8x8x128xbf16> to vector<64x128xbf16>
    %c0_12 = arith.constant 0 : index
    %c0_13 = arith.constant 0 : index
    %7 = vector.load %arg10[%c0_12, %c0_13] : memref<64x1152xbf16, #tpu.memory_space<vmem>>, vector<64x128xbf16>
    tpu.vector_store %arg10[%c0_12, %c0_13], %6 {strides = array<i32>} : memref<64x1152xbf16, #tpu.memory_space<vmem>>, vector<64x128xbf16>,
    %c0_14 = arith.constant 0 : index
    %c1_15 = arith.constant 1 : index
    %c0_16 = arith.constant 0 : index
    %8 = vector.load %arg9[%c0_14, %c1_15, %c0_16] : memref<10x10x128xbf16, #tpu.memory_space<vmem>>, vector<8x8x128xbf16>
    %9 = vector.shape_cast %8 : vector<8x8x128xbf16> to vector<64x128xbf16>
    %c0_17 = arith.constant 0 : index
    %c128 = arith.constant 128 : index
    %10 = vector.load %arg10[%c0_17, %c128] : memref<64x1152xbf16, #tpu.memory_space<vmem>>, vector<64x128xbf16>
    tpu.vector_store %arg10[%c0_17, %c128], %9 {strides = array<i32>} : memref<64x1152xbf16, #tpu.memory_space<vmem>>, vector<64x128xbf16>,
    %c0_18 = arith.constant 0 : index
    %c2 = arith.constant 2 : index
    %c0_19 = arith.constant 0 : index
    %11 = vector.load %arg9[%c0_18, %c2, %c0_19] : memref<10x10x128xbf16, #tpu.memory_space<vmem>>, vector<8x8x128xbf16>
    %12 = vector.shape_cast %11 : vector<8x8x128xbf16> to vector<64x128xbf16>
    %c0_20 = arith.constant 0 : index
    %c256 = arith.constant 256 : index
    %13 = vector.load %arg10[%c0_20, %c256] : memref<64x1152xbf16, #tpu.memory_space<vmem>>, vector<64x128xbf16>
    tpu.vector_store %arg10[%c0_20, %c256], %12 {strides = array<i32>} : memref<64x1152xbf16, #tpu.memory_space<vmem>>, vector<64x128xbf16>,
    %c1_21 = arith.constant 1 : index
    %c0_22 = arith.constant 0 : index
    %c0_23 = arith.constant 0 : index
    %14 = vector.load %arg9[%c1_21, %c0_22, %c0_23] : memref<10x10x128xbf16, #tpu.memory_space<vmem>>, vector<8x8x128xbf16>
    %15 = vector.shape_cast %14 : vector<8x8x128xbf16> to vector<64x128xbf16>
    %c0_24 = arith.constant 0 : index
    %c384 = arith.constant 384 : index
    %16 = vector.load %arg10[%c0_24, %c384] : memref<64x1152xbf16, #tpu.memory_space<vmem>>, vector<64x128xbf16>
    tpu.vector_store %arg10[%c0_24, %c384], %15 {strides = array<i32>} : memref<64x1152xbf16, #tpu.memory_space<vmem>>, vector<64x128xbf16>,
    %c1_25 = arith.constant 1 : index
    %c1_26 = arith.constant 1 : index
    %c0_27 = arith.constant 0 : index
    %17 = vector.load %arg9[%c1_25, %c1_26, %c0_27] : memref<10x10x128xbf16, #tpu.memory_space<vmem>>, vector<8x8x128xbf16>
    %18 = vector.shape_cast %17 : vector<8x8x128xbf16> to vector<64x128xbf16>
    %c0_28 = arith.constant 0 : index
    %c512 = arith.constant 512 : index
    %19 = vector.load %arg10[%c0_28, %c512] : memref<64x1152xbf16, #tpu.memory_space<vmem>>, vector<64x128xbf16>
    tpu.vector_store %arg10[%c0_28, %c512], %18 {strides = array<i32>} : memref<64x1152xbf16, #tpu.memory_space<vmem>>, vector<64x128xbf16>,
    %c1_29 = arith.constant 1 : index
    %c2_30 = arith.constant 2 : index
    %c0_31 = arith.constant 0 : index
    %20 = vector.load %arg9[%c1_29, %c2_30, %c0_31] : memref<10x10x128xbf16, #tpu.memory_space<vmem>>, vector<8x8x128xbf16>
    %21 = vector.shape_cast %20 : vector<8x8x128xbf16> to vector<64x128xbf16>
    %c0_32 = arith.constant 0 : index
    %c640 = arith.constant 640 : index
    %22 = vector.load %arg10[%c0_32, %c640] : memref<64x1152xbf16, #tpu.memory_space<vmem>>, vector<64x128xbf16>
    tpu.vector_store %arg10[%c0_32, %c640], %21 {strides = array<i32>} : memref<64x1152xbf16, #tpu.memory_space<vmem>>, vector<64x128xbf16>,
    %c2_33 = arith.constant 2 : index
    %c0_34 = arith.constant 0 : index
    %c0_35 = arith.constant 0 : index
    %23 = vector.load %arg9[%c2_33, %c0_34, %c0_35] : memref<10x10x128xbf16, #tpu.memory_space<vmem>>, vector<8x8x128xbf16>
    %24 = vector.shape_cast %23 : vector<8x8x128xbf16> to vector<64x128xbf16>
    %c0_36 = arith.constant 0 : index
    %c768 = arith.constant 768 : index
    %25 = vector.load %arg10[%c0_36, %c768] : memref<64x1152xbf16, #tpu.memory_space<vmem>>, vector<64x128xbf16>
    tpu.vector_store %arg10[%c0_36, %c768], %24 {strides = array<i32>} : memref<64x1152xbf16, #tpu.memory_space<vmem>>, vector<64x128xbf16>,
    %c2_37 = arith.constant 2 : index
    %c1_38 = arith.constant 1 : index
    %c0_39 = arith.constant 0 : index
    %26 = vector.load %arg9[%c2_37, %c1_38, %c0_39] : memref<10x10x128xbf16, #tpu.memory_space<vmem>>, vector<8x8x128xbf16>
    %27 = vector.shape_cast %26 : vector<8x8x128xbf16> to vector<64x128xbf16>
    %c0_40 = arith.constant 0 : index
    %c896 = arith.constant 896 : index
    %28 = vector.load %arg10[%c0_40, %c896] : memref<64x1152xbf16, #tpu.memory_space<vmem>>, vector<64x128xbf16>
    tpu.vector_store %arg10[%c0_40, %c896], %27 {strides = array<i32>} : memref<64x1152xbf16, #tpu.memory_space<vmem>>, vector<64x128xbf16>,
    %c2_41 = arith.constant 2 : index
    %c2_42 = arith.constant 2 : index
    %c0_43 = arith.constant 0 : index
    %29 = vector.load %arg9[%c2_41, %c2_42, %c0_43] : memref<10x10x128xbf16, #tpu.memory_space<vmem>>, vector<8x8x128xbf16>
    %30 = vector.shape_cast %29 : vector<8x8x128xbf16> to vector<64x128xbf16>
    %c0_44 = arith.constant 0 : index
    %c1024 = arith.constant 1024 : index
    %31 = vector.load %arg10[%c0_44, %c1024] : memref<64x1152xbf16, #tpu.memory_space<vmem>>, vector<64x128xbf16>
    tpu.vector_store %arg10[%c0_44, %c1024], %30 {strides = array<i32>} : memref<64x1152xbf16, #tpu.memory_space<vmem>>, vector<64x128xbf16>,
    %c0_45 = arith.constant 0 : index
    %c0_46 = arith.constant 0 : index
    %32 = vector.load %arg10[%c0_45, %c0_46] : memref<64x1152xbf16, #tpu.memory_space<vmem>>, vector<64x1152xbf16>
    %c0_47 = arith.constant 0 : index
    %c0_48 = arith.constant 0 : index
    %c0_49 = arith.constant 0 : index
    %33 = vector.load %arg3[%c0_47, %c0_48, %c0_49] : memref<2x1152x128xbf16, #tpu.memory_space<vmem>>, vector<1x1152x128xbf16>
    %34 = vector.shape_cast %33 : vector<1x1152x128xbf16> to vector<1152x128xbf16>
    %cst_50 = arith.constant dense<0.000000e+00> : vector<64x128xf32>
    %35 = tpu.matmul %32, %34, %cst_50 {dimension_numbers = #tpu.dot_dimension_numbers<[1], [0], [0], [1], [0, 0, 1, 1], [], []>} : vector<64x1152xbf16>, vector<1152x128xbf16>, vector<64x128xf32> -> vector<64x128xf32>
    %c0_51 = arith.constant 0 : index
    %c0_52 = arith.constant 0 : index
    %c0_53 = arith.constant 0 : index
    %36 = vector.load %arg4[%c0_51, %c0_52, %c0_53] : memref<1x2x128xf32, #tpu.memory_space<vmem>>, vector<1x1x128xf32>
    %37 = vector.shape_cast %36 : vector<1x1x128xf32> to vector<128xf32>
    %38 = vector.shape_cast %37 : vector<128xf32> to vector<1x128xf32>
    %39 = vector.broadcast %38 : vector<1x128xf32> to vector<64x128xf32>
    %40 = arith.mulf %35, %39 : vector<64x128xf32>
    %c0_54 = arith.constant 0 : index
    %c0_55 = arith.constant 0 : index
    %c0_56 = arith.constant 0 : index
    %41 = vector.load %arg5[%c0_54, %c0_55, %c0_56] : memref<1x2x128xf32, #tpu.memory_space<vmem>>, vector<1x1x128xf32>
    %42 = vector.shape_cast %41 : vector<1x1x128xf32> to vector<128xf32>
    %43 = vector.shape_cast %42 : vector<128xf32> to vector<1x128xf32>
    %44 = vector.broadcast %43 : vector<1x128xf32> to vector<64x128xf32>
    %45 = arith.addf %40, %44 : vector<64x128xf32>
    %cst_57 = arith.constant 5.000000e-01 : f32
    %46 = vector.broadcast %cst_57 : f32 to vector<64x128xf32>
    %47 = arith.mulf %46, %45 : vector<64x128xf32>
    %48 = math.tanh %47 : vector<64x128xf32>
    %cst_58 = arith.constant 5.000000e-01 : f32
    %49 = vector.broadcast %cst_58 : f32 to vector<64x128xf32>
    %50 = arith.mulf %49, %48 : vector<64x128xf32>
    %cst_59 = arith.constant 5.000000e-01 : f32
    %51 = vector.broadcast %cst_59 : f32 to vector<64x128xf32>
    %52 = arith.addf %50, %51 : vector<64x128xf32>
    %53 = arith.mulf %45, %52 : vector<64x128xf32>
    %54 = vector.shape_cast %53 : vector<64x128xf32> to vector<8x8x128xf32>
    %55 = arith.truncf %54 : vector<8x8x128xf32> to vector<8x8x128xbf16>
    %c1_60 = arith.constant 1 : index
    %c1_61 = arith.constant 1 : index
    %c0_62 = arith.constant 0 : index
    %56 = vector.load %arg9[%c1_60, %c1_61, %c0_62] : memref<10x10x128xbf16, #tpu.memory_space<vmem>>, vector<8x8x128xbf16>
    tpu.vector_store %arg9[%c1_60, %c1_61, %c0_62], %55 {strides = array<i32>} : memref<10x10x128xbf16, #tpu.memory_space<vmem>>, vector<8x8x128xbf16>,
    %c0_63 = arith.constant 0 : index
    %c0_64 = arith.constant 0 : index
    %c0_65 = arith.constant 0 : index
    %57 = vector.load %arg9[%c0_63, %c0_64, %c0_65] : memref<10x10x128xbf16, #tpu.memory_space<vmem>>, vector<8x8x128xbf16>
    %58 = vector.shape_cast %57 : vector<8x8x128xbf16> to vector<64x128xbf16>
    %c0_66 = arith.constant 0 : index
    %c0_67 = arith.constant 0 : index
    %59 = vector.load %arg10[%c0_66, %c0_67] : memref<64x1152xbf16, #tpu.memory_space<vmem>>, vector<64x128xbf16>
    tpu.vector_store %arg10[%c0_66, %c0_67], %58 {strides = array<i32>} : memref<64x1152xbf16, #tpu.memory_space<vmem>>, vector<64x128xbf16>,
    %c0_68 = arith.constant 0 : index
    %c1_69 = arith.constant 1 : index
    %c0_70 = arith.constant 0 : index
    %60 = vector.load %arg9[%c0_68, %c1_69, %c0_70] : memref<10x10x128xbf16, #tpu.memory_space<vmem>>, vector<8x8x128xbf16>
    %61 = vector.shape_cast %60 : vector<8x8x128xbf16> to vector<64x128xbf16>
    %c0_71 = arith.constant 0 : index
    %c128_72 = arith.constant 128 : index
    %62 = vector.load %arg10[%c0_71, %c128_72] : memref<64x1152xbf16, #tpu.memory_space<vmem>>, vector<64x128xbf16>
    tpu.vector_store %arg10[%c0_71, %c128_72], %61 {strides = array<i32>} : memref<64x1152xbf16, #tpu.memory_space<vmem>>, vector<64x128xbf16>,
    %c0_73 = arith.constant 0 : index
    %c2_74 = arith.constant 2 : index
    %c0_75 = arith.constant 0 : index
    %63 = vector.load %arg9[%c0_73, %c2_74, %c0_75] : memref<10x10x128xbf16, #tpu.memory_space<vmem>>, vector<8x8x128xbf16>
    %64 = vector.shape_cast %63 : vector<8x8x128xbf16> to vector<64x128xbf16>
    %c0_76 = arith.constant 0 : index
    %c256_77 = arith.constant 256 : index
    %65 = vector.load %arg10[%c0_76, %c256_77] : memref<64x1152xbf16, #tpu.memory_space<vmem>>, vector<64x128xbf16>
    tpu.vector_store %arg10[%c0_76, %c256_77], %64 {strides = array<i32>} : memref<64x1152xbf16, #tpu.memory_space<vmem>>, vector<64x128xbf16>,
    %c1_78 = arith.constant 1 : index
    %c0_79 = arith.constant 0 : index
    %c0_80 = arith.constant 0 : index
    %66 = vector.load %arg9[%c1_78, %c0_79, %c0_80] : memref<10x10x128xbf16, #tpu.memory_space<vmem>>, vector<8x8x128xbf16>
    %67 = vector.shape_cast %66 : vector<8x8x128xbf16> to vector<64x128xbf16>
    %c0_81 = arith.constant 0 : index
    %c384_82 = arith.constant 384 : index
    %68 = vector.load %arg10[%c0_81, %c384_82] : memref<64x1152xbf16, #tpu.memory_space<vmem>>, vector<64x128xbf16>
    tpu.vector_store %arg10[%c0_81, %c384_82], %67 {strides = array<i32>} : memref<64x1152xbf16, #tpu.memory_space<vmem>>, vector<64x128xbf16>,
    %c1_83 = arith.constant 1 : index
    %c1_84 = arith.constant 1 : index
    %c0_85 = arith.constant 0 : index
    %69 = vector.load %arg9[%c1_83, %c1_84, %c0_85] : memref<10x10x128xbf16, #tpu.memory_space<vmem>>, vector<8x8x128xbf16>
    %70 = vector.shape_cast %69 : vector<8x8x128xbf16> to vector<64x128xbf16>
    %c0_86 = arith.constant 0 : index
    %c512_87 = arith.constant 512 : index
    %71 = vector.load %arg10[%c0_86, %c512_87] : memref<64x1152xbf16, #tpu.memory_space<vmem>>, vector<64x128xbf16>
    tpu.vector_store %arg10[%c0_86, %c512_87], %70 {strides = array<i32>} : memref<64x1152xbf16, #tpu.memory_space<vmem>>, vector<64x128xbf16>,
    %c1_88 = arith.constant 1 : index
    %c2_89 = arith.constant 2 : index
    %c0_90 = arith.constant 0 : index
    %72 = vector.load %arg9[%c1_88, %c2_89, %c0_90] : memref<10x10x128xbf16, #tpu.memory_space<vmem>>, vector<8x8x128xbf16>
    %73 = vector.shape_cast %72 : vector<8x8x128xbf16> to vector<64x128xbf16>
    %c0_91 = arith.constant 0 : index
    %c640_92 = arith.constant 640 : index
    %74 = vector.load %arg10[%c0_91, %c640_92] : memref<64x1152xbf16, #tpu.memory_space<vmem>>, vector<64x128xbf16>
    tpu.vector_store %arg10[%c0_91, %c640_92], %73 {strides = array<i32>} : memref<64x1152xbf16, #tpu.memory_space<vmem>>, vector<64x128xbf16>,
    %c2_93 = arith.constant 2 : index
    %c0_94 = arith.constant 0 : index
    %c0_95 = arith.constant 0 : index
    %75 = vector.load %arg9[%c2_93, %c0_94, %c0_95] : memref<10x10x128xbf16, #tpu.memory_space<vmem>>, vector<8x8x128xbf16>
    %76 = vector.shape_cast %75 : vector<8x8x128xbf16> to vector<64x128xbf16>
    %c0_96 = arith.constant 0 : index
    %c768_97 = arith.constant 768 : index
    %77 = vector.load %arg10[%c0_96, %c768_97] : memref<64x1152xbf16, #tpu.memory_space<vmem>>, vector<64x128xbf16>
    tpu.vector_store %arg10[%c0_96, %c768_97], %76 {strides = array<i32>} : memref<64x1152xbf16, #tpu.memory_space<vmem>>, vector<64x128xbf16>,
    %c2_98 = arith.constant 2 : index
    %c1_99 = arith.constant 1 : index
    %c0_100 = arith.constant 0 : index
    %78 = vector.load %arg9[%c2_98, %c1_99, %c0_100] : memref<10x10x128xbf16, #tpu.memory_space<vmem>>, vector<8x8x128xbf16>
    %79 = vector.shape_cast %78 : vector<8x8x128xbf16> to vector<64x128xbf16>
    %c0_101 = arith.constant 0 : index
    %c896_102 = arith.constant 896 : index
    %80 = vector.load %arg10[%c0_101, %c896_102] : memref<64x1152xbf16, #tpu.memory_space<vmem>>, vector<64x128xbf16>
    tpu.vector_store %arg10[%c0_101, %c896_102], %79 {strides = array<i32>} : memref<64x1152xbf16, #tpu.memory_space<vmem>>, vector<64x128xbf16>,
    %c2_103 = arith.constant 2 : index
    %c2_104 = arith.constant 2 : index
    %c0_105 = arith.constant 0 : index
    %81 = vector.load %arg9[%c2_103, %c2_104, %c0_105] : memref<10x10x128xbf16, #tpu.memory_space<vmem>>, vector<8x8x128xbf16>
    %82 = vector.shape_cast %81 : vector<8x8x128xbf16> to vector<64x128xbf16>
    %c0_106 = arith.constant 0 : index
    %c1024_107 = arith.constant 1024 : index
    %83 = vector.load %arg10[%c0_106, %c1024_107] : memref<64x1152xbf16, #tpu.memory_space<vmem>>, vector<64x128xbf16>
    tpu.vector_store %arg10[%c0_106, %c1024_107], %82 {strides = array<i32>} : memref<64x1152xbf16, #tpu.memory_space<vmem>>, vector<64x128xbf16>,
    %c0_108 = arith.constant 0 : index
    %c0_109 = arith.constant 0 : index
    %84 = vector.load %arg10[%c0_108, %c0_109] : memref<64x1152xbf16, #tpu.memory_space<vmem>>, vector<64x1152xbf16>
    %c1_110 = arith.constant 1 : index
    %c0_111 = arith.constant 0 : index
    %c0_112 = arith.constant 0 : index
    %85 = vector.load %arg3[%c1_110, %c0_111, %c0_112] : memref<2x1152x128xbf16, #tpu.memory_space<vmem>>, vector<1x1152x128xbf16>
    %86 = vector.shape_cast %85 : vector<1x1152x128xbf16> to vector<1152x128xbf16>
    %cst_113 = arith.constant dense<0.000000e+00> : vector<64x128xf32>
    %87 = tpu.matmul %84, %86, %cst_113 {dimension_numbers = #tpu.dot_dimension_numbers<[1], [0], [0], [1], [0, 0, 1, 1], [], []>} : vector<64x1152xbf16>, vector<1152x128xbf16>, vector<64x128xf32> -> vector<64x128xf32>
    %c0_114 = arith.constant 0 : index
    %c1_115 = arith.constant 1 : index
    %c0_116 = arith.constant 0 : index
    %88 = vector.load %arg4[%c0_114, %c1_115, %c0_116] : memref<1x2x128xf32, #tpu.memory_space<vmem>>, vector<1x1x128xf32>
    %89 = vector.shape_cast %88 : vector<1x1x128xf32> to vector<128xf32>
    %90 = vector.shape_cast %89 : vector<128xf32> to vector<1x128xf32>
    %91 = vector.broadcast %90 : vector<1x128xf32> to vector<64x128xf32>
    %92 = arith.mulf %87, %91 : vector<64x128xf32>
    %c0_117 = arith.constant 0 : index
    %c1_118 = arith.constant 1 : index
    %c0_119 = arith.constant 0 : index
    %93 = vector.load %arg5[%c0_117, %c1_118, %c0_119] : memref<1x2x128xf32, #tpu.memory_space<vmem>>, vector<1x1x128xf32>
    %94 = vector.shape_cast %93 : vector<1x1x128xf32> to vector<128xf32>
    %95 = vector.shape_cast %94 : vector<128xf32> to vector<1x128xf32>
    %96 = vector.broadcast %95 : vector<1x128xf32> to vector<64x128xf32>
    %97 = arith.addf %92, %96 : vector<64x128xf32>
    %cst_120 = arith.constant 5.000000e-01 : f32
    %98 = vector.broadcast %cst_120 : f32 to vector<64x128xf32>
    %99 = arith.mulf %98, %97 : vector<64x128xf32>
    %100 = math.tanh %99 : vector<64x128xf32>
    %cst_121 = arith.constant 5.000000e-01 : f32
    %101 = vector.broadcast %cst_121 : f32 to vector<64x128xf32>
    %102 = arith.mulf %101, %100 : vector<64x128xf32>
    %cst_122 = arith.constant 5.000000e-01 : f32
    %103 = vector.broadcast %cst_122 : f32 to vector<64x128xf32>
    %104 = arith.addf %102, %103 : vector<64x128xf32>
    %105 = arith.mulf %97, %104 : vector<64x128xf32>
    %106 = vector.shape_cast %105 : vector<64x128xf32> to vector<8x8x128xf32>
    %107 = arith.truncf %106 : vector<8x8x128xf32> to vector<8x8x128xbf16>
    %c1_123 = arith.constant 1 : index
    %c1_124 = arith.constant 1 : index
    %c0_125 = arith.constant 0 : index
    %108 = vector.load %arg9[%c1_123, %c1_124, %c0_125] : memref<10x10x128xbf16, #tpu.memory_space<vmem>>, vector<8x8x128xbf16>
    tpu.vector_store %arg9[%c1_123, %c1_124, %c0_125], %107 {strides = array<i32>} : memref<10x10x128xbf16, #tpu.memory_space<vmem>>, vector<8x8x128xbf16>,
    %c0_126 = arith.constant 0 : index
    %c0_127 = arith.constant 0 : index
    %c0_128 = arith.constant 0 : index
    %109 = vector.load %arg9[%c0_126, %c0_127, %c0_128] : memref<10x10x128xbf16, #tpu.memory_space<vmem>>, vector<8x8x128xbf16>
    %110 = vector.shape_cast %109 : vector<8x8x128xbf16> to vector<64x128xbf16>
    %c0_129 = arith.constant 0 : index
    %c0_130 = arith.constant 0 : index
    %111 = vector.load %arg10[%c0_129, %c0_130] : memref<64x1152xbf16, #tpu.memory_space<vmem>>, vector<64x128xbf16>
    tpu.vector_store %arg10[%c0_129, %c0_130], %110 {strides = array<i32>} : memref<64x1152xbf16, #tpu.memory_space<vmem>>, vector<64x128xbf16>,
    %c0_131 = arith.constant 0 : index
    %c1_132 = arith.constant 1 : index
    %c0_133 = arith.constant 0 : index
    %112 = vector.load %arg9[%c0_131, %c1_132, %c0_133] : memref<10x10x128xbf16, #tpu.memory_space<vmem>>, vector<8x8x128xbf16>
    %113 = vector.shape_cast %112 : vector<8x8x128xbf16> to vector<64x128xbf16>
    %c0_134 = arith.constant 0 : index
    %c128_135 = arith.constant 128 : index
    %114 = vector.load %arg10[%c0_134, %c128_135] : memref<64x1152xbf16, #tpu.memory_space<vmem>>, vector<64x128xbf16>
    tpu.vector_store %arg10[%c0_134, %c128_135], %113 {strides = array<i32>} : memref<64x1152xbf16, #tpu.memory_space<vmem>>, vector<64x128xbf16>,
    %c0_136 = arith.constant 0 : index
    %c2_137 = arith.constant 2 : index
    %c0_138 = arith.constant 0 : index
    %115 = vector.load %arg9[%c0_136, %c2_137, %c0_138] : memref<10x10x128xbf16, #tpu.memory_space<vmem>>, vector<8x8x128xbf16>
    %116 = vector.shape_cast %115 : vector<8x8x128xbf16> to vector<64x128xbf16>
    %c0_139 = arith.constant 0 : index
    %c256_140 = arith.constant 256 : index
    %117 = vector.load %arg10[%c0_139, %c256_140] : memref<64x1152xbf16, #tpu.memory_space<vmem>>, vector<64x128xbf16>
    tpu.vector_store %arg10[%c0_139, %c256_140], %116 {strides = array<i32>} : memref<64x1152xbf16, #tpu.memory_space<vmem>>, vector<64x128xbf16>,
    %c1_141 = arith.constant 1 : index
    %c0_142 = arith.constant 0 : index
    %c0_143 = arith.constant 0 : index
    %118 = vector.load %arg9[%c1_141, %c0_142, %c0_143] : memref<10x10x128xbf16, #tpu.memory_space<vmem>>, vector<8x8x128xbf16>
    %119 = vector.shape_cast %118 : vector<8x8x128xbf16> to vector<64x128xbf16>
    %c0_144 = arith.constant 0 : index
    %c384_145 = arith.constant 384 : index
    %120 = vector.load %arg10[%c0_144, %c384_145] : memref<64x1152xbf16, #tpu.memory_space<vmem>>, vector<64x128xbf16>
    tpu.vector_store %arg10[%c0_144, %c384_145], %119 {strides = array<i32>} : memref<64x1152xbf16, #tpu.memory_space<vmem>>, vector<64x128xbf16>,
    %c1_146 = arith.constant 1 : index
    %c1_147 = arith.constant 1 : index
    %c0_148 = arith.constant 0 : index
    %121 = vector.load %arg9[%c1_146, %c1_147, %c0_148] : memref<10x10x128xbf16, #tpu.memory_space<vmem>>, vector<8x8x128xbf16>
    %122 = vector.shape_cast %121 : vector<8x8x128xbf16> to vector<64x128xbf16>
    %c0_149 = arith.constant 0 : index
    %c512_150 = arith.constant 512 : index
    %123 = vector.load %arg10[%c0_149, %c512_150] : memref<64x1152xbf16, #tpu.memory_space<vmem>>, vector<64x128xbf16>
    tpu.vector_store %arg10[%c0_149, %c512_150], %122 {strides = array<i32>} : memref<64x1152xbf16, #tpu.memory_space<vmem>>, vector<64x128xbf16>,
    %c1_151 = arith.constant 1 : index
    %c2_152 = arith.constant 2 : index
    %c0_153 = arith.constant 0 : index
    %124 = vector.load %arg9[%c1_151, %c2_152, %c0_153] : memref<10x10x128xbf16, #tpu.memory_space<vmem>>, vector<8x8x128xbf16>
    %125 = vector.shape_cast %124 : vector<8x8x128xbf16> to vector<64x128xbf16>
    %c0_154 = arith.constant 0 : index
    %c640_155 = arith.constant 640 : index
    %126 = vector.load %arg10[%c0_154, %c640_155] : memref<64x1152xbf16, #tpu.memory_space<vmem>>, vector<64x128xbf16>
    tpu.vector_store %arg10[%c0_154, %c640_155], %125 {strides = array<i32>} : memref<64x1152xbf16, #tpu.memory_space<vmem>>, vector<64x128xbf16>,
    %c2_156 = arith.constant 2 : index
    %c0_157 = arith.constant 0 : index
    %c0_158 = arith.constant 0 : index
    %127 = vector.load %arg9[%c2_156, %c0_157, %c0_158] : memref<10x10x128xbf16, #tpu.memory_space<vmem>>, vector<8x8x128xbf16>
    %128 = vector.shape_cast %127 : vector<8x8x128xbf16> to vector<64x128xbf16>
    %c0_159 = arith.constant 0 : index
    %c768_160 = arith.constant 768 : index
    %129 = vector.load %arg10[%c0_159, %c768_160] : memref<64x1152xbf16, #tpu.memory_space<vmem>>, vector<64x128xbf16>
    tpu.vector_store %arg10[%c0_159, %c768_160], %128 {strides = array<i32>} : memref<64x1152xbf16, #tpu.memory_space<vmem>>, vector<64x128xbf16>,
    %c2_161 = arith.constant 2 : index
    %c1_162 = arith.constant 1 : index
    %c0_163 = arith.constant 0 : index
    %130 = vector.load %arg9[%c2_161, %c1_162, %c0_163] : memref<10x10x128xbf16, #tpu.memory_space<vmem>>, vector<8x8x128xbf16>
    %131 = vector.shape_cast %130 : vector<8x8x128xbf16> to vector<64x128xbf16>
    %c0_164 = arith.constant 0 : index
    %c896_165 = arith.constant 896 : index
    %132 = vector.load %arg10[%c0_164, %c896_165] : memref<64x1152xbf16, #tpu.memory_space<vmem>>, vector<64x128xbf16>
    tpu.vector_store %arg10[%c0_164, %c896_165], %131 {strides = array<i32>} : memref<64x1152xbf16, #tpu.memory_space<vmem>>, vector<64x128xbf16>,
    %c2_166 = arith.constant 2 : index
    %c2_167 = arith.constant 2 : index
    %c0_168 = arith.constant 0 : index
    %133 = vector.load %arg9[%c2_166, %c2_167, %c0_168] : memref<10x10x128xbf16, #tpu.memory_space<vmem>>, vector<8x8x128xbf16>
    %134 = vector.shape_cast %133 : vector<8x8x128xbf16> to vector<64x128xbf16>
    %c0_169 = arith.constant 0 : index
    %c1024_170 = arith.constant 1024 : index
    %135 = vector.load %arg10[%c0_169, %c1024_170] : memref<64x1152xbf16, #tpu.memory_space<vmem>>, vector<64x128xbf16>
    tpu.vector_store %arg10[%c0_169, %c1024_170], %134 {strides = array<i32>} : memref<64x1152xbf16, #tpu.memory_space<vmem>>, vector<64x128xbf16>,
    %c0_171 = arith.constant 0 : index
    %c0_172 = arith.constant 0 : index
    %136 = vector.load %arg10[%c0_171, %c0_172] : memref<64x1152xbf16, #tpu.memory_space<vmem>>, vector<64x1152xbf16>
    %c0_173 = arith.constant 0 : index
    %c0_174 = arith.constant 0 : index
    %137 = vector.load %arg6[%c0_173, %c0_174] : memref<1152x128xbf16, #tpu.memory_space<vmem>>, vector<1152x128xbf16>
    %cst_175 = arith.constant dense<0.000000e+00> : vector<64x128xf32>
    %138 = tpu.matmul %136, %137, %cst_175 {dimension_numbers = #tpu.dot_dimension_numbers<[1], [0], [0], [1], [0, 0, 1, 1], [], []>} : vector<64x1152xbf16>, vector<1152x128xbf16>, vector<64x128xf32> -> vector<64x128xf32>
    %c0_176 = arith.constant 0 : index
    %c0_177 = arith.constant 0 : index
    %139 = vector.load %arg7[%c0_176, %c0_177] : memref<1x128xf32, #tpu.memory_space<vmem>>, vector<1x128xf32>
    %140 = vector.shape_cast %139 : vector<1x128xf32> to vector<128xf32>
    %141 = vector.shape_cast %140 : vector<128xf32> to vector<1x128xf32>
    %142 = vector.broadcast %141 : vector<1x128xf32> to vector<64x128xf32>
    %143 = arith.addf %138, %142 : vector<64x128xf32>
    %cst_178 = arith.constant 5.000000e-01 : f32
    %144 = vector.broadcast %cst_178 : f32 to vector<64x128xf32>
    %145 = arith.mulf %144, %143 : vector<64x128xf32>
    %146 = math.tanh %145 : vector<64x128xf32>
    %cst_179 = arith.constant 5.000000e-01 : f32
    %147 = vector.broadcast %cst_179 : f32 to vector<64x128xf32>
    %148 = arith.mulf %147, %146 : vector<64x128xf32>
    %cst_180 = arith.constant 5.000000e-01 : f32
    %149 = vector.broadcast %cst_180 : f32 to vector<64x128xf32>
    %150 = arith.addf %148, %149 : vector<64x128xf32>
    %151 = vector.shape_cast %150 : vector<64x128xf32> to vector<8x8x128xf32>
    %152 = arith.truncf %151 : vector<8x8x128xf32> to vector<8x8x128xbf16>
    %c0_181 = arith.constant 0 : index
    %c0_182 = arith.constant 0 : index
    %c0_183 = arith.constant 0 : index
    %c0_184 = arith.constant 0 : index
    %c0_185 = arith.constant 0 : index
    %153 = vector.load %arg8[%c0_181, %c0_182, %c0_183, %c0_184, %c0_185] : memref<1x1x8x8x128xbf16, #tpu.memory_space<vmem>>, vector<1x1x8x8x128xbf16>
    %154 = vector.shape_cast %153 : vector<1x1x8x8x128xbf16> to vector<8x8x128xbf16>
    %155 = vector.shape_cast %152 : vector<8x8x128xbf16> to vector<1x1x8x8x128xbf16>
    tpu.vector_store %arg8[%c0_181, %c0_182, %c0_183, %c0_184, %c0_185], %155 {strides = array<i32>} : memref<1x1x8x8x128xbf16, #tpu.memory_space<vmem>>, vector<1x1x8x8x128xbf16>,
    return
  }
  func.func @transform_0(%arg0: i32, %arg1: i32) -> (i32, i32, i32, i32, i32) {
    %c0_i32 = arith.constant 0 : i32
    %c0_i32_0 = arith.constant 0 : i32
    %c0_i32_1 = arith.constant 0 : i32
    %c0_i32_2 = arith.constant 0 : i32
    return %arg0, %arg1, %c0_i32, %c0_i32_0, %c0_i32_1 : i32, i32, i32, i32, i32
  }
  func.func @transform_1(%arg0: i32, %arg1: i32) -> (i32, i32, i32) {
    %c0_i32 = arith.constant 0 : i32
    %c0_i32_0 = arith.constant 0 : i32
    %c0_i32_1 = arith.constant 0 : i32
    %c0_i32_2 = arith.constant 0 : i32
    return %c0_i32, %c0_i32_0, %c0_i32_1 : i32, i32, i32
  }
  func.func @transform_2(%arg0: i32, %arg1: i32) -> (i32, i32, i32) {
    %c0_i32 = arith.constant 0 : i32
    %c0_i32_0 = arith.constant 0 : i32
    %c0_i32_1 = arith.constant 0 : i32
    return %arg0, %c0_i32, %c0_i32_0 : i32, i32, i32
  }
  func.func @transform_3(%arg0: i32, %arg1: i32) -> (i32, i32, i32) {
    %c0_i32 = arith.constant 0 : i32
    %c0_i32_0 = arith.constant 0 : i32
    %c0_i32_1 = arith.constant 0 : i32
    return %arg0, %c0_i32, %c0_i32_0 : i32, i32, i32
  }
  func.func @transform_4(%arg0: i32, %arg1: i32) -> (i32, i32) {
    %c0_i32 = arith.constant 0 : i32
    %c0_i32_0 = arith.constant 0 : i32
    %c0_i32_1 = arith.constant 0 : i32
    return %c0_i32, %c0_i32_0 : i32, i32
  }
  func.func @transform_5(%arg0: i32, %arg1: i32) -> (i32, i32) {
    %c0_i32 = arith.constant 0 : i32
    %c0_i32_0 = arith.constant 0 : i32
    %c0_i32_1 = arith.constant 0 : i32
    return %c0_i32, %c0_i32_0 : i32, i32
  }
  func.func @transform_6(%arg0: i32, %arg1: i32) -> (i32, i32, i32, i32, i32) {
    %c0_i32 = arith.constant 0 : i32
    %c0_i32_0 = arith.constant 0 : i32
    %c0_i32_1 = arith.constant 0 : i32
    %c0_i32_2 = arith.constant 0 : i32
    return %arg0, %arg1, %c0_i32, %c0_i32_0, %c0_i32_1 : i32, i32, i32, i32, i32
  }
}

</mosaic_0001>

<llo_original>
// kernel: tpu_custom_call.1
$region0: #{tpu_custom_call.1}
  #allocation0 [shape = 'u32[]', space=smem, size = 0x4, offset = 0x4, fixed_abs, tag = 'smem constant byte address 0x4 - core index']
  #allocation1 [shape = 'u32[144,128]{1,0:T(1,128)}', space=vmem, size = 0x12000, scoped, tag = 'internal scratch']
  #allocation2 [shape = 'bf16[10,10,128]{2,1,0:T(8,128)(2,1)}', space=vmem, size = 0xa000, scoped, tag = 'scratch operand']
  #allocation3 [shape = 'bf16[64,1152]{1,0:T(8,128)(2,1)}', space=vmem, size = 0x24000, scoped, tag = 'scratch operand']
  %s0 = inlined_call_operand.hbm [shape: bf16[5,2,8,8,32], index: 0, kind: input, shape index: {}]
  %s1 = inlined_call_operand.hbm [shape: bf16[2,1152,128], index: 1, kind: input, shape index: {}]
  %s2 = inlined_call_operand.hbm [shape: f32[5,2,128], index: 2, kind: input, shape index: {}]
  %s3 = inlined_call_operand.hbm [shape: f32[5,2,128], index: 3, kind: input, shape index: {}]
  %s4 = inlined_call_operand.hbm [shape: bf16[1152,128], index: 4, kind: input, shape index: {}]
  %s5 = inlined_call_operand.vmem [shape: f32[1,128], index: 5, kind: input, shape index: {}]
  %s6 = inlined_call_operand.hbm [shape: bf16[5,2,8,8,128], index: 6, kind: output, shape index: {}]
  %s7 = sld [smem:[#allocation0]]
  $region77: #{tpu_custom_call.1} parent=0
    _
  %s9 = ssub.s32 1, %s7
  %s10 = scalar_select 0, %s9, %s7
  $region1: #{tpu_custom_call.1} parent=0
    #allocation4 [shape = 'u8[32768]{0}', space=vmem, size = 0x8000, scoped, tag = 'input window, operand 0']
    #allocation5 [shape = 's32[2]{0}', space=sflag, size = 0x8, scoped, tag = 'scoped memory for tpu_custom_call.1']
    #allocation6 [shape = 's32[2]{0}', space=sflag, size = 0x8, scoped, tag = 'scoped memory for tpu_custom_call.1']
    #allocation7 [shape = 'u8[589824]{0}', space=vmem, size = 0x90000, scoped, tag = 'input window, operand 1, single buffered']
    #allocation8 [shape = 's32[1]{0}', space=sflag, size = 0x4, scoped, tag = 'scoped memory for tpu_custom_call.1']
    #allocation9 [shape = 'u8[2048]{0}', space=vmem, size = 0x800, scoped, tag = 'input window, operand 2']
    #allocation10 [shape = 'u8[2048]{0}', space=vmem, size = 0x800, scoped, tag = 'input window, operand 3']
    #allocation11 [shape = 'u8[294912]{0}', space=vmem, size = 0x48000, scoped, tag = 'input window, operand 4, single buffered']
    #allocation12 [shape = 'u8[32768]{0}', space=vmem, size = 0x8000, scoped, tag = 'output window, operand 0']
    %11 = vsyncpa [#allocation5], 0
    %s12 = scalar_lea.sflag [#allocation5], 1
    %13 = vsyncpa %s12, 0
    %14 = vsyncpa [#allocation8], 0
    %15 = vsyncpa [#allocation6], 0
    %s16 = scalar_lea.sflag [#allocation6], 1
    %17 = vsyncpa %s16, 0
    loop: start=0, step=1, limit=12
    $region2: #{tpu_custom_call.1} parent=1 // loop_pre_header
      _
    $region3: #{tpu_custom_call.1} parent=1 // loop_header
      %s19 = sphi 0, %s23
      %p20 = scmp.ge.s32.totalorder %s19, 12
      %s26 = sphi 0, %s38
      %s27 = sphi 0, %s34
      %s28 = sphi 0, %s26
      %s29 = sphi 0, %s27
      %s30 = sphi 0, %s28
      %s31 = sphi 0, %s29
      %s43 = sphi 0, %s45
      %s46 = sphi 0, %s43
      %s47 = sphi 0, %s46
      %s63 = sphi 0, %s47
      %s67 = sphi 0, %s67
      %s69 = sphi 0, %s67
      %s70 = sphi 0, %s69
      %s84 = sphi 0, %s70
      %s90 = sphi 0, %s92
      %s93 = sphi 0, %s90
      %s94 = sphi 0, %s93
      %s110 = sphi 0, %s94
      %s116 = sphi 0, %s118
      %s119 = sphi 0, %s116
      %s120 = sphi 0, %s119
      %s136 = sphi 0, %s120
      %s140 = sphi 0, %s140
      %s142 = sphi 0, %s140
      %s143 = sphi 0, %s142
      %s157 = sphi 0, %s143
      %s161 = sphi 0, %s161
      %s163 = sphi 0, %s161
      %s164 = sphi 0, %s163
      %s178 = sphi 0, %s164
      %s186 = sphi 0, %s188
      %s189 = sphi 0, %s186
      %s190 = sphi 0, %s189
      %s206 = sphi 0, %s190
    $region4: #{tpu_custom_call.1} parent=1 // loop_header_branch
      %22 = sbr.rel (%p20) target = $region8
    $region5: #{tpu_custom_call.1} parent=1 // loop_body
      %s24 = ssub.s32 %s19, 1
      %s25 = ssub.s32 %s19, 2
      %s32 = sadd.s32 1, %s27
      %p33 = scmp.ge.s32.totalorder %s32, 2
      %s34 = scalar_select %p33, 0, %s32
      %s35 = sadd.s32 1, %s26
      %s36 = scalar_select %p33, %s35, %s26
      %p37 = scmp.ge.s32.totalorder %s36, 5
      %s38 = scalar_select %p37, 0, %s36
      %s39 = ssub.s32 %s26, %s38
      %s40 = ssub.s32 %s27, %s34
      %s41 = sor.u32 %s39, %s40
      %p42 = scmp.eq.s32.totalorder %s41, 0
      %s44 = sadd.s32 %s43, 1
      %s45 = scalar_select %p42, %s43, %s44
      %p48 = pneg %p42
      %p49 = scmp.eq.s32.totalorder %s19, 9
      %p50 = por %p48, %p49
      %p51 = scmp.ne.s32.totalorder %s43, %s46
      %p52 = scmp.eq.s32.totalorder %s19, 0
      %p53 = por %p51, %p52
      %p54 = scmp.ne.s32.totalorder %s43, %s46
      %p55 = scmp.eq.s32.totalorder %s24, 9
      %p56 = por %p54, %p55
      %p57 = scmp.ne.s32.totalorder %s46, %s47
      %p58 = scmp.eq.s32.totalorder %s24, 0
      %p59 = por %p57, %p58
      %p60 = scmp.ne.s32.totalorder %s46, %s47
      %p61 = scmp.eq.s32.totalorder %s25, 9
      %p62 = por %p60, %p61
      %p64 = scmp.ne.s32.totalorder %s47, %s63
      %p65 = scmp.eq.s32.totalorder %s25, 0
      %p66 = por %p64, %p65
      %s68 = sadd.s32 %s67, 1
      %p71 = scmp.eq.s32.totalorder %s19, 9
      %p72 = scmp.ne.s32.totalorder %s67, %s69
      %p73 = scmp.eq.s32.totalorder %s19, 0
      %p74 = por %p72, %p73
      %p75 = scmp.ne.s32.totalorder %s67, %s69
      %p76 = scmp.eq.s32.totalorder %s24, 9
      %p77 = por %p75, %p76
      %p78 = scmp.ne.s32.totalorder %s69, %s70
      %p79 = scmp.eq.s32.totalorder %s24, 0
      %p80 = por %p78, %p79
      %p81 = scmp.ne.s32.totalorder %s69, %s70
      %p82 = scmp.eq.s32.totalorder %s25, 9
      %p83 = por %p81, %p82
      %p85 = scmp.ne.s32.totalorder %s70, %s84
      %p86 = scmp.eq.s32.totalorder %s25, 0
      %p87 = por %p85, %p86
      %s88 = ssub.s32 %s26, %s38
      %p89 = scmp.eq.s32.totalorder %s88, 0
      %s91 = sadd.s32 %s90, 1
      %s92 = scalar_select %p89, %s90, %s91
      %p95 = pneg %p89
      %p96 = scmp.eq.s32.totalorder %s19, 9
      %p97 = por %p95, %p96
      %p98 = scmp.ne.s32.totalorder %s90, %s93
      %p99 = scmp.eq.s32.totalorder %s19, 0
      %p100 = por %p98, %p99
      %p101 = scmp.ne.s32.totalorder %s90, %s93
      %p102 = scmp.eq.s32.totalorder %s24, 9
      %p103 = por %p101, %p102
      %p104 = scmp.ne.s32.totalorder %s93, %s94
      %p105 = scmp.eq.s32.totalorder %s24, 0
      %p106 = por %p104, %p105
      %p107 = scmp.ne.s32.totalorder %s93, %s94
      %p108 = scmp.eq.s32.totalorder %s25, 9
      %p109 = por %p107, %p108
      %p111 = scmp.ne.s32.totalorder %s94, %s110
      %p112 = scmp.eq.s32.totalorder %s25, 0
      %p113 = por %p111, %p112
      %s114 = ssub.s32 %s26, %s38
      %p115 = scmp.eq.s32.totalorder %s114, 0
      %s117 = sadd.s32 %s116, 1
      %s118 = scalar_select %p115, %s116, %s117
      %p121 = pneg %p115
      %p122 = scmp.eq.s32.totalorder %s19, 9
      %p123 = por %p121, %p122
      %p124 = scmp.ne.s32.totalorder %s116, %s119
      %p125 = scmp.eq.s32.totalorder %s19, 0
      %p126 = por %p124, %p125
      %p127 = scmp.ne.s32.totalorder %s116, %s119
      %p128 = scmp.eq.s32.totalorder %s24, 9
      %p129 = por %p127, %p128
      %p130 = scmp.ne.s32.totalorder %s119, %s120
      %p131 = scmp.eq.s32.totalorder %s24, 0
      %p132 = por %p130, %p131
      %p133 = scmp.ne.s32.totalorder %s119, %s120
      %p134 = scmp.eq.s32.totalorder %s25, 9
      %p135 = por %p133, %p134
      %p137 = scmp.ne.s32.totalorder %s120, %s136
      %p138 = scmp.eq.s32.totalorder %s25, 0
      %p139 = por %p137, %p138
      %s141 = sadd.s32 %s140, 1
      %p144 = scmp.eq.s32.totalorder %s19, 9
      %p145 = scmp.ne.s32.totalorder %s140, %s142
      %p146 = scmp.eq.s32.totalorder %s19, 0
      %p147 = por %p145, %p146
      %p148 = scmp.ne.s32.totalorder %s140, %s142
      %p149 = scmp.eq.s32.totalorder %s24, 9
      %p150 = por %p148, %p149
      %p151 = scmp.ne.s32.totalorder %s142, %s143
      %p152 = scmp.eq.s32.totalorder %s24, 0
      %p153 = por %p151, %p152
      %p154 = scmp.ne.s32.totalorder %s142, %s143
      %p155 = scmp.eq.s32.totalorder %s25, 9
      %p156 = por %p154, %p155
      %p158 = scmp.ne.s32.totalorder %s143, %s157
      %p159 = scmp.eq.s32.totalorder %s25, 0
      %p160 = por %p158, %p159
      %s162 = sadd.s32 %s161, 1
      %p165 = scmp.eq.s32.totalorder %s19, 9
      %p166 = scmp.ne.s32.totalorder %s161, %s163
      %p167 = scmp.eq.s32.totalorder %s19, 0
      %p168 = por %p166, %p167
      %p169 = scmp.ne.s32.totalorder %s161, %s163
      %p170 = scmp.eq.s32.totalorder %s24, 9
      %p171 = por %p169, %p170
      %p172 = scmp.ne.s32.totalorder %s163, %s164
      %p173 = scmp.eq.s32.totalorder %s24, 0
      %p174 = por %p172, %p173
      %p175 = scmp.ne.s32.totalorder %s163, %s164
      %p176 = scmp.eq.s32.totalorder %s25, 9
      %p177 = por %p175, %p176
      %p179 = scmp.ne.s32.totalorder %s164, %s178
      %p180 = scmp.eq.s32.totalorder %s25, 0
      %p181 = por %p179, %p180
      %s182 = ssub.s32 %s26, %s38
      %s183 = ssub.s32 %s27, %s34
      %s184 = sor.u32 %s182, %s183
      %p185 = scmp.eq.s32.totalorder %s184, 0
      %s187 = sadd.s32 %s186, 1
      %s188 = scalar_select %p185, %s186, %s187
      %p191 = pneg %p185
      %p192 = scmp.eq.s32.totalorder %s19, 9
      %p193 = por %p191, %p192
      %p194 = scmp.ne.s32.totalorder %s186, %s189
      %p195 = scmp.eq.s32.totalorder %s19, 0
      %p196 = por %p194, %p195
      %p197 = scmp.ne.s32.totalorder %s186, %s189
      %p198 = scmp.eq.s32.totalorder %s24, 9
      %p199 = por %p197, %p198
      %p200 = scmp.ne.s32.totalorder %s189, %s190
      %p201 = scmp.eq.s32.totalorder %s24, 0
      %p202 = por %p200, %p201
      %p203 = scmp.ne.s32.totalorder %s189, %s190
      %p204 = scmp.eq.s32.totalorder %s25, 9
      %p205 = por %p203, %p204
      %p207 = scmp.ne.s32.totalorder %s190, %s206
      %p208 = scmp.eq.s32.totalorder %s25, 0
      %p209 = por %p207, %p208
      %p210 = scmp.le.s32.totalorder 1, %s19
      %p211 = scmp.lt.s32.totalorder %s19, 11
      %p212 = pnand %p210, %p211
      %p213 = pneg %p212
      // Predicated region
      $region9: #{tpu_custom_call.1} parent=5 // pred_check
        _
      $region10: #{tpu_custom_call.1} parent=5 // pred_check_branch
        %215 = sbr.rel (%p212) target = $region12
      $region11: #{tpu_custom_call.1} parent=5 // pred_region
        %s216 = ssub.s32 %s19, 1
        // Predicated region
        $region13: #{tpu_custom_call.1} parent=11 // pred_check
          %p217 = pneg %p80
        $region14: #{tpu_custom_call.1} parent=11 // pred_check_branch
          %219 = sbr.rel (%p217) target = $region16
        $region15: #{tpu_custom_call.1} parent=11 // pred_region
          %s221 = ssub.s32 18432, 18432
          %222 = vsyncadd [#allocation8], %s221
          %s223 = sshll.u32 [#allocation7], 4
          %s224 = int_to_ptr.vmem [resolvable:$true] %s223
          %229 = dma.hbm_to_vmem [thread:$0]  %s1, 18432, %s224, [#allocation8], 64, 64, 4
        $region16: #{tpu_custom_call.1} parent=11 // pred_fallthru
          _
        // Predicated region
        $region17: #{tpu_custom_call.1} parent=11 // pred_check
          %p230 = pneg %p153
        $region18: #{tpu_custom_call.1} parent=11 // pred_check_branch
          %232 = sbr.rel (%p230) target = $region20
        $region19: #{tpu_custom_call.1} parent=11 // pred_region
          %s234 = ssub.s32 9216, 9216
          %235 = vsyncadd [#allocation8], %s234
          %s236 = sshll.u32 [#allocation11], 4
          %s237 = int_to_ptr.vmem [resolvable:$true] %s236
          %242 = dma.hbm_to_vmem [thread:$0]  %s4, 9216, %s237, [#allocation8], 64, 64, 4
        $region20: #{tpu_custom_call.1} parent=11 // pred_fallthru
          _
        // Predicated region
        $region21: #{tpu_custom_call.1} parent=11 // pred_check
          %p243 = pneg %p174
        $region22: #{tpu_custom_call.1} parent=11 // pred_check_branch
          %245 = sbr.rel (%p243) target = $region24
        $region23: #{tpu_custom_call.1} parent=11 // pred_region
          _
        $region24: #{tpu_custom_call.1} parent=11 // pred_fallthru
          _
      $region12: #{tpu_custom_call.1} parent=5 // pred_fallthru
        _
      %p246 = scmp.lt.s32.totalorder %s19, 10
      // Predicated region
      $region25: #{tpu_custom_call.1} parent=5 // pred_check
        %p247 = pneg %p246
      $region26: #{tpu_custom_call.1} parent=5 // pred_check_branch
        %249 = sbr.rel (%p247) target = $region28
      $region27: #{tpu_custom_call.1} parent=5 // pred_region
        // Predicated region
        $region29: #{tpu_custom_call.1} parent=27 // pred_check
          %p250 = pneg %p53
        $region30: #{tpu_custom_call.1} parent=27 // pred_check_branch
          %252 = sbr.rel (%p250) target = $region32
        $region31: #{tpu_custom_call.1} parent=27 // pred_region
          %s253 = sand.u32 %s19, 1
          %s254 = scalar_lea.sflag [#allocation5], %s253
          %s255 = sand.u32 %s43, 1
          %s256 = smul.addr %s255, 32
          %s257 = scalar_lea.vmem [#allocation4], %s256
          %s259 = ssub.s32 512, 512
          %260 = vsyncadd %s254, %s259
          %s261 = smul.addr %s27, 8
          %s262 = smul.addr %s26, 16
          %s263 = sadd.s32 %s261, %s262
          %s264 = smul.addr %s263, 64
          %s265 = scalar_lea.hbm %s0, %s264
          %s266 = sshll.u32 %s257, 4
          %s267 = int_to_ptr.vmem [resolvable:$true] %s266
          %272 = dma.hbm_to_vmem [thread:$0]  %s265, 512, %s267, %s254, 64, 64, 4
        $region32: #{tpu_custom_call.1} parent=27 // pred_fallthru
          _
        // Predicated region
        $region33: #{tpu_custom_call.1} parent=27 // pred_check
          %p273 = pneg %p100
        $region34: #{tpu_custom_call.1} parent=27 // pred_check_branch
          %275 = sbr.rel (%p273) target = $region36
        $region35: #{tpu_custom_call.1} parent=27 // pred_region
          %s276 = sand.u32 %s19, 1
          %s277 = scalar_lea.sflag [#allocation5], %s276
          %s278 = sand.u32 %s90, 1
          %s279 = smul.addr %s278, 2
          %s280 = scalar_lea.vmem [#allocation9], %s279
          %s282 = ssub.s32 32, 32
          %283 = vsyncadd %s277, %s282
          %s284 = smul.addr %s26, 32
          %s285 = scalar_lea.hbm %s2, %s284
          %s287 = sshll.u32 %s280, 4
          %s288 = int_to_ptr.vmem [resolvable:$true] %s287
          %290 = dma.hbm_to_vmem [thread:$0]  %s285, 32, %s288, %s277
        $region36: #{tpu_custom_call.1} parent=27 // pred_fallthru
          _
        // Predicated region
        $region37: #{tpu_custom_call.1} parent=27 // pred_check
          %p291 = pneg %p126
        $region38: #{tpu_custom_call.1} parent=27 // pred_check_branch
          %293 = sbr.rel (%p291) target = $region40
        $region39: #{tpu_custom_call.1} parent=27 // pred_region
          %s294 = sand.u32 %s19, 1
          %s295 = scalar_lea.sflag [#allocation5], %s294
          %s296 = sand.u32 %s116, 1
          %s297 = smul.addr %s296, 2
          %s298 = scalar_lea.vmem [#allocation10], %s297
          %s300 = ssub.s32 32, 32
          %301 = vsyncadd %s295, %s300
          %s302 = smul.addr %s26, 32
          %s303 = scalar_lea.hbm %s3, %s302
          %s305 = sshll.u32 %s298, 4
          %s306 = int_to_ptr.vmem [resolvable:$true] %s305
          %308 = dma.hbm_to_vmem [thread:$0]  %s303, 32, %s306, %s295
        $region40: #{tpu_custom_call.1} parent=27 // pred_fallthru
          _
      $region28: #{tpu_custom_call.1} parent=5 // pred_fallthru
        _
      %p309 = scmp.le.s32.totalorder 1, %s19
      %p310 = scmp.lt.s32.totalorder %s19, 11
      %p311 = pnand %p309, %p310
      %p312 = pneg %p311
      // Predicated region
      $region41: #{tpu_custom_call.1} parent=5 // pred_check
        _
      $region42: #{tpu_custom_call.1} parent=5 // pred_check_branch
        %314 = sbr.rel (%p311) target = $region44
      $region43: #{tpu_custom_call.1} parent=5 // pred_region
        %s315 = ssub.s32 %s19, 1
        %s316 = sand.u32 %s24, 1
        %s317 = scalar_lea.sflag [#allocation5], %s316
        %s318 = sand.u32 %s46, 1
        %s319 = smul.addr %s318, 32
        %s320 = scalar_lea.vmem [#allocation4], %s319
        // Predicated region
        $region45: #{tpu_custom_call.1} parent=43 // pred_check
          %p321 = pneg %p59
        $region46: #{tpu_custom_call.1} parent=43 // pred_check_branch
          %323 = sbr.rel (%p321) target = $region48
        $region47: #{tpu_custom_call.1} parent=43 // pred_region
          %324 = dma.done %s317, 512
        $region48: #{tpu_custom_call.1} parent=43 // pred_fallthru
          _
        // Predicated region
        $region49: #{tpu_custom_call.1} parent=43 // pred_check
          %p325 = pneg %p80
        $region50: #{tpu_custom_call.1} parent=43 // pred_check_branch
          %327 = sbr.rel (%p325) target = $region52
        $region51: #{tpu_custom_call.1} parent=43 // pred_region
          %328 = dma.done [#allocation8], 18432
        $region52: #{tpu_custom_call.1} parent=43 // pred_fallthru
          _
        %s329 = sand.u32 %s24, 1
        %s330 = scalar_lea.sflag [#allocation5], %s329
        %s331 = sand.u32 %s93, 1
        %s332 = smul.addr %s331, 2
        %s333 = scalar_lea.vmem [#allocation9], %s332
        // Predicated region
        $region53: #{tpu_custom_call.1} parent=43 // pred_check
          %p334 = pneg %p106
        $region54: #{tpu_custom_call.1} parent=43 // pred_check_branch
          %336 = sbr.rel (%p334) target = $region56
        $region55: #{tpu_custom_call.1} parent=43 // pred_region
          %337 = dma.done %s330, 32
        $region56: #{tpu_custom_call.1} parent=43 // pred_fallthru
          _
        %s338 = sand.u32 %s24, 1
        %s339 = scalar_lea.sflag [#allocation5], %s338
        %s340 = sand.u32 %s119, 1
        %s341 = smul.addr %s340, 2
        %s342 = scalar_lea.vmem [#allocation10], %s341
        // Predicated region
        $region57: #{tpu_custom_call.1} parent=43 // pred_check
          %p343 = pneg %p132
        $region58: #{tpu_custom_call.1} parent=43 // pred_check_branch
          %345 = sbr.rel (%p343) target = $region60
        $region59: #{tpu_custom_call.1} parent=43 // pred_region
          %346 = dma.done %s339, 32
        $region60: #{tpu_custom_call.1} parent=43 // pred_fallthru
          _
        // Predicated region
        $region61: #{tpu_custom_call.1} parent=43 // pred_check
          %p347 = pneg %p153
        $region62: #{tpu_custom_call.1} parent=43 // pred_check_branch
          %349 = sbr.rel (%p347) target = $region64
        $region63: #{tpu_custom_call.1} parent=43 // pred_region
          %350 = dma.done [#allocation8], 9216
        $region64: #{tpu_custom_call.1} parent=43 // pred_fallthru
          _
        %s351 = sand.u32 %s24, 1
        %s352 = scalar_lea.sflag [#allocation5], %s351
        %s353 = sand.u32 %s46, 1
        %s354 = smul.addr %s353, 32
        %s355 = scalar_lea.vmem [#allocation4], %s354
        %p356 = pneg %p59
        %p357 = pneg %p56
        %p358 = pneg %p80
        %p359 = pneg %p77
        %s360 = sand.u32 %s24, 1
        %s361 = scalar_lea.sflag [#allocation5], %s360
        %s362 = sand.u32 %s93, 1
        %s363 = smul.addr %s362, 2
        %s364 = scalar_lea.vmem [#allocation9], %s363
        %p365 = pneg %p106
        %p366 = pneg %p103
        %s367 = sand.u32 %s24, 1
        %s368 = scalar_lea.sflag [#allocation5], %s367
        %s369 = sand.u32 %s119, 1
        %s370 = smul.addr %s369, 2
        %s371 = scalar_lea.vmem [#allocation10], %s370
        %p372 = pneg %p132
        %p373 = pneg %p129
        %p374 = pneg %p153
        %p375 = pneg %p150
        %p376 = pneg %p174
        %p377 = pneg %p171
        %p378 = pneg %p202
        %p379 = pneg %p199
        %s380 = sand.u32 %s189, 1
        %s381 = scalar_lea.sflag [#allocation6], %s380
        %s382 = sand.u32 %s189, 1
        %s383 = smul.addr %s382, 32
        %s384 = scalar_lea.vmem [#allocation12], %s383
        %386 = vst [vmem:[#allocation2] sm:$0xf] 0
        %387 = vst [vmem:[#allocation2 + $0x4] sm:$0x1] 0
        %388 = vst [vmem:[#allocation2 + $0x8] sm:$0xf] 0
        %389 = vst [vmem:[#allocation2 + $0xc] sm:$0x1] 0
        %390 = vst [vmem:[#allocation2 + $0x10] sm:$0xf] 0
        %391 = vst [vmem:[#allocation2 + $0x14] sm:$0x1] 0
        %392 = vst [vmem:[#allocation2 + $0x18] sm:$0xf] 0
        %393 = vst [vmem:[#allocation2 + $0x1c] sm:$0x1] 0
        %394 = vst [vmem:[#allocation2 + $0x20] sm:$0xf] 0
        %395 = vst [vmem:[#allocation2 + $0x24] sm:$0x1] 0
        %396 = vst [vmem:[#allocation2 + $0x28] sm:$0xf] 0
        %397 = vst [vmem:[#allocation2 + $0x2c] sm:$0x1] 0
        %398 = vst [vmem:[#allocation2 + $0x30] sm:$0xf] 0
        %399 = vst [vmem:[#allocation2 + $0x34] sm:$0x1] 0
        %400 = vst [vmem:[#allocation2 + $0x38] sm:$0xf] 0
        %401 = vst [vmem:[#allocation2 + $0x3c] sm:$0x1] 0
        %402 = vst [vmem:[#allocation2 + $0x40] sm:$0xf] 0
        %403 = vst [vmem:[#allocation2 + $0x44] sm:$0x1] 0
        %404 = vst [vmem:[#allocation2 + $0x48] sm:$0xf] 0
        %405 = vst [vmem:[#allocation2 + $0x4c] sm:$0x1] 0
        %v406 = vld [vmem:[%s320] sm:$0xf]
        %v407 = vld [vmem:[%s320 + $0x4] sm:$0xf]
        %v408 = vld [vmem:[%s320 + $0x8] sm:$0xf]
        %v409 = vld [vmem:[%s320 + $0xc] sm:$0xf]
        %v410 = vld [vmem:[%s320 + $0x10] sm:$0xf]
        %v411 = vld [vmem:[%s320 + $0x14] sm:$0xf]
        %v412 = vld [vmem:[%s320 + $0x18] sm:$0xf]
        %v413 = vld [vmem:[%s320 + $0x1c] sm:$0xf]
        %v415 = vshrl.u32 %v406, 16
        %v417 = vrot.slane %v415, 7
        %v418 = vshll.u32 %v406, 16
        %v420 = vor.u32 %v417, %v418
        %v421 = vrot.slane %v417, 4
        %v423 = vshrl.u32 %v407, 16
        %v425 = vrot.slane %v423, 7
        %v426 = vshll.u32 %v407, 16
        %v428 = vor.u32 %v425, %v426
        %v429 = vrot.slane %v425, 4
        %v431 = vshrl.u32 %v408, 16
        %v433 = vrot.slane %v431, 7
        %v434 = vshll.u32 %v408, 16
        %v436 = vor.u32 %v433, %v434
        %v437 = vrot.slane %v433, 4
        %v439 = vshrl.u32 %v409, 16
        %v441 = vrot.slane %v439, 7
        %v442 = vshll.u32 %v409, 16
        %v444 = vor.u32 %v441, %v442
        %v445 = vrot.slane %v441, 4
        %v447 = vshrl.u32 %v410, 16
        %v449 = vrot.slane %v447, 7
        %v450 = vshll.u32 %v410, 16
        %v452 = vor.u32 %v449, %v450
        %v453 = vrot.slane %v449, 4
        %v455 = vshrl.u32 %v411, 16
        %v457 = vrot.slane %v455, 7
        %v458 = vshll.u32 %v411, 16
        %v460 = vor.u32 %v457, %v458
        %v461 = vrot.slane %v457, 4
        %v463 = vshrl.u32 %v412, 16
        %v465 = vrot.slane %v463, 7
        %v466 = vshll.u32 %v412, 16
        %v468 = vor.u32 %v465, %v466
        %v469 = vrot.slane %v465, 4
        %v471 = vshrl.u32 %v413, 16
        %v473 = vrot.slane %v471, 7
        %v474 = vshll.u32 %v413, 16
        %v476 = vor.u32 %v473, %v474
        %v477 = vrot.slane %v473, 4
        %s494 = scalar_lea.vmem [#allocation2], 8
        %vm495 = vcmask 257024
        %vm496 = vsmask.f32 7938
        %vm497 = vmand %vm495, %vm496
        %v498 = vld [vmem:[%s494] sm:$0xf]
        %v499 = vsel %vm497, %v420, %v498
        %500 = vst [vmem:[%s494] sm:$0xf] %v499
        %vm501 = vcmask 253952
        %vm502 = vsmask.f32 256
        %vm503 = vmand %vm501, %vm502
        %v504 = vld [vmem:[%s494 + $0x4] sm:$0x1]
        %v505 = vsel %vm503, %v421, %v504
        %506 = vst [vmem:[%s494 + $0x4] sm:$0x1] %v505
        %v507 = vld [vmem:[%s494 + $0x8] sm:$0xf]
        %v508 = vsel %vm497, %v428, %v507
        %509 = vst [vmem:[%s494 + $0x8] sm:$0xf] %v508
        %v510 = vld [vmem:[%s494 + $0xc] sm:$0x1]
        %v511 = vsel %vm503, %v429, %v510
        %512 = vst [vmem:[%s494 + $0xc] sm:$0x1] %v511
        %v513 = vld [vmem:[%s494 + $0x10] sm:$0xf]
        %v514 = vsel %vm497, %v436, %v513
        %515 = vst [vmem:[%s494 + $0x10] sm:$0xf] %v514
        %v516 = vld [vmem:[%s494 + $0x14] sm:$0x1]
        %v517 = vsel %vm503, %v437, %v516
        %518 = vst [vmem:[%s494 + $0x14] sm:$0x1] %v517
        %v519 = vld [vmem:[%s494 + $0x18] sm:$0xf]
        %v520 = vsel %vm497, %v444, %v519
        %521 = vst [vmem:[%s494 + $0x18] sm:$0xf] %v520
        %v522 = vld [vmem:[%s494 + $0x1c] sm:$0x1]
        %v523 = vsel %vm503, %v445, %v522
        %524 = vst [vmem:[%s494 + $0x1c] sm:$0x1] %v523
        %v525 = vld [vmem:[%s494 + $0x20] sm:$0xf]
        %v526 = vsel %vm497, %v452, %v525
        %527 = vst [vmem:[%s494 + $0x20] sm:$0xf] %v526
        %v528 = vld [vmem:[%s494 + $0x24] sm:$0x1]
        %v529 = vsel %vm503, %v453, %v528
        %530 = vst [vmem:[%s494 + $0x24] sm:$0x1] %v529
        %v531 = vld [vmem:[%s494 + $0x28] sm:$0xf]
        %v532 = vsel %vm497, %v460, %v531
        %533 = vst [vmem:[%s494 + $0x28] sm:$0xf] %v532
        %v534 = vld [vmem:[%s494 + $0x2c] sm:$0x1]
        %v535 = vsel %vm503, %v461, %v534
        %536 = vst [vmem:[%s494 + $0x2c] sm:$0x1] %v535
        %v537 = vld [vmem:[%s494 + $0x30] sm:$0xf]
        %v538 = vsel %vm497, %v468, %v537
        %539 = vst [vmem:[%s494 + $0x30] sm:$0xf] %v538
        %v540 = vld [vmem:[%s494 + $0x34] sm:$0x1]
        %v541 = vsel %vm503, %v469, %v540
        %542 = vst [vmem:[%s494 + $0x34] sm:$0x1] %v541
        %v543 = vld [vmem:[%s494 + $0x38] sm:$0xf]
        %v544 = vsel %vm497, %v476, %v543
        %545 = vst [vmem:[%s494 + $0x38] sm:$0xf] %v544
        %v546 = vld [vmem:[%s494 + $0x3c] sm:$0x1]
        %v547 = vsel %vm503, %v477, %v546
        %548 = vst [vmem:[%s494 + $0x3c] sm:$0x1] %v547
        %v549 = vld [vmem:[#allocation2] sm:$0xf]
        %v550 = vld [vmem:[#allocation2 + $0x8] sm:$0xf]
        %v551 = vld [vmem:[#allocation2 + $0x10] sm:$0xf]
        %v552 = vld [vmem:[#allocation2 + $0x18] sm:$0xf]
        %v553 = vld [vmem:[#allocation2 + $0x20] sm:$0xf]
        %v554 = vld [vmem:[#allocation2 + $0x28] sm:$0xf]
        %v555 = vld [vmem:[#allocation2 + $0x30] sm:$0xf]
        %v556 = vld [vmem:[#allocation2 + $0x38] sm:$0xf]
        %557 = vst [vmem:[#allocation3] sm:$0xf] %v549
        %558 = vst [vmem:[#allocation3 + $0x24] sm:$0xf] %v550
        %559 = vst [vmem:[#allocation3 + $0x48] sm:$0xf] %v551
        %560 = vst [vmem:[#allocation3 + $0x6c] sm:$0xf] %v552
        %561 = vst [vmem:[#allocation3 + $0x90] sm:$0xf] %v553
        %562 = vst [vmem:[#allocation3 + $0xb4] sm:$0xf] %v554
        %563 = vst [vmem:[#allocation3 + $0xd8] sm:$0xf] %v555
        %564 = vst [vmem:[#allocation3 + $0xfc] sm:$0xf] %v556
        %v565 = vld [vmem:[#allocation2] sm:$0xf]
        %v566 = vld [vmem:[#allocation2 + $0x4] sm:$0x1]
        %v567 = vld [vmem:[#allocation2 + $0x8] sm:$0xf]
        %v568 = vld [vmem:[#allocation2 + $0xc] sm:$0x1]
        %v569 = vld [vmem:[#allocation2 + $0x10] sm:$0xf]
        %v570 = vld [vmem:[#allocation2 + $0x14] sm:$0x1]
        %v571 = vld [vmem:[#allocation2 + $0x18] sm:$0xf]
        %v572 = vld [vmem:[#allocation2 + $0x1c] sm:$0x1]
        %v573 = vld [vmem:[#allocation2 + $0x20] sm:$0xf]
        %v574 = vld [vmem:[#allocation2 + $0x24] sm:$0x1]
        %v575 = vld [vmem:[#allocation2 + $0x28] sm:$0xf]
        %v576 = vld [vmem:[#allocation2 + $0x2c] sm:$0x1]
        %v577 = vld [vmem:[#allocation2 + $0x30] sm:$0xf]
        %v578 = vld [vmem:[#allocation2 + $0x34] sm:$0x1]
        %v579 = vld [vmem:[#allocation2 + $0x38] sm:$0xf]
        %v580 = vld [vmem:[#allocation2 + $0x3c] sm:$0x1]
        %vm581 = vsmask.f32 3328
        %vm582 = vsmask.f32 7440
        %vm583 = vmor %vm581, %vm582
        %v585 = vshrl.u32 %v565, 16
        %v587 = vrot.slane %v585, 4
        %v588 = vshll.u32 %v565, 16
        %v590 = vrot.slane %v588, 5
        %v591 = vor.u32 %v587, %v590
        %v592 = vrot.slane %v591, 4
        %v594 = vshll.u32 %v566, 16
        %v596 = vrot.slane %v594, 5
        %v597 = vsel %vm583, %v592, %v596
        %v599 = vshrl.u32 %v567, 16
        %v601 = vrot.slane %v599, 4
        %v602 = vshll.u32 %v567, 16
        %v604 = vrot.slane %v602, 5
        %v605 = vor.u32 %v601, %v604
        %v606 = vrot.slane %v605, 4
        %v608 = vshll.u32 %v568, 16
        %v610 = vrot.slane %v608, 5
        %v611 = vsel %vm583, %v606, %v610
        %v613 = vshrl.u32 %v569, 16
        %v615 = vrot.slane %v613, 4
        %v616 = vshll.u32 %v569, 16
        %v618 = vrot.slane %v616, 5
        %v619 = vor.u32 %v615, %v618
        %v620 = vrot.slane %v619, 4
        %v622 = vshll.u32 %v570, 16
        %v624 = vrot.slane %v622, 5
        %v625 = vsel %vm583, %v620, %v624
        %v627 = vshrl.u32 %v571, 16
        %v629 = vrot.slane %v627, 4
        %v630 = vshll.u32 %v571, 16
        %v632 = vrot.slane %v630, 5
        %v633 = vor.u32 %v629, %v632
        %v634 = vrot.slane %v633, 4
        %v636 = vshll.u32 %v572, 16
        %v638 = vrot.slane %v636, 5
        %v639 = vsel %vm583, %v634, %v638
        %v641 = vshrl.u32 %v573, 16
        %v643 = vrot.slane %v641, 4
        %v644 = vshll.u32 %v573, 16
        %v646 = vrot.slane %v644, 5
        %v647 = vor.u32 %v643, %v646
        %v648 = vrot.slane %v647, 4
        %v650 = vshll.u32 %v574, 16
        %v652 = vrot.slane %v650, 5
        %v653 = vsel %vm583, %v648, %v652
        %v655 = vshrl.u32 %v575, 16
        %v657 = vrot.slane %v655, 4
        %v658 = vshll.u32 %v575, 16
        %v660 = vrot.slane %v658, 5
        %v661 = vor.u32 %v657, %v660
        %v662 = vrot.slane %v661, 4
        %v664 = vshll.u32 %v576, 16
        %v666 = vrot.slane %v664, 5
        %v667 = vsel %vm583, %v662, %v666
        %v669 = vshrl.u32 %v577, 16
        %v671 = vrot.slane %v669, 4
        %v672 = vshll.u32 %v577, 16
        %v674 = vrot.slane %v672, 5
        %v675 = vor.u32 %v671, %v674
        %v676 = vrot.slane %v675, 4
        %v678 = vshll.u32 %v578, 16
        %v680 = vrot.slane %v678, 5
        %v681 = vsel %vm583, %v676, %v680
        %v683 = vshrl.u32 %v579, 16
        %v685 = vrot.slane %v683, 4
        %v686 = vshll.u32 %v579, 16
        %v688 = vrot.slane %v686, 5
        %v689 = vor.u32 %v685, %v688
        %v690 = vrot.slane %v689, 4
        %v692 = vshll.u32 %v580, 16
        %v694 = vrot.slane %v692, 5
        %v695 = vsel %vm583, %v690, %v694
        %704 = vst [vmem:[#allocation3 + $0x4] sm:$0xf] %v597
        %705 = vst [vmem:[#allocation3 + $0x28] sm:$0xf] %v611
        %706 = vst [vmem:[#allocation3 + $0x4c] sm:$0xf] %v625
        %707 = vst [vmem:[#allocation3 + $0x70] sm:$0xf] %v639
        %708 = vst [vmem:[#allocation3 + $0x94] sm:$0xf] %v653
        %709 = vst [vmem:[#allocation3 + $0xb8] sm:$0xf] %v667
        %710 = vst [vmem:[#allocation3 + $0xdc] sm:$0xf] %v681
        %711 = vst [vmem:[#allocation3 + $0x100] sm:$0xf] %v695
        %v712 = vld [vmem:[#allocation2] sm:$0xe]
        %v713 = vld [vmem:[#allocation2 + $0x4] sm:$0x1]
        %v714 = vld [vmem:[#allocation2 + $0x8] sm:$0xe]
        %v715 = vld [vmem:[#allocation2 + $0xc] sm:$0x1]
        %v716 = vld [vmem:[#allocation2 + $0x10] sm:$0xe]
        %v717 = vld [vmem:[#allocation2 + $0x14] sm:$0x1]
        %v718 = vld [vmem:[#allocation2 + $0x18] sm:$0xe]
        %v719 = vld [vmem:[#allocation2 + $0x1c] sm:$0x1]
        %v720 = vld [vmem:[#allocation2 + $0x20] sm:$0xe]
        %v721 = vld [vmem:[#allocation2 + $0x24] sm:$0x1]
        %v722 = vld [vmem:[#allocation2 + $0x28] sm:$0xe]
        %v723 = vld [vmem:[#allocation2 + $0x2c] sm:$0x1]
        %v724 = vld [vmem:[#allocation2 + $0x30] sm:$0xe]
        %v725 = vld [vmem:[#allocation2 + $0x34] sm:$0x1]
        %v726 = vld [vmem:[#allocation2 + $0x38] sm:$0xe]
        %v727 = vld [vmem:[#allocation2 + $0x3c] sm:$0x1]
        %vm744 = vcmask 1042432
        %vm745 = vcmask 1046532
        %vm746 = vmor %vm744, %vm745
        %v747 = vrot.slane %v712, 5
        %v748 = vrot.slane %v747, 4
        %v749 = vrot.slane %v713, 5
        %v750 = vsel %vm746, %v748, %v749
        %v751 = vrot.slane %v714, 5
        %v752 = vrot.slane %v751, 4
        %v753 = vrot.slane %v715, 5
        %v754 = vsel %vm746, %v752, %v753
        %v755 = vrot.slane %v716, 5
        %v756 = vrot.slane %v755, 4
        %v757 = vrot.slane %v717, 5
        %v758 = vsel %vm746, %v756, %v757
        %v759 = vrot.slane %v718, 5
        %v760 = vrot.slane %v759, 4
        %v761 = vrot.slane %v719, 5
        %v762 = vsel %vm746, %v760, %v761
        %v763 = vrot.slane %v720, 5
        %v764 = vrot.slane %v763, 4
        %v765 = vrot.slane %v721, 5
        %v766 = vsel %vm746, %v764, %v765
        %v767 = vrot.slane %v722, 5
        %v768 = vrot.slane %v767, 4
        %v769 = vrot.slane %v723, 5
        %v770 = vsel %vm746, %v768, %v769
        %v771 = vrot.slane %v724, 5
        %v772 = vrot.slane %v771, 4
        %v773 = vrot.slane %v725, 5
        %v774 = vsel %vm746, %v772, %v773
        %v775 = vrot.slane %v726, 5
        %v776 = vrot.slane %v775, 4
        %v777 = vrot.slane %v727, 5
        %v778 = vsel %vm746, %v776, %v777
        %787 = vst [vmem:[#allocation3 + $0x8] sm:$0xf] %v750
        %788 = vst [vmem:[#allocation3 + $0x2c] sm:$0xf] %v754
        %789 = vst [vmem:[#allocation3 + $0x50] sm:$0xf] %v758
        %790 = vst [vmem:[#allocation3 + $0x74] sm:$0xf] %v762
        %791 = vst [vmem:[#allocation3 + $0x98] sm:$0xf] %v766
        %792 = vst [vmem:[#allocation3 + $0xbc] sm:$0xf] %v770
        %793 = vst [vmem:[#allocation3 + $0xe0] sm:$0xf] %v774
        %794 = vst [vmem:[#allocation3 + $0x104] sm:$0xf] %v778
        %v795 = vld [vmem:[%s494] sm:$0xf]
        %v796 = vld [vmem:[%s494 + $0x8] sm:$0xf]
        %v797 = vld [vmem:[%s494 + $0x10] sm:$0xf]
        %v798 = vld [vmem:[%s494 + $0x18] sm:$0xf]
        %v799 = vld [vmem:[%s494 + $0x20] sm:$0xf]
        %v800 = vld [vmem:[%s494 + $0x28] sm:$0xf]
        %v801 = vld [vmem:[%s494 + $0x30] sm:$0xf]
        %v802 = vld [vmem:[%s494 + $0x38] sm:$0xf]
        %803 = vst [vmem:[#allocation3 + $0xc] sm:$0xf] %v795
        %804 = vst [vmem:[#allocation3 + $0x30] sm:$0xf] %v796
        %805 = vst [vmem:[#allocation3 + $0x54] sm:$0xf] %v797
        %806 = vst [vmem:[#allocation3 + $0x78] sm:$0xf] %v798
        %807 = vst [vmem:[#allocation3 + $0x9c] sm:$0xf] %v799
        %808 = vst [vmem:[#allocation3 + $0xc0] sm:$0xf] %v800
        %809 = vst [vmem:[#allocation3 + $0xe4] sm:$0xf] %v801
        %810 = vst [vmem:[#allocation3 + $0x108] sm:$0xf] %v802
        %v811 = vld [vmem:[%s494] sm:$0xf]
        %v812 = vld [vmem:[%s494 + $0x4] sm:$0x1]
        %v813 = vld [vmem:[%s494 + $0x8] sm:$0xf]
        %v814 = vld [vmem:[%s494 + $0xc] sm:$0x1]
        %v815 = vld [vmem:[%s494 + $0x10] sm:$0xf]
        %v816 = vld [vmem:[%s494 + $0x14] sm:$0x1]
        %v817 = vld [vmem:[%s494 + $0x18] sm:$0xf]
        %v818 = vld [vmem:[%s494 + $0x1c] sm:$0x1]
        %v819 = vld [vmem:[%s494 + $0x20] sm:$0xf]
        %v820 = vld [vmem:[%s494 + $0x24] sm:$0x1]
        %v821 = vld [vmem:[%s494 + $0x28] sm:$0xf]
        %v822 = vld [vmem:[%s494 + $0x2c] sm:$0x1]
        %v823 = vld [vmem:[%s494 + $0x30] sm:$0xf]
        %v824 = vld [vmem:[%s494 + $0x34] sm:$0x1]
        %v825 = vld [vmem:[%s494 + $0x38] sm:$0xf]
        %v826 = vld [vmem:[%s494 + $0x3c] sm:$0x1]
        %v828 = vshrl.u32 %v811, 16
        %v830 = vrot.slane %v828, 4
        %v831 = vshll.u32 %v811, 16
        %v833 = vrot.slane %v831, 5
        %v834 = vor.u32 %v830, %v833
        %v835 = vrot.slane %v834, 4
        %v837 = vshll.u32 %v812, 16
        %v839 = vrot.slane %v837, 5
        %v840 = vsel %vm583, %v835, %v839
        %v842 = vshrl.u32 %v813, 16
        %v844 = vrot.slane %v842, 4
        %v845 = vshll.u32 %v813, 16
        %v847 = vrot.slane %v845, 5
        %v848 = vor.u32 %v844, %v847
        %v849 = vrot.slane %v848, 4
        %v851 = vshll.u32 %v814, 16
        %v853 = vrot.slane %v851, 5
        %v854 = vsel %vm583, %v849, %v853
        %v856 = vshrl.u32 %v815, 16
        %v858 = vrot.slane %v856, 4
        %v859 = vshll.u32 %v815, 16
        %v861 = vrot.slane %v859, 5
        %v862 = vor.u32 %v858, %v861
        %v863 = vrot.slane %v862, 4
        %v865 = vshll.u32 %v816, 16
        %v867 = vrot.slane %v865, 5
        %v868 = vsel %vm583, %v863, %v867
        %v870 = vshrl.u32 %v817, 16
        %v872 = vrot.slane %v870, 4
        %v873 = vshll.u32 %v817, 16
        %v875 = vrot.slane %v873, 5
        %v876 = vor.u32 %v872, %v875
        %v877 = vrot.slane %v876, 4
        %v879 = vshll.u32 %v818, 16
        %v881 = vrot.slane %v879, 5
        %v882 = vsel %vm583, %v877, %v881
        %v884 = vshrl.u32 %v819, 16
        %v886 = vrot.slane %v884, 4
        %v887 = vshll.u32 %v819, 16
        %v889 = vrot.slane %v887, 5
        %v890 = vor.u32 %v886, %v889
        %v891 = vrot.slane %v890, 4
        %v893 = vshll.u32 %v820, 16
        %v895 = vrot.slane %v893, 5
        %v896 = vsel %vm583, %v891, %v895
        %v898 = vshrl.u32 %v821, 16
        %v900 = vrot.slane %v898, 4
        %v901 = vshll.u32 %v821, 16
        %v903 = vrot.slane %v901, 5
        %v904 = vor.u32 %v900, %v903
        %v905 = vrot.slane %v904, 4
        %v907 = vshll.u32 %v822, 16
        %v909 = vrot.slane %v907, 5
        %v910 = vsel %vm583, %v905, %v909
        %v912 = vshrl.u32 %v823, 16
        %v914 = vrot.slane %v912, 4
        %v915 = vshll.u32 %v823, 16
        %v917 = vrot.slane %v915, 5
        %v918 = vor.u32 %v914, %v917
        %v919 = vrot.slane %v918, 4
        %v921 = vshll.u32 %v824, 16
        %v923 = vrot.slane %v921, 5
        %v924 = vsel %vm583, %v919, %v923
        %v926 = vshrl.u32 %v825, 16
        %v928 = vrot.slane %v926, 4
        %v929 = vshll.u32 %v825, 16
        %v931 = vrot.slane %v929, 5
        %v932 = vor.u32 %v928, %v931
        %v933 = vrot.slane %v932, 4
        %v935 = vshll.u32 %v826, 16
        %v937 = vrot.slane %v935, 5
        %v938 = vsel %vm583, %v933, %v937
        %947 = vst [vmem:[#allocation3 + $0x10] sm:$0xf] %v840
        %948 = vst [vmem:[#allocation3 + $0x34] sm:$0xf] %v854
        %949 = vst [vmem:[#allocation3 + $0x58] sm:$0xf] %v868
        %950 = vst [vmem:[#allocation3 + $0x7c] sm:$0xf] %v882
        %951 = vst [vmem:[#allocation3 + $0xa0] sm:$0xf] %v896
        %952 = vst [vmem:[#allocation3 + $0xc4] sm:$0xf] %v910
        %953 = vst [vmem:[#allocation3 + $0xe8] sm:$0xf] %v924
        %954 = vst [vmem:[#allocation3 + $0x10c] sm:$0xf] %v938
        %v955 = vld [vmem:[%s494] sm:$0xe]
        %v956 = vld [vmem:[%s494 + $0x4] sm:$0x1]
        %v957 = vld [vmem:[%s494 + $0x8] sm:$0xe]
        %v958 = vld [vmem:[%s494 + $0xc] sm:$0x1]
        %v959 = vld [vmem:[%s494 + $0x10] sm:$0xe]
        %v960 = vld [vmem:[%s494 + $0x14] sm:$0x1]
        %v961 = vld [vmem:[%s494 + $0x18] sm:$0xe]
        %v962 = vld [vmem:[%s494 + $0x1c] sm:$0x1]
        %v963 = vld [vmem:[%s494 + $0x20] sm:$0xe]
        %v964 = vld [vmem:[%s494 + $0x24] sm:$0x1]
        %v965 = vld [vmem:[%s494 + $0x28] sm:$0xe]
        %v966 = vld [vmem:[%s494 + $0x2c] sm:$0x1]
        %v967 = vld [vmem:[%s494 + $0x30] sm:$0xe]
        %v968 = vld [vmem:[%s494 + $0x34] sm:$0x1]
        %v969 = vld [vmem:[%s494 + $0x38] sm:$0xe]
        %v970 = vld [vmem:[%s494 + $0x3c] sm:$0x1]
        %v987 = vrot.slane %v955, 5
        %v988 = vrot.slane %v987, 4
        %v989 = vrot.slane %v956, 5
        %v990 = vsel %vm746, %v988, %v989
        %v991 = vrot.slane %v957, 5
        %v992 = vrot.slane %v991, 4
        %v993 = vrot.slane %v958, 5
        %v994 = vsel %vm746, %v992, %v993
        %v995 = vrot.slane %v959, 5
        %v996 = vrot.slane %v995, 4
        %v997 = vrot.slane %v960, 5
        %v998 = vsel %vm746, %v996, %v997
        %v999 = vrot.slane %v961, 5
        %v1000 = vrot.slane %v999, 4
        %v1001 = vrot.slane %v962, 5
        %v1002 = vsel %vm746, %v1000, %v1001
        %v1003 = vrot.slane %v963, 5
        %v1004 = vrot.slane %v1003, 4
        %v1005 = vrot.slane %v964, 5
        %v1006 = vsel %vm746, %v1004, %v1005
        %v1007 = vrot.slane %v965, 5
        %v1008 = vrot.slane %v1007, 4
        %v1009 = vrot.slane %v966, 5
        %v1010 = vsel %vm746, %v1008, %v1009
        %v1011 = vrot.slane %v967, 5
        %v1012 = vrot.slane %v1011, 4
        %v1013 = vrot.slane %v968, 5
        %v1014 = vsel %vm746, %v1012, %v1013
        %v1015 = vrot.slane %v969, 5
        %v1016 = vrot.slane %v1015, 4
        %v1017 = vrot.slane %v970, 5
        %v1018 = vsel %vm746, %v1016, %v1017
        %1027 = vst [vmem:[#allocation3 + $0x14] sm:$0xf] %v990
        %1028 = vst [vmem:[#allocation3 + $0x38] sm:$0xf] %v994
        %1029 = vst [vmem:[#allocation3 + $0x5c] sm:$0xf] %v998
        %1030 = vst [vmem:[#allocation3 + $0x80] sm:$0xf] %v1002
        %1031 = vst [vmem:[#allocation3 + $0xa4] sm:$0xf] %v1006
        %1032 = vst [vmem:[#allocation3 + $0xc8] sm:$0xf] %v1010
        %1033 = vst [vmem:[#allocation3 + $0xec] sm:$0xf] %v1014
        %1034 = vst [vmem:[#allocation3 + $0x110] sm:$0xf] %v1018
        %s1035 = scalar_lea.vmem [#allocation2], 16
        %v1036 = vld [vmem:[%s1035] sm:$0xf]
        %v1037 = vld [vmem:[%s1035 + $0x8] sm:$0xf]
        %v1038 = vld [vmem:[%s1035 + $0x10] sm:$0xf]
        %v1039 = vld [vmem:[%s1035 + $0x18] sm:$0xf]
        %v1040 = vld [vmem:[%s1035 + $0x20] sm:$0xf]
        %v1041 = vld [vmem:[%s1035 + $0x28] sm:$0xf]
        %v1042 = vld [vmem:[%s1035 + $0x30] sm:$0xf]
        %v1043 = vld [vmem:[%s1035 + $0x38] sm:$0xf]
        %1044 = vst [vmem:[#allocation3 + $0x18] sm:$0xf] %v1036
        %1045 = vst [vmem:[#allocation3 + $0x3c] sm:$0xf] %v1037
        %1046 = vst [vmem:[#allocation3 + $0x60] sm:$0xf] %v1038
        %1047 = vst [vmem:[#allocation3 + $0x84] sm:$0xf] %v1039
        %1048 = vst [vmem:[#allocation3 + $0xa8] sm:$0xf] %v1040
        %1049 = vst [vmem:[#allocation3 + $0xcc] sm:$0xf] %v1041
        %1050 = vst [vmem:[#allocation3 + $0xf0] sm:$0xf] %v1042
        %1051 = vst [vmem:[#allocation3 + $0x114] sm:$0xf] %v1043
        %v1052 = vld [vmem:[%s1035] sm:$0xf]
        %v1053 = vld [vmem:[%s1035 + $0x4] sm:$0x1]
        %v1054 = vld [vmem:[%s1035 + $0x8] sm:$0xf]
        %v1055 = vld [vmem:[%s1035 + $0xc] sm:$0x1]
        %v1056 = vld [vmem:[%s1035 + $0x10] sm:$0xf]
        %v1057 = vld [vmem:[%s1035 + $0x14] sm:$0x1]
        %v1058 = vld [vmem:[%s1035 + $0x18] sm:$0xf]
        %v1059 = vld [vmem:[%s1035 + $0x1c] sm:$0x1]
        %v1060 = vld [vmem:[%s1035 + $0x20] sm:$0xf]
        %v1061 = vld [vmem:[%s1035 + $0x24] sm:$0x1]
        %v1062 = vld [vmem:[%s1035 + $0x28] sm:$0xf]
        %v1063 = vld [vmem:[%s1035 + $0x2c] sm:$0x1]
        %v1064 = vld [vmem:[%s1035 + $0x30] sm:$0xf]
        %v1065 = vld [vmem:[%s1035 + $0x34] sm:$0x1]
        %v1066 = vld [vmem:[%s1035 + $0x38] sm:$0xf]
        %v1067 = vld [vmem:[%s1035 + $0x3c] sm:$0x1]
        %v1069 = vshrl.u32 %v1052, 16
        %v1071 = vrot.slane %v1069, 4
        %v1072 = vshll.u32 %v1052, 16
        %v1074 = vrot.slane %v1072, 5
        %v1075 = vor.u32 %v1071, %v1074
        %v1076 = vrot.slane %v1075, 4
        %v1078 = vshll.u32 %v1053, 16
        %v1080 = vrot.slane %v1078, 5
        %v1081 = vsel %vm583, %v1076, %v1080
        %v1083 = vshrl.u32 %v1054, 16
        %v1085 = vrot.slane %v1083, 4
        %v1086 = vshll.u32 %v1054, 16
        %v1088 = vrot.slane %v1086, 5
        %v1089 = vor.u32 %v1085, %v1088
        %v1090 = vrot.slane %v1089, 4
        %v1092 = vshll.u32 %v1055, 16
        %v1094 = vrot.slane %v1092, 5
        %v1095 = vsel %vm583, %v1090, %v1094
        %v1097 = vshrl.u32 %v1056, 16
        %v1099 = vrot.slane %v1097, 4
        %v1100 = vshll.u32 %v1056, 16
        %v1102 = vrot.slane %v1100, 5
        %v1103 = vor.u32 %v1099, %v1102
        %v1104 = vrot.slane %v1103, 4
        %v1106 = vshll.u32 %v1057, 16
        %v1108 = vrot.slane %v1106, 5
        %v1109 = vsel %vm583, %v1104, %v1108
        %v1111 = vshrl.u32 %v1058, 16
        %v1113 = vrot.slane %v1111, 4
        %v1114 = vshll.u32 %v1058, 16
        %v1116 = vrot.slane %v1114, 5
        %v1117 = vor.u32 %v1113, %v1116
        %v1118 = vrot.slane %v1117, 4
        %v1120 = vshll.u32 %v1059, 16
        %v1122 = vrot.slane %v1120, 5
        %v1123 = vsel %vm583, %v1118, %v1122
        %v1125 = vshrl.u32 %v1060, 16
        %v1127 = vrot.slane %v1125, 4
        %v1128 = vshll.u32 %v1060, 16
        %v1130 = vrot.slane %v1128, 5
        %v1131 = vor.u32 %v1127, %v1130
        %v1132 = vrot.slane %v1131, 4
        %v1134 = vshll.u32 %v1061, 16
        %v1136 = vrot.slane %v1134, 5
        %v1137 = vsel %vm583, %v1132, %v1136
        %v1139 = vshrl.u32 %v1062, 16
        %v1141 = vrot.slane %v1139, 4
        %v1142 = vshll.u32 %v1062, 16
        %v1144 = vrot.slane %v1142, 5
        %v1145 = vor.u32 %v1141, %v1144
        %v1146 = vrot.slane %v1145, 4
        %v1148 = vshll.u32 %v1063, 16
        %v1150 = vrot.slane %v1148, 5
        %v1151 = vsel %vm583, %v1146, %v1150
        %v1153 = vshrl.u32 %v1064, 16
        %v1155 = vrot.slane %v1153, 4
        %v1156 = vshll.u32 %v1064, 16
        %v1158 = vrot.slane %v1156, 5
        %v1159 = vor.u32 %v1155, %v1158
        %v1160 = vrot.slane %v1159, 4
        %v1162 = vshll.u32 %v1065, 16
        %v1164 = vrot.slane %v1162, 5
        %v1165 = vsel %vm583, %v1160, %v1164
        %v1167 = vshrl.u32 %v1066, 16
        %v1169 = vrot.slane %v1167, 4
        %v1170 = vshll.u32 %v1066, 16
        %v1172 = vrot.slane %v1170, 5
        %v1173 = vor.u32 %v1169, %v1172
        %v1174 = vrot.slane %v1173, 4
        %v1176 = vshll.u32 %v1067, 16
        %v1178 = vrot.slane %v1176, 5
        %v1179 = vsel %vm583, %v1174, %v1178
        %1188 = vst [vmem:[#allocation3 + $0x1c] sm:$0xf] %v1081
        %1189 = vst [vmem:[#allocation3 + $0x40] sm:$0xf] %v1095
        %1190 = vst [vmem:[#allocation3 + $0x64] sm:$0xf] %v1109
        %1191 = vst [vmem:[#allocation3 + $0x88] sm:$0xf] %v1123
        %1192 = vst [vmem:[#allocation3 + $0xac] sm:$0xf] %v1137
        %1193 = vst [vmem:[#allocation3 + $0xd0] sm:$0xf] %v1151
        %1194 = vst [vmem:[#allocation3 + $0xf4] sm:$0xf] %v1165
        %1195 = vst [vmem:[#allocation3 + $0x118] sm:$0xf] %v1179
        %v1196 = vld [vmem:[%s1035] sm:$0xe]
        %v1197 = vld [vmem:[%s1035 + $0x4] sm:$0x1]
        %v1198 = vld [vmem:[%s1035 + $0x8] sm:$0xe]
        %v1199 = vld [vmem:[%s1035 + $0xc] sm:$0x1]
        %v1200 = vld [vmem:[%s1035 + $0x10] sm:$0xe]
        %v1201 = vld [vmem:[%s1035 + $0x14] sm:$0x1]
        %v1202 = vld [vmem:[%s1035 + $0x18] sm:$0xe]
        %v1203 = vld [vmem:[%s1035 + $0x1c] sm:$0x1]
        %v1204 = vld [vmem:[%s1035 + $0x20] sm:$0xe]
        %v1205 = vld [vmem:[%s1035 + $0x24] sm:$0x1]
        %v1206 = vld [vmem:[%s1035 + $0x28] sm:$0xe]
        %v1207 = vld [vmem:[%s1035 + $0x2c] sm:$0x1]
        %v1208 = vld [vmem:[%s1035 + $0x30] sm:$0xe]
        %v1209 = vld [vmem:[%s1035 + $0x34] sm:$0x1]
        %v1210 = vld [vmem:[%s1035 + $0x38] sm:$0xe]
        %v1211 = vld [vmem:[%s1035 + $0x3c] sm:$0x1]
        %v1228 = vrot.slane %v1196, 5
        %v1229 = vrot.slane %v1228, 4
        %v1230 = vrot.slane %v1197, 5
        %v1231 = vsel %vm746, %v1229, %v1230
        %v1232 = vrot.slane %v1198, 5
        %v1233 = vrot.slane %v1232, 4
        %v1234 = vrot.slane %v1199, 5
        %v1235 = vsel %vm746, %v1233, %v1234
        %v1236 = vrot.slane %v1200, 5
        %v1237 = vrot.slane %v1236, 4
        %v1238 = vrot.slane %v1201, 5
        %v1239 = vsel %vm746, %v1237, %v1238
        %v1240 = vrot.slane %v1202, 5
        %v1241 = vrot.slane %v1240, 4
        %v1242 = vrot.slane %v1203, 5
        %v1243 = vsel %vm746, %v1241, %v1242
        %v1244 = vrot.slane %v1204, 5
        %v1245 = vrot.slane %v1244, 4
        %v1246 = vrot.slane %v1205, 5
        %v1247 = vsel %vm746, %v1245, %v1246
        %v1248 = vrot.slane %v1206, 5
        %v1249 = vrot.slane %v1248, 4
        %v1250 = vrot.slane %v1207, 5
        %v1251 = vsel %vm746, %v1249, %v1250
        %v1252 = vrot.slane %v1208, 5
        %v1253 = vrot.slane %v1252, 4
        %v1254 = vrot.slane %v1209, 5
        %v1255 = vsel %vm746, %v1253, %v1254
        %v1256 = vrot.slane %v1210, 5
        %v1257 = vrot.slane %v1256, 4
        %v1258 = vrot.slane %v1211, 5
        %v1259 = vsel %vm746, %v1257, %v1258
        %1268 = vst [vmem:[#allocation3 + $0x20] sm:$0xf] %v1231
        %1269 = vst [vmem:[#allocation3 + $0x44] sm:$0xf] %v1235
        %1270 = vst [vmem:[#allocation3 + $0x68] sm:$0xf] %v1239
        %1271 = vst [vmem:[#allocation3 + $0x8c] sm:$0xf] %v1243
        %1272 = vst [vmem:[#allocation3 + $0xb0] sm:$0xf] %v1247
        %1273 = vst [vmem:[#allocation3 + $0xd4] sm:$0xf] %v1251
        %1274 = vst [vmem:[#allocation3 + $0xf8] sm:$0xf] %v1255
        %1275 = vst [vmem:[#allocation3 + $0x11c] sm:$0xf] %v1259
        %v1276 = vld [vmem:[#allocation3] sm:$0xff]
        %v1277 = vld [vmem:[#allocation3 + $0x8] sm:$0xff]
        %v1278 = vld [vmem:[#allocation3 + $0x10] sm:$0xff]
        %v1279 = vld [vmem:[#allocation3 + $0x18] sm:$0xff]
        %v1280 = vld [vmem:[#allocation3 + $0x20] sm:$0xf]
        %v1281 = vld [vmem:[#allocation3 + $0x24] sm:$0xff]
        %v1282 = vld [vmem:[#allocation3 + $0x2c] sm:$0xff]
        %v1283 = vld [vmem:[#allocation3 + $0x34] sm:$0xff]
        %v1284 = vld [vmem:[#allocation3 + $0x3c] sm:$0xff]
        %v1285 = vld [vmem:[#allocation3 + $0x44] sm:$0xf]
        %v1286 = vld [vmem:[#allocation3 + $0x48] sm:$0xff]
        %v1287 = vld [vmem:[#allocation3 + $0x50] sm:$0xff]
        %v1288 = vld [vmem:[#allocation3 + $0x58] sm:$0xff]
        %v1289 = vld [vmem:[#allocation3 + $0x60] sm:$0xff]
        %v1290 = vld [vmem:[#allocation3 + $0x68] sm:$0xf]
        %v1291 = vld [vmem:[#allocation3 + $0x6c] sm:$0xff]
        %v1292 = vld [vmem:[#allocation3 + $0x74] sm:$0xff]
        %v1293 = vld [vmem:[#allocation3 + $0x7c] sm:$0xff]
        %v1294 = vld [vmem:[#allocation3 + $0x84] sm:$0xff]
        %v1295 = vld [vmem:[#allocation3 + $0x8c] sm:$0xf]
        %v1296 = vld [vmem:[#allocation3 + $0x90] sm:$0xff]
        %v1297 = vld [vmem:[#allocation3 + $0x98] sm:$0xff]
        %v1298 = vld [vmem:[#allocation3 + $0xa0] sm:$0xff]
        %v1299 = vld [vmem:[#allocation3 + $0xa8] sm:$0xff]
        %v1300 = vld [vmem:[#allocation3 + $0xb0] sm:$0xf]
        %v1301 = vld [vmem:[#allocation3 + $0xb4] sm:$0xff]
        %v1302 = vld [vmem:[#allocation3 + $0xbc] sm:$0xff]
        %v1303 = vld [vmem:[#allocation3 + $0xc4] sm:$0xff]
        %v1304 = vld [vmem:[#allocation3 + $0xcc] sm:$0xff]
        %v1305 = vld [vmem:[#allocation3 + $0xd4] sm:$0xf]
        %v1306 = vld [vmem:[#allocation3 + $0xd8] sm:$0xff]
        %v1307 = vld [vmem:[#allocation3 + $0xe0] sm:$0xff]
        %v1308 = vld [vmem:[#allocation3 + $0xe8] sm:$0xff]
        %v1309 = vld [vmem:[#allocation3 + $0xf0] sm:$0xff]
        %v1310 = vld [vmem:[#allocation3 + $0xf8] sm:$0xf]
        %v1311 = vld [vmem:[#allocation3 + $0xfc] sm:$0xff]
        %v1312 = vld [vmem:[#allocation3 + $0x104] sm:$0xff]
        %v1313 = vld [vmem:[#allocation3 + $0x10c] sm:$0xff]
        %v1314 = vld [vmem:[#allocation3 + $0x114] sm:$0xff]
        %v1315 = vld [vmem:[#allocation3 + $0x11c] sm:$0xf]
        %v1316 = vld [vmem:[#allocation7] sm:$0xf]
        %v1317 = vld [vmem:[#allocation7 + $0x4] sm:$0xf]
        %v1318 = vld [vmem:[#allocation7 + $0x8] sm:$0xf]
        %v1319 = vld [vmem:[#allocation7 + $0xc] sm:$0xf]
        %v1320 = vld [vmem:[#allocation7 + $0x10] sm:$0xf]
        %v1321 = vld [vmem:[#allocation7 + $0x14] sm:$0xf]
        %v1322 = vld [vmem:[#allocation7 + $0x18] sm:$0xf]
        %v1323 = vld [vmem:[#allocation7 + $0x1c] sm:$0xf]
        %v1324 = vld [vmem:[#allocation7 + $0x20] sm:$0xf]
        %v1325 = vld [vmem:[#allocation7 + $0x24] sm:$0xf]
        %v1326 = vld [vmem:[#allocation7 + $0x28] sm:$0xf]
        %v1327 = vld [vmem:[#allocation7 + $0x2c] sm:$0xf]
        %v1328 = vld [vmem:[#allocation7 + $0x30] sm:$0xf]
        %v1329 = vld [vmem:[#allocation7 + $0x34] sm:$0xf]
        %v1330 = vld [vmem:[#allocation7 + $0x38] sm:$0xf]
        %v1331 = vld [vmem:[#allocation7 + $0x3c] sm:$0xf]
        %v1332 = vld [vmem:[#allocation7 + $0x40] sm:$0xf]
        %v1333 = vld [vmem:[#allocation7 + $0x44] sm:$0xf]
        %v1334 = vld [vmem:[#allocation7 + $0x48] sm:$0xf]
        %v1335 = vld [vmem:[#allocation7 + $0x4c] sm:$0xf]
        %v1336 = vld [vmem:[#allocation7 + $0x50] sm:$0xf]
        %v1337 = vld [vmem:[#allocation7 + $0x54] sm:$0xf]
        %v1338 = vld [vmem:[#allocation7 + $0x58] sm:$0xf]
        %v1339 = vld [vmem:[#allocation7 + $0x5c] sm:$0xf]
        %v1340 = vld [vmem:[#allocation7 + $0x60] sm:$0xf]
        %v1341 = vld [vmem:[#allocation7 + $0x64] sm:$0xf]
        %v1342 = vld [vmem:[#allocation7 + $0x68] sm:$0xf]
        %v1343 = vld [vmem:[#allocation7 + $0x6c] sm:$0xf]
        %v1344 = vld [vmem:[#allocation7 + $0x70] sm:$0xf]
        %v1345 = vld [vmem:[#allocation7 + $0x74] sm:$0xf]
        %v1346 = vld [vmem:[#allocation7 + $0x78] sm:$0xf]
        %v1347 = vld [vmem:[#allocation7 + $0x7c] sm:$0xf]
        %v1348 = vld [vmem:[#allocation7 + $0x80] sm:$0xf]
        %v1349 = vld [vmem:[#allocation7 + $0x84] sm:$0xf]
        %v1350 = vld [vmem:[#allocation7 + $0x88] sm:$0xf]
        %v1351 = vld [vmem:[#allocation7 + $0x8c] sm:$0xf]
        %v1352 = vld [vmem:[#allocation7 + $0x90] sm:$0xf]
        %v1353 = vld [vmem:[#allocation7 + $0x94] sm:$0xf]
        %v1354 = vld [vmem:[#allocation7 + $0x98] sm:$0xf]
        %v1355 = vld [vmem:[#allocation7 + $0x9c] sm:$0xf]
        %v1356 = vld [vmem:[#allocation7 + $0xa0] sm:$0xf]
        %v1357 = vld [vmem:[#allocation7 + $0xa4] sm:$0xf]
        %v1358 = vld [vmem:[#allocation7 + $0xa8] sm:$0xf]
        %v1359 = vld [vmem:[#allocation7 + $0xac] sm:$0xf]
        %v1360 = vld [vmem:[#allocation7 + $0xb0] sm:$0xf]
        %v1361 = vld [vmem:[#allocation7 + $0xb4] sm:$0xf]
        %v1362 = vld [vmem:[#allocation7 + $0xb8] sm:$0xf]
        %v1363 = vld [vmem:[#allocation7 + $0xbc] sm:$0xf]
        %v1364 = vld [vmem:[#allocation7 + $0xc0] sm:$0xf]
        %v1365 = vld [vmem:[#allocation7 + $0xc4] sm:$0xf]
        %v1366 = vld [vmem:[#allocation7 + $0xc8] sm:$0xf]
        %v1367 = vld [vmem:[#allocation7 + $0xcc] sm:$0xf]
        %v1368 = vld [vmem:[#allocation7 + $0xd0] sm:$0xf]
        %v1369 = vld [vmem:[#allocation7 + $0xd4] sm:$0xf]
        %v1370 = vld [vmem:[#allocation7 + $0xd8] sm:$0xf]
        %v1371 = vld [vmem:[#allocation7 + $0xdc] sm:$0xf]
        %v1372 = vld [vmem:[#allocation7 + $0xe0] sm:$0xf]
        %v1373 = vld [vmem:[#allocation7 + $0xe4] sm:$0xf]
        %v1374 = vld [vmem:[#allocation7 + $0xe8] sm:$0xf]
        %v1375 = vld [vmem:[#allocation7 + $0xec] sm:$0xf]
        %v1376 = vld [vmem:[#allocation7 + $0xf0] sm:$0xf]
        %v1377 = vld [vmem:[#allocation7 + $0xf4] sm:$0xf]
        %v1378 = vld [vmem:[#allocation7 + $0xf8] sm:$0xf]
        %v1379 = vld [vmem:[#allocation7 + $0xfc] sm:$0xf]
        %v1380 = vld [vmem:[#allocation7 + $0x100] sm:$0xf]
        %v1381 = vld [vmem:[#allocation7 + $0x104] sm:$0xf]
        %v1382 = vld [vmem:[#allocation7 + $0x108] sm:$0xf]
        %v1383 = vld [vmem:[#allocation7 + $0x10c] sm:$0xf]
        %v1384 = vld [vmem:[#allocation7 + $0x110] sm:$0xf]
        %v1385 = vld [vmem:[#allocation7 + $0x114] sm:$0xf]
        %v1386 = vld [vmem:[#allocation7 + $0x118] sm:$0xf]
        %v1387 = vld [vmem:[#allocation7 + $0x11c] sm:$0xf]
        %v1388 = vld [vmem:[#allocation7 + $0x120] sm:$0xf]
        %v1389 = vld [vmem:[#allocation7 + $0x124] sm:$0xf]
        %v1390 = vld [vmem:[#allocation7 + $0x128] sm:$0xf]
        %v1391 = vld [vmem:[#allocation7 + $0x12c] sm:$0xf]
        %v1392 = vld [vmem:[#allocation7 + $0x130] sm:$0xf]
        %v1393 = vld [vmem:[#allocation7 + $0x134] sm:$0xf]
        %v1394 = vld [vmem:[#allocation7 + $0x138] sm:$0xf]
        %v1395 = vld [vmem:[#allocation7 + $0x13c] sm:$0xf]
        %v1396 = vld [vmem:[#allocation7 + $0x140] sm:$0xf]
        %v1397 = vld [vmem:[#allocation7 + $0x144] sm:$0xf]
        %v1398 = vld [vmem:[#allocation7 + $0x148] sm:$0xf]
        %v1399 = vld [vmem:[#allocation7 + $0x14c] sm:$0xf]
        %v1400 = vld [vmem:[#allocation7 + $0x150] sm:$0xf]
        %v1401 = vld [vmem:[#allocation7 + $0x154] sm:$0xf]
        %v1402 = vld [vmem:[#allocation7 + $0x158] sm:$0xf]
        %v1403 = vld [vmem:[#allocation7 + $0x15c] sm:$0xf]
        %v1404 = vld [vmem:[#allocation7 + $0x160] sm:$0xf]
        %v1405 = vld [vmem:[#allocation7 + $0x164] sm:$0xf]
        %v1406 = vld [vmem:[#allocation7 + $0x168] sm:$0xf]
        %v1407 = vld [vmem:[#allocation7 + $0x16c] sm:$0xf]
        %v1408 = vld [vmem:[#allocation7 + $0x170] sm:$0xf]
        %v1409 = vld [vmem:[#allocation7 + $0x174] sm:$0xf]
        %v1410 = vld [vmem:[#allocation7 + $0x178] sm:$0xf]
        %v1411 = vld [vmem:[#allocation7 + $0x17c] sm:$0xf]
        %v1412 = vld [vmem:[#allocation7 + $0x180] sm:$0xf]
        %v1413 = vld [vmem:[#allocation7 + $0x184] sm:$0xf]
        %v1414 = vld [vmem:[#allocation7 + $0x188] sm:$0xf]
        %v1415 = vld [vmem:[#allocation7 + $0x18c] sm:$0xf]
        %v1416 = vld [vmem:[#allocation7 + $0x190] sm:$0xf]
        %v1417 = vld [vmem:[#allocation7 + $0x194] sm:$0xf]
        %v1418 = vld [vmem:[#allocation7 + $0x198] sm:$0xf]
        %v1419 = vld [vmem:[#allocation7 + $0x19c] sm:$0xf]
        %v1420 = vld [vmem:[#allocation7 + $0x1a0] sm:$0xf]
        %v1421 = vld [vmem:[#allocation7 + $0x1a4] sm:$0xf]
        %v1422 = vld [vmem:[#allocation7 + $0x1a8] sm:$0xf]
        %v1423 = vld [vmem:[#allocation7 + $0x1ac] sm:$0xf]
        %v1424 = vld [vmem:[#allocation7 + $0x1b0] sm:$0xf]
        %v1425 = vld [vmem:[#allocation7 + $0x1b4] sm:$0xf]
        %v1426 = vld [vmem:[#allocation7 + $0x1b8] sm:$0xf]
        %v1427 = vld [vmem:[#allocation7 + $0x1bc] sm:$0xf]
        %v1428 = vld [vmem:[#allocation7 + $0x1c0] sm:$0xf]
        %v1429 = vld [vmem:[#allocation7 + $0x1c4] sm:$0xf]
        %v1430 = vld [vmem:[#allocation7 + $0x1c8] sm:$0xf]
        %v1431 = vld [vmem:[#allocation7 + $0x1cc] sm:$0xf]
        %v1432 = vld [vmem:[#allocation7 + $0x1d0] sm:$0xf]
        %v1433 = vld [vmem:[#allocation7 + $0x1d4] sm:$0xf]
        %v1434 = vld [vmem:[#allocation7 + $0x1d8] sm:$0xf]
        %v1435 = vld [vmem:[#allocation7 + $0x1dc] sm:$0xf]
        %v1436 = vld [vmem:[#allocation7 + $0x1e0] sm:$0xf]
        %v1437 = vld [vmem:[#allocation7 + $0x1e4] sm:$0xf]
        %v1438 = vld [vmem:[#allocation7 + $0x1e8] sm:$0xf]
        %v1439 = vld [vmem:[#allocation7 + $0x1ec] sm:$0xf]
        %v1440 = vld [vmem:[#allocation7 + $0x1f0] sm:$0xf]
        %v1441 = vld [vmem:[#allocation7 + $0x1f4] sm:$0xf]
        %v1442 = vld [vmem:[#allocation7 + $0x1f8] sm:$0xf]
        %v1443 = vld [vmem:[#allocation7 + $0x1fc] sm:$0xf]
        %v1444 = vld [vmem:[#allocation7 + $0x200] sm:$0xf]
        %v1445 = vld [vmem:[#allocation7 + $0x204] sm:$0xf]
        %v1446 = vld [vmem:[#allocation7 + $0x208] sm:$0xf]
        %v1447 = vld [vmem:[#allocation7 + $0x20c] sm:$0xf]
        %v1448 = vld [vmem:[#allocation7 + $0x210] sm:$0xf]
        %v1449 = vld [vmem:[#allocation7 + $0x214] sm:$0xf]
        %v1450 = vld [vmem:[#allocation7 + $0x218] sm:$0xf]
        %v1451 = vld [vmem:[#allocation7 + $0x21c] sm:$0xf]
        %v1452 = vld [vmem:[#allocation7 + $0x220] sm:$0xf]
        %v1453 = vld [vmem:[#allocation7 + $0x224] sm:$0xf]
        %v1454 = vld [vmem:[#allocation7 + $0x228] sm:$0xf]
        %v1455 = vld [vmem:[#allocation7 + $0x22c] sm:$0xf]
        %v1456 = vld [vmem:[#allocation7 + $0x230] sm:$0xf]
        %v1457 = vld [vmem:[#allocation7 + $0x234] sm:$0xf]
        %v1458 = vld [vmem:[#allocation7 + $0x238] sm:$0xf]
        %v1459 = vld [vmem:[#allocation7 + $0x23c] sm:$0xf]
        %v1500 = vunpack.c.l.b16 %v1276
        %v1501 = vunpack.c.h.b16 %v1276
        %v1502 = vunpack.c.l.b16 %v1277
        %v1503 = vunpack.c.h.b16 %v1277
        %v1504 = vunpack.c.l.b16 %v1278
        %v1505 = vunpack.c.h.b16 %v1278
        %v1506 = vunpack.c.l.b16 %v1279
        %v1507 = vunpack.c.h.b16 %v1279
        %v1508 = vunpack.c.l.b16 %v1280
        %v1509 = vunpack.c.l.b16 %v1281
        %v1510 = vunpack.c.h.b16 %v1281
        %v1511 = vunpack.c.l.b16 %v1282
        %v1512 = vunpack.c.h.b16 %v1282
        %v1513 = vunpack.c.l.b16 %v1283
        %v1514 = vunpack.c.h.b16 %v1283
        %v1515 = vunpack.c.l.b16 %v1284
        %v1516 = vunpack.c.h.b16 %v1284
        %v1517 = vunpack.c.l.b16 %v1285
        %v1518 = vunpack.c.l.b16 %v1286
        %v1519 = vunpack.c.h.b16 %v1286
        %v1520 = vunpack.c.l.b16 %v1287
        %v1521 = vunpack.c.h.b16 %v1287
        %v1522 = vunpack.c.l.b16 %v1288
        %v1523 = vunpack.c.h.b16 %v1288
        %v1524 = vunpack.c.l.b16 %v1289
        %v1525 = vunpack.c.h.b16 %v1289
        %v1526 = vunpack.c.l.b16 %v1290
        %v1527 = vunpack.c.l.b16 %v1291
        %v1528 = vunpack.c.h.b16 %v1291
        %v1529 = vunpack.c.l.b16 %v1292
        %v1530 = vunpack.c.h.b16 %v1292
        %v1531 = vunpack.c.l.b16 %v1293
        %v1532 = vunpack.c.h.b16 %v1293
        %v1533 = vunpack.c.l.b16 %v1294
        %v1534 = vunpack.c.h.b16 %v1294
        %v1535 = vunpack.c.l.b16 %v1295
        %v1536 = vunpack.c.l.b16 %v1296
        %v1537 = vunpack.c.h.b16 %v1296
        %v1538 = vunpack.c.l.b16 %v1297
        %v1539 = vunpack.c.h.b16 %v1297
        %v1540 = vunpack.c.l.b16 %v1298
        %v1541 = vunpack.c.h.b16 %v1298
        %v1542 = vunpack.c.l.b16 %v1299
        %v1543 = vunpack.c.h.b16 %v1299
        %v1544 = vunpack.c.l.b16 %v1300
        %v1545 = vunpack.c.l.b16 %v1301
        %v1546 = vunpack.c.h.b16 %v1301
        %v1547 = vunpack.c.l.b16 %v1302
        %v1548 = vunpack.c.h.b16 %v1302
        %v1549 = vunpack.c.l.b16 %v1303
        %v1550 = vunpack.c.h.b16 %v1303
        %v1551 = vunpack.c.l.b16 %v1304
        %v1552 = vunpack.c.h.b16 %v1304
        %v1553 = vunpack.c.l.b16 %v1305
        %v1554 = vunpack.c.l.b16 %v1306
        %v1555 = vunpack.c.h.b16 %v1306
        %v1556 = vunpack.c.l.b16 %v1307
        %v1557 = vunpack.c.h.b16 %v1307
        %v1558 = vunpack.c.l.b16 %v1308
        %v1559 = vunpack.c.h.b16 %v1308
        %v1560 = vunpack.c.l.b16 %v1309
        %v1561 = vunpack.c.h.b16 %v1309
        %v1562 = vunpack.c.l.b16 %v1310
        %v1563 = vunpack.c.l.b16 %v1311
        %v1564 = vunpack.c.h.b16 %v1311
        %v1565 = vunpack.c.l.b16 %v1312
        %v1566 = vunpack.c.h.b16 %v1312
        %v1567 = vunpack.c.l.b16 %v1313
        %v1568 = vunpack.c.h.b16 %v1313
        %v1569 = vunpack.c.l.b16 %v1314
        %v1570 = vunpack.c.h.b16 %v1314
        %v1571 = vunpack.c.l.b16 %v1315
        %v1572 = vpack.c.b16 %v1509, %v1500
        %v1573 = vpack.c.b16 %v1510, %v1501
        %v1574 = vpack.c.b16 %v1511, %v1502
        %v1575 = vpack.c.b16 %v1512, %v1503
        %v1576 = vpack.c.b16 %v1513, %v1504
        %v1577 = vpack.c.b16 %v1514, %v1505
        %v1578 = vpack.c.b16 %v1515, %v1506
        %v1579 = vpack.c.b16 %v1516, %v1507
        %v1580 = vpack.c.b16 %v1517, %v1508
        %v1581 = vpack.c.b16 %v1527, %v1518
        %v1582 = vpack.c.b16 %v1528, %v1519
        %v1583 = vpack.c.b16 %v1529, %v1520
        %v1584 = vpack.c.b16 %v1530, %v1521
        %v1585 = vpack.c.b16 %v1531, %v1522
        %v1586 = vpack.c.b16 %v1532, %v1523
        %v1587 = vpack.c.b16 %v1533, %v1524
        %v1588 = vpack.c.b16 %v1534, %v1525
        %v1589 = vpack.c.b16 %v1535, %v1526
        %v1590 = vpack.c.b16 %v1545, %v1536
        %v1591 = vpack.c.b16 %v1546, %v1537
        %v1592 = vpack.c.b16 %v1547, %v1538
        %v1593 = vpack.c.b16 %v1548, %v1539
        %v1594 = vpack.c.b16 %v1549, %v1540
        %v1595 = vpack.c.b16 %v1550, %v1541
        %v1596 = vpack.c.b16 %v1551, %v1542
        %v1597 = vpack.c.b16 %v1552, %v1543
        %v1598 = vpack.c.b16 %v1553, %v1544
        %v1599 = vpack.c.b16 %v1563, %v1554
        %v1600 = vpack.c.b16 %v1564, %v1555
        %v1601 = vpack.c.b16 %v1565, %v1556
        %v1602 = vpack.c.b16 %v1566, %v1557
        %v1603 = vpack.c.b16 %v1567, %v1558
        %v1604 = vpack.c.b16 %v1568, %v1559
        %v1605 = vpack.c.b16 %v1569, %v1560
        %v1606 = vpack.c.b16 %v1570, %v1561
        %v1607 = vpack.c.b16 %v1571, %v1562
        %v1788 = vunpack.c.l.b16 %v1316
        %v1789 = vunpack.c.l.b16 %v1317
        %v1790 = vunpack.c.l.b16 %v1318
        %v1791 = vunpack.c.l.b16 %v1319
        %v1792 = vunpack.c.l.b16 %v1320
        %v1793 = vunpack.c.l.b16 %v1321
        %v1794 = vunpack.c.l.b16 %v1322
        %v1795 = vunpack.c.l.b16 %v1323
        %v1796 = vunpack.c.l.b16 %v1324
        %v1797 = vunpack.c.l.b16 %v1325
        %v1798 = vunpack.c.l.b16 %v1326
        %v1799 = vunpack.c.l.b16 %v1327
        %v1800 = vunpack.c.l.b16 %v1328
        %v1801 = vunpack.c.l.b16 %v1329
        %v1802 = vunpack.c.l.b16 %v1330
        %v1803 = vunpack.c.l.b16 %v1331
        %v1804 = vunpack.c.l.b16 %v1332
        %v1805 = vunpack.c.l.b16 %v1333
        %v1806 = vunpack.c.l.b16 %v1334
        %v1807 = vunpack.c.l.b16 %v1335
        %v1808 = vunpack.c.l.b16 %v1336
        %v1809 = vunpack.c.l.b16 %v1337
        %v1810 = vunpack.c.l.b16 %v1338
        %v1811 = vunpack.c.l.b16 %v1339
        %v1812 = vunpack.c.l.b16 %v1340
        %v1813 = vunpack.c.l.b16 %v1341
        %v1814 = vunpack.c.l.b16 %v1342
        %v1815 = vunpack.c.l.b16 %v1343
        %v1816 = vunpack.c.l.b16 %v1344
        %v1817 = vunpack.c.l.b16 %v1345
        %v1818 = vunpack.c.l.b16 %v1346
        %v1819 = vunpack.c.l.b16 %v1347
        %v1820 = vunpack.c.l.b16 %v1348
        %v1821 = vunpack.c.l.b16 %v1349
        %v1822 = vunpack.c.l.b16 %v1350
        %v1823 = vunpack.c.l.b16 %v1351
        %v1824 = vunpack.c.l.b16 %v1352
        %v1825 = vunpack.c.l.b16 %v1353
        %v1826 = vunpack.c.l.b16 %v1354
        %v1827 = vunpack.c.l.b16 %v1355
        %v1828 = vunpack.c.l.b16 %v1356
        %v1829 = vunpack.c.l.b16 %v1357
        %v1830 = vunpack.c.l.b16 %v1358
        %v1831 = vunpack.c.l.b16 %v1359
        %v1832 = vunpack.c.l.b16 %v1360
        %v1833 = vunpack.c.l.b16 %v1361
        %v1834 = vunpack.c.l.b16 %v1362
        %v1835 = vunpack.c.l.b16 %v1363
        %v1836 = vunpack.c.l.b16 %v1364
        %v1837 = vunpack.c.l.b16 %v1365
        %v1838 = vunpack.c.l.b16 %v1366
        %v1839 = vunpack.c.l.b16 %v1367
        %v1840 = vunpack.c.l.b16 %v1368
        %v1841 = vunpack.c.l.b16 %v1369
        %v1842 = vunpack.c.l.b16 %v1370
        %v1843 = vunpack.c.l.b16 %v1371
        %v1844 = vunpack.c.l.b16 %v1372
        %v1845 = vunpack.c.l.b16 %v1373
        %v1846 = vunpack.c.l.b16 %v1374
        %v1847 = vunpack.c.l.b16 %v1375
        %v1848 = vunpack.c.l.b16 %v1376
        %v1849 = vunpack.c.l.b16 %v1377
        %v1850 = vunpack.c.l.b16 %v1378
        %v1851 = vunpack.c.l.b16 %v1379
        %v1852 = vunpack.c.l.b16 %v1380
        %v1853 = vunpack.c.l.b16 %v1381
        %v1854 = vunpack.c.l.b16 %v1382
        %v1855 = vunpack.c.l.b16 %v1383
        %v1856 = vunpack.c.l.b16 %v1384
        %v1857 = vunpack.c.l.b16 %v1385
        %v1858 = vunpack.c.l.b16 %v1386
        %v1859 = vunpack.c.l.b16 %v1387
        %v1860 = vunpack.c.l.b16 %v1388
        %v1861 = vunpack.c.l.b16 %v1389
        %v1862 = vunpack.c.l.b16 %v1390
        %v1863 = vunpack.c.l.b16 %v1391
        %v1864 = vunpack.c.l.b16 %v1392
        %v1865 = vunpack.c.l.b16 %v1393
        %v1866 = vunpack.c.l.b16 %v1394
        %v1867 = vunpack.c.l.b16 %v1395
        %v1868 = vunpack.c.l.b16 %v1396
        %v1869 = vunpack.c.l.b16 %v1397
        %v1870 = vunpack.c.l.b16 %v1398
        %v1871 = vunpack.c.l.b16 %v1399
        %v1872 = vunpack.c.l.b16 %v1400
        %v1873 = vunpack.c.l.b16 %v1401
        %v1874 = vunpack.c.l.b16 %v1402
        %v1875 = vunpack.c.l.b16 %v1403
        %v1876 = vunpack.c.l.b16 %v1404
        %v1877 = vunpack.c.l.b16 %v1405
        %v1878 = vunpack.c.l.b16 %v1406
        %v1879 = vunpack.c.l.b16 %v1407
        %v1880 = vunpack.c.l.b16 %v1408
        %v1881 = vunpack.c.l.b16 %v1409
        %v1882 = vunpack.c.l.b16 %v1410
        %v1883 = vunpack.c.l.b16 %v1411
        %v1884 = vunpack.c.l.b16 %v1412
        %v1885 = vunpack.c.l.b16 %v1413
        %v1886 = vunpack.c.l.b16 %v1414
        %v1887 = vunpack.c.l.b16 %v1415
        %v1888 = vunpack.c.l.b16 %v1416
        %v1889 = vunpack.c.l.b16 %v1417
        %v1890 = vunpack.c.l.b16 %v1418
        %v1891 = vunpack.c.l.b16 %v1419
        %v1892 = vunpack.c.l.b16 %v1420
        %v1893 = vunpack.c.l.b16 %v1421
        %v1894 = vunpack.c.l.b16 %v1422
        %v1895 = vunpack.c.l.b16 %v1423
        %v1896 = vunpack.c.l.b16 %v1424
        %v1897 = vunpack.c.l.b16 %v1425
        %v1898 = vunpack.c.l.b16 %v1426
        %v1899 = vunpack.c.l.b16 %v1427
        %v1900 = vunpack.c.l.b16 %v1428
        %v1901 = vunpack.c.l.b16 %v1429
        %v1902 = vunpack.c.l.b16 %v1430
        %v1903 = vunpack.c.l.b16 %v1431
        %v1904 = vunpack.c.l.b16 %v1432
        %v1905 = vunpack.c.l.b16 %v1433
        %v1906 = vunpack.c.l.b16 %v1434
        %v1907 = vunpack.c.l.b16 %v1435
        %v1908 = vunpack.c.l.b16 %v1436
        %v1909 = vunpack.c.l.b16 %v1437
        %v1910 = vunpack.c.l.b16 %v1438
        %v1911 = vunpack.c.l.b16 %v1439
        %v1912 = vunpack.c.l.b16 %v1440
        %v1913 = vunpack.c.l.b16 %v1441
        %v1914 = vunpack.c.l.b16 %v1442
        %v1915 = vunpack.c.l.b16 %v1443
        %v1916 = vunpack.c.l.b16 %v1444
        %v1917 = vunpack.c.l.b16 %v1445
        %v1918 = vunpack.c.l.b16 %v1446
        %v1919 = vunpack.c.l.b16 %v1447
        %v1920 = vunpack.c.l.b16 %v1448
        %v1921 = vunpack.c.l.b16 %v1449
        %v1922 = vunpack.c.l.b16 %v1450
        %v1923 = vunpack.c.l.b16 %v1451
        %v1924 = vunpack.c.l.b16 %v1452
        %v1925 = vunpack.c.l.b16 %v1453
        %v1926 = vunpack.c.l.b16 %v1454
        %v1927 = vunpack.c.l.b16 %v1455
        %v1928 = vunpack.c.l.b16 %v1456
        %v1929 = vunpack.c.l.b16 %v1457
        %v1930 = vunpack.c.l.b16 %v1458
        %v1931 = vunpack.c.l.b16 %v1459
        %v1932 = vpack.c.b16 %v1789, %v1788
        %v1933 = vpack.c.b16 %v1791, %v1790
        %v1934 = vpack.c.b16 %v1793, %v1792
        %v1935 = vpack.c.b16 %v1795, %v1794
        %v1936 = vpack.c.b16 %v1797, %v1796
        %v1937 = vpack.c.b16 %v1799, %v1798
        %v1938 = vpack.c.b16 %v1801, %v1800
        %v1939 = vpack.c.b16 %v1803, %v1802
        %v1940 = vpack.c.b16 %v1805, %v1804
        %v1941 = vpack.c.b16 %v1807, %v1806
        %v1942 = vpack.c.b16 %v1809, %v1808
        %v1943 = vpack.c.b16 %v1811, %v1810
        %v1944 = vpack.c.b16 %v1813, %v1812
        %v1945 = vpack.c.b16 %v1815, %v1814
        %v1946 = vpack.c.b16 %v1817, %v1816
        %v1947 = vpack.c.b16 %v1819, %v1818
        %v1948 = vpack.c.b16 %v1821, %v1820
        %v1949 = vpack.c.b16 %v1823, %v1822
        %v1950 = vpack.c.b16 %v1825, %v1824
        %v1951 = vpack.c.b16 %v1827, %v1826
        %v1952 = vpack.c.b16 %v1829, %v1828
        %v1953 = vpack.c.b16 %v1831, %v1830
        %v1954 = vpack.c.b16 %v1833, %v1832
        %v1955 = vpack.c.b16 %v1835, %v1834
        %v1956 = vpack.c.b16 %v1837, %v1836
        %v1957 = vpack.c.b16 %v1839, %v1838
        %v1958 = vpack.c.b16 %v1841, %v1840
        %v1959 = vpack.c.b16 %v1843, %v1842
        %v1960 = vpack.c.b16 %v1845, %v1844
        %v1961 = vpack.c.b16 %v1847, %v1846
        %v1962 = vpack.c.b16 %v1849, %v1848
        %v1963 = vpack.c.b16 %v1851, %v1850
        %v1964 = vpack.c.b16 %v1853, %v1852
        %v1965 = vpack.c.b16 %v1855, %v1854
        %v1966 = vpack.c.b16 %v1857, %v1856
        %v1967 = vpack.c.b16 %v1859, %v1858
        %v1968 = vpack.c.b16 %v1861, %v1860
        %v1969 = vpack.c.b16 %v1863, %v1862
        %v1970 = vpack.c.b16 %v1865, %v1864
        %v1971 = vpack.c.b16 %v1867, %v1866
        %v1972 = vpack.c.b16 %v1869, %v1868
        %v1973 = vpack.c.b16 %v1871, %v1870
        %v1974 = vpack.c.b16 %v1873, %v1872
        %v1975 = vpack.c.b16 %v1875, %v1874
        %v1976 = vpack.c.b16 %v1877, %v1876
        %v1977 = vpack.c.b16 %v1879, %v1878
        %v1978 = vpack.c.b16 %v1881, %v1880
        %v1979 = vpack.c.b16 %v1883, %v1882
        %v1980 = vpack.c.b16 %v1885, %v1884
        %v1981 = vpack.c.b16 %v1887, %v1886
        %v1982 = vpack.c.b16 %v1889, %v1888
        %v1983 = vpack.c.b16 %v1891, %v1890
        %v1984 = vpack.c.b16 %v1893, %v1892
        %v1985 = vpack.c.b16 %v1895, %v1894
        %v1986 = vpack.c.b16 %v1897, %v1896
        %v1987 = vpack.c.b16 %v1899, %v1898
        %v1988 = vpack.c.b16 %v1901, %v1900
        %v1989 = vpack.c.b16 %v1903, %v1902
        %v1990 = vpack.c.b16 %v1905, %v1904
        %v1991 = vpack.c.b16 %v1907, %v1906
        %v1992 = vpack.c.b16 %v1909, %v1908
        %v1993 = vpack.c.b16 %v1911, %v1910
        %v1994 = vpack.c.b16 %v1913, %v1912
        %v1995 = vpack.c.b16 %v1915, %v1914
        %v1996 = vpack.c.b16 %v1917, %v1916
        %v1997 = vpack.c.b16 %v1919, %v1918
        %v1998 = vpack.c.b16 %v1921, %v1920
        %v1999 = vpack.c.b16 %v1923, %v1922
        %v2000 = vpack.c.b16 %v1925, %v1924
        %v2001 = vpack.c.b16 %v1927, %v1926
        %v2002 = vpack.c.b16 %v1929, %v1928
        %v2003 = vpack.c.b16 %v1931, %v1930
        %2076 = vmatprep.subr.bf16.mxu0 0
        %2077 = vmatpush1.bf16.msra.mxu0 %v1939
        %2078 = vmatprep.subr.bf16.mxu0 0
        %2079 = vmatpush1.bf16.msra.mxu0 %v1938
        %2080 = vmatprep.subr.bf16.mxu0 0
        %2081 = vmatpush1.bf16.msra.mxu0 %v1937
        %2082 = vmatprep.subr.bf16.mxu0 0
        %2083 = vmatpush1.bf16.msra.mxu0 %v1936
        %2084 = vmatprep.subr.bf16.mxu0 0
        %2085 = vmatpush1.bf16.msra.mxu0 %v1935
        %2086 = vmatprep.subr.bf16.mxu0 0
        %2087 = vmatpush1.bf16.msra.mxu0 %v1934
        %2088 = vmatprep.subr.bf16.mxu0 0
        %2089 = vmatpush1.bf16.msra.mxu0 %v1933
        %2090 = vmatprep.subr.bf16.mxu0 0
        %2091 = vmatpush1.bf16.msra.mxu0 %v1932
        %2092 = vmatprep.subr.bf16.mxu0 0
        %2093 = vmatpush2.bf16.msra.mxu0 %v1947
        %2094 = vmatprep.subr.bf16.mxu0 0
        %2095 = vmatpush2.bf16.msra.mxu0 %v1946
        %2096 = vmatprep.subr.bf16.mxu0 0
        %2097 = vmatpush2.bf16.msra.mxu0 %v1945
        %2098 = vmatprep.subr.bf16.mxu0 0
        %2099 = vmatpush2.bf16.msra.mxu0 %v1944
        %2100 = vmatprep.subr.bf16.mxu0 0
        %2101 = vmatpush2.bf16.msra.mxu0 %v1943
        %2102 = vmatprep.subr.bf16.mxu0 0
        %2103 = vmatpush2.bf16.msra.mxu0 %v1942
        %2104 = vmatprep.subr.bf16.mxu0 0
        %2105 = vmatpush2.bf16.msra.mxu0 %v1941
        %2106 = vmatprep.subr.bf16.mxu0 0
        %2107 = vmatpush2.bf16.msra.mxu0 %v1940
        %2108 = vmatprep.mubr.bf16.mxu0 %v1573
        %2109 = vmatmul.mubr.bf16.gmra.mxu0 %v1572
        %v2110 = vpop.f32.mrf.mxu0
        %v2111 = vadd.f32 0.0, %v2110
        %v2112 = vpop.f32.mrf.mxu0
        %v2113 = vpop.f32.mrf.mxu0
        %v2114 = vadd.f32 0.0, %v2113
        %v2115 = vpop.f32.mrf.mxu0
        %2116 = vmatprep.mubr.bf16.mxu0 %v1582
        %2117 = vmatmul.mubr.bf16.gmra.mxu0 %v1581
        %v2118 = vpop.f32.mrf.mxu0
        %v2119 = vadd.f32 0.0, %v2118
        %v2120 = vpop.f32.mrf.mxu0
        %v2121 = vpop.f32.mrf.mxu0
        %v2122 = vadd.f32 0.0, %v2121
        %v2123 = vpop.f32.mrf.mxu0
        %2124 = vmatprep.mubr.bf16.mxu0 %v1591
        %2125 = vmatmul.mubr.bf16.gmra.mxu0 %v1590
        %v2126 = vpop.f32.mrf.mxu0
        %v2127 = vadd.f32 0.0, %v2126
        %v2128 = vpop.f32.mrf.mxu0
        %v2129 = vpop.f32.mrf.mxu0
        %v2130 = vadd.f32 0.0, %v2129
        %v2131 = vpop.f32.mrf.mxu0
        %2132 = vmatprep.mubr.bf16.mxu0 %v1600
        %2133 = vmatmul.mubr.bf16.gmra.mxu0 %v1599
        %v2134 = vpop.f32.mrf.mxu0
        %v2135 = vadd.f32 0.0, %v2134
        %v2136 = vpop.f32.mrf.mxu0
        %v2137 = vpop.f32.mrf.mxu0
        %v2138 = vadd.f32 0.0, %v2137
        %v2139 = vpop.f32.mrf.mxu0
        %2140 = vdwg.mxu0
        %2141 = vmatprep.subr.bf16.mxu0 0
        %2142 = vmatpush1.bf16.msra.mxu0 %v1955
        %2143 = vmatprep.subr.bf16.mxu0 0
        %2144 = vmatpush1.bf16.msra.mxu0 %v1954
        %2145 = vmatprep.subr.bf16.mxu0 0
        %2146 = vmatpush1.bf16.msra.mxu0 %v1953
        %2147 = vmatprep.subr.bf16.mxu0 0
        %2148 = vmatpush1.bf16.msra.mxu0 %v1952
        %2149 = vmatprep.subr.bf16.mxu0 0
        %2150 = vmatpush1.bf16.msra.mxu0 %v1951
        %2151 = vmatprep.subr.bf16.mxu0 0
        %2152 = vmatpush1.bf16.msra.mxu0 %v1950
        %2153 = vmatprep.subr.bf16.mxu0 0
        %2154 = vmatpush1.bf16.msra.mxu0 %v1949
        %2155 = vmatprep.subr.bf16.mxu0 0
        %2156 = vmatpush1.bf16.msra.mxu0 %v1948
        %2157 = vmatprep.subr.bf16.mxu0 0
        %2158 = vmatpush2.bf16.msra.mxu0 %v1963
        %2159 = vmatprep.subr.bf16.mxu0 0
        %2160 = vmatpush2.bf16.msra.mxu0 %v1962
        %2161 = vmatprep.subr.bf16.mxu0 0
        %2162 = vmatpush2.bf16.msra.mxu0 %v1961
        %2163 = vmatprep.subr.bf16.mxu0 0
        %2164 = vmatpush2.bf16.msra.mxu0 %v1960
        %2165 = vmatprep.subr.bf16.mxu0 0
        %2166 = vmatpush2.bf16.msra.mxu0 %v1959
        %2167 = vmatprep.subr.bf16.mxu0 0
        %2168 = vmatpush2.bf16.msra.mxu0 %v1958
        %2169 = vmatprep.subr.bf16.mxu0 0
        %2170 = vmatpush2.bf16.msra.mxu0 %v1957
        %2171 = vmatprep.subr.bf16.mxu0 0
        %2172 = vmatpush2.bf16.msra.mxu0 %v1956
        %2173 = vmatprep.mubr.bf16.mxu0 %v1575
        %2174 = vmatmul.mubr.bf16.gmra.mxu0 %v1574
        %v2175 = vpop.f32.mrf.mxu0
        %v2176 = vadd.f32 %v2111, %v2175
        %v2177 = vpop.f32.mrf.mxu0
        %v2178 = vpop.f32.mrf.mxu0
        %v2179 = vadd.f32 %v2114, %v2178
        %v2180 = vpop.f32.mrf.mxu0
        %2181 = vmatprep.mubr.bf16.mxu0 %v1584
        %2182 = vmatmul.mubr.bf16.gmra.mxu0 %v1583
        %v2183 = vpop.f32.mrf.mxu0
        %v2184 = vadd.f32 %v2119, %v2183
        %v2185 = vpop.f32.mrf.mxu0
        %v2186 = vpop.f32.mrf.mxu0
        %v2187 = vadd.f32 %v2122, %v2186
        %v2188 = vpop.f32.mrf.mxu0
        %2189 = vmatprep.mubr.bf16.mxu0 %v1593
        %2190 = vmatmul.mubr.bf16.gmra.mxu0 %v1592
        %v2191 = vpop.f32.mrf.mxu0
        %v2192 = vadd.f32 %v2127, %v2191
        %v2193 = vpop.f32.mrf.mxu0
        %v2194 = vpop.f32.mrf.mxu0
        %v2195 = vadd.f32 %v2130, %v2194
        %v2196 = vpop.f32.mrf.mxu0
        %2197 = vmatprep.mubr.bf16.mxu0 %v1602
        %2198 = vmatmul.mubr.bf16.gmra.mxu0 %v1601
        %v2199 = vpop.f32.mrf.mxu0
        %v2200 = vadd.f32 %v2135, %v2199
        %v2201 = vpop.f32.mrf.mxu0
        %v2202 = vpop.f32.mrf.mxu0
        %v2203 = vadd.f32 %v2138, %v2202
        %v2204 = vpop.f32.mrf.mxu0
        %2205 = vdwg.mxu0
        %2206 = vmatprep.subr.bf16.mxu0 0
        %2207 = vmatpush1.bf16.msra.mxu0 %v1971
        %2208 = vmatprep.subr.bf16.mxu0 0
        %2209 = vmatpush1.bf16.msra.mxu0 %v1970
        %2210 = vmatprep.subr.bf16.mxu0 0
        %2211 = vmatpush1.bf16.msra.mxu0 %v1969
        %2212 = vmatprep.subr.bf16.mxu0 0
        %2213 = vmatpush1.bf16.msra.mxu0 %v1968
        %2214 = vmatprep.subr.bf16.mxu0 0
        %2215 = vmatpush1.bf16.msra.mxu0 %v1967
        %2216 = vmatprep.subr.bf16.mxu0 0
        %2217 = vmatpush1.bf16.msra.mxu0 %v1966
        %2218 = vmatprep.subr.bf16.mxu0 0
        %2219 = vmatpush1.bf16.msra.mxu0 %v1965
        %2220 = vmatprep.subr.bf16.mxu0 0
        %2221 = vmatpush1.bf16.msra.mxu0 %v1964
        %2222 = vmatprep.subr.bf16.mxu0 0
        %2223 = vmatpush2.bf16.msra.mxu0 %v1979
        %2224 = vmatprep.subr.bf16.mxu0 0
        %2225 = vmatpush2.bf16.msra.mxu0 %v1978
        %2226 = vmatprep.subr.bf16.mxu0 0
        %2227 = vmatpush2.bf16.msra.mxu0 %v1977
        %2228 = vmatprep.subr.bf16.mxu0 0
        %2229 = vmatpush2.bf16.msra.mxu0 %v1976
        %2230 = vmatprep.subr.bf16.mxu0 0
        %2231 = vmatpush2.bf16.msra.mxu0 %v1975
        %2232 = vmatprep.subr.bf16.mxu0 0
        %2233 = vmatpush2.bf16.msra.mxu0 %v1974
        %2234 = vmatprep.subr.bf16.mxu0 0
        %2235 = vmatpush2.bf16.msra.mxu0 %v1973
        %2236 = vmatprep.subr.bf16.mxu0 0
        %2237 = vmatpush2.bf16.msra.mxu0 %v1972
        %2238 = vmatprep.mubr.bf16.mxu0 %v1577
        %2239 = vmatmul.mubr.bf16.gmra.mxu0 %v1576
        %v2240 = vpop.f32.mrf.mxu0
        %v2241 = vadd.f32 %v2176, %v2240
        %v2242 = vpop.f32.mrf.mxu0
        %v2243 = vpop.f32.mrf.mxu0
        %v2244 = vadd.f32 %v2179, %v2243
        %v2245 = vpop.f32.mrf.mxu0
        %2246 = vmatprep.mubr.bf16.mxu0 %v1586
        %2247 = vmatmul.mubr.bf16.gmra.mxu0 %v1585
        %v2248 = vpop.f32.mrf.mxu0
        %v2249 = vadd.f32 %v2184, %v2248
        %v2250 = vpop.f32.mrf.mxu0
        %v2251 = vpop.f32.mrf.mxu0
        %v2252 = vadd.f32 %v2187, %v2251
        %v2253 = vpop.f32.mrf.mxu0
        %2254 = vmatprep.mubr.bf16.mxu0 %v1595
        %2255 = vmatmul.mubr.bf16.gmra.mxu0 %v1594
        %v2256 = vpop.f32.mrf.mxu0
        %v2257 = vadd.f32 %v2192, %v2256
        %v2258 = vpop.f32.mrf.mxu0
        %v2259 = vpop.f32.mrf.mxu0
        %v2260 = vadd.f32 %v2195, %v2259
        %v2261 = vpop.f32.mrf.mxu0
        %2262 = vmatprep.mubr.bf16.mxu0 %v1604
        %2263 = vmatmul.mubr.bf16.gmra.mxu0 %v1603
        %v2264 = vpop.f32.mrf.mxu0
        %v2265 = vadd.f32 %v2200, %v2264
        %v2266 = vpop.f32.mrf.mxu0
        %v2267 = vpop.f32.mrf.mxu0
        %v2268 = vadd.f32 %v2203, %v2267
        %v2269 = vpop.f32.mrf.mxu0
        %2270 = vdwg.mxu0
        %2271 = vmatprep.subr.bf16.mxu0 0
        %2272 = vmatpush1.bf16.msra.mxu0 %v1987
        %2273 = vmatprep.subr.bf16.mxu0 0
        %2274 = vmatpush1.bf16.msra.mxu0 %v1986
        %2275 = vmatprep.subr.bf16.mxu0 0
        %2276 = vmatpush1.bf16.msra.mxu0 %v1985
        %2277 = vmatprep.subr.bf16.mxu0 0
        %2278 = vmatpush1.bf16.msra.mxu0 %v1984
        %2279 = vmatprep.subr.bf16.mxu0 0
        %2280 = vmatpush1.bf16.msra.mxu0 %v1983
        %2281 = vmatprep.subr.bf16.mxu0 0
        %2282 = vmatpush1.bf16.msra.mxu0 %v1982
        %2283 = vmatprep.subr.bf16.mxu0 0
        %2284 = vmatpush1.bf16.msra.mxu0 %v1981
        %2285 = vmatprep.subr.bf16.mxu0 0
        %2286 = vmatpush1.bf16.msra.mxu0 %v1980
        %2287 = vmatprep.subr.bf16.mxu0 0
        %2288 = vmatpush2.bf16.msra.mxu0 %v1995
        %2289 = vmatprep.subr.bf16.mxu0 0
        %2290 = vmatpush2.bf16.msra.mxu0 %v1994
        %2291 = vmatprep.subr.bf16.mxu0 0
        %2292 = vmatpush2.bf16.msra.mxu0 %v1993
        %2293 = vmatprep.subr.bf16.mxu0 0
        %2294 = vmatpush2.bf16.msra.mxu0 %v1992
        %2295 = vmatprep.subr.bf16.mxu0 0
        %2296 = vmatpush2.bf16.msra.mxu0 %v1991
        %2297 = vmatprep.subr.bf16.mxu0 0
        %2298 = vmatpush2.bf16.msra.mxu0 %v1990
        %2299 = vmatprep.subr.bf16.mxu0 0
        %2300 = vmatpush2.bf16.msra.mxu0 %v1989
        %2301 = vmatprep.subr.bf16.mxu0 0
        %2302 = vmatpush2.bf16.msra.mxu0 %v1988
        %2303 = vmatprep.mubr.bf16.mxu0 %v1579
        %2304 = vmatmul.mubr.bf16.gmra.mxu0 %v1578
        %v2305 = vpop.f32.mrf.mxu0
        %v2306 = vadd.f32 %v2241, %v2305
        %v2307 = vpop.f32.mrf.mxu0
        %v2308 = vpop.f32.mrf.mxu0
        %v2309 = vadd.f32 %v2244, %v2308
        %v2310 = vpop.f32.mrf.mxu0
        %2311 = vmatprep.mubr.bf16.mxu0 %v1588
        %2312 = vmatmul.mubr.bf16.gmra.mxu0 %v1587
        %v2313 = vpop.f32.mrf.mxu0
        %v2314 = vadd.f32 %v2249, %v2313
        %v2315 = vpop.f32.mrf.mxu0
        %v2316 = vpop.f32.mrf.mxu0
        %v2317 = vadd.f32 %v2252, %v2316
        %v2318 = vpop.f32.mrf.mxu0
        %2319 = vmatprep.mubr.bf16.mxu0 %v1597
        %2320 = vmatmul.mubr.bf16.gmra.mxu0 %v1596
        %v2321 = vpop.f32.mrf.mxu0
        %v2322 = vadd.f32 %v2257, %v2321
        %v2323 = vpop.f32.mrf.mxu0
        %v2324 = vpop.f32.mrf.mxu0
        %v2325 = vadd.f32 %v2260, %v2324
        %v2326 = vpop.f32.mrf.mxu0
        %2327 = vmatprep.mubr.bf16.mxu0 %v1606
        %2328 = vmatmul.mubr.bf16.gmra.mxu0 %v1605
        %v2329 = vpop.f32.mrf.mxu0
        %v2330 = vadd.f32 %v2265, %v2329
        %v2331 = vpop.f32.mrf.mxu0
        %v2332 = vpop.f32.mrf.mxu0
        %v2333 = vadd.f32 %v2268, %v2332
        %v2334 = vpop.f32.mrf.mxu0
        %2335 = vdwg.mxu0
        %2336 = vmatprep.subr.bf16.mxu0 0
        %2337 = vmatpush1.bf16.msra.mxu0 %v2003
        %2338 = vmatprep.subr.bf16.mxu0 0
        %2339 = vmatpush1.bf16.msra.mxu0 %v2002
        %2340 = vmatprep.subr.bf16.mxu0 0
        %2341 = vmatpush1.bf16.msra.mxu0 %v2001
        %2342 = vmatprep.subr.bf16.mxu0 0
        %2343 = vmatpush1.bf16.msra.mxu0 %v2000
        %2344 = vmatprep.subr.bf16.mxu0 0
        %2345 = vmatpush1.bf16.msra.mxu0 %v1999
        %2346 = vmatprep.subr.bf16.mxu0 0
        %2347 = vmatpush1.bf16.msra.mxu0 %v1998
        %2348 = vmatprep.subr.bf16.mxu0 0
        %2349 = vmatpush1.bf16.msra.mxu0 %v1997
        %2350 = vmatprep.subr.bf16.mxu0 0
        %2351 = vmatpush1.bf16.msra.mxu0 %v1996
        %2352 = vmatprep.subr.bf16.mxu0 0
        %2353 = vmatpush2.bf16.msra.mxu0 0
        %2354 = vmatprep.subr.bf16.mxu0 0
        %2355 = vmatpush2.bf16.msra.mxu0 0
        %2356 = vmatprep.subr.bf16.mxu0 0
        %2357 = vmatpush2.bf16.msra.mxu0 0
        %2358 = vmatprep.subr.bf16.mxu0 0
        %2359 = vmatpush2.bf16.msra.mxu0 0
        %2360 = vmatprep.subr.bf16.mxu0 0
        %2361 = vmatpush2.bf16.msra.mxu0 0
        %2362 = vmatprep.subr.bf16.mxu0 0
        %2363 = vmatpush2.bf16.msra.mxu0 0
        %2364 = vmatprep.subr.bf16.mxu0 0
        %2365 = vmatpush2.bf16.msra.mxu0 0
        %2366 = vmatprep.subr.bf16.mxu0 0
        %2367 = vmatpush2.bf16.msra.mxu0 0
        %2368 = vmatprep.mubr.bf16.mxu0 0
        %2369 = vmatmul.mubr.bf16.gmra.mxu0 %v1580
        %v2370 = vpop.f32.mrf.mxu0
        %v2371 = vadd.f32 %v2306, %v2370
        %v2372 = vpop.f32.mrf.mxu0
        %v2373 = vpop.f32.mrf.mxu0
        %v2374 = vadd.f32 %v2309, %v2373
        %v2375 = vpop.f32.mrf.mxu0
        %2376 = vmatprep.mubr.bf16.mxu0 0
        %2377 = vmatmul.mubr.bf16.gmra.mxu0 %v1589
        %v2378 = vpop.f32.mrf.mxu0
        %v2379 = vadd.f32 %v2314, %v2378
        %v2380 = vpop.f32.mrf.mxu0
        %v2381 = vpop.f32.mrf.mxu0
        %v2382 = vadd.f32 %v2317, %v2381
        %v2383 = vpop.f32.mrf.mxu0
        %2384 = vmatprep.mubr.bf16.mxu0 0
        %2385 = vmatmul.mubr.bf16.gmra.mxu0 %v1598
        %v2386 = vpop.f32.mrf.mxu0
        %v2387 = vadd.f32 %v2322, %v2386
        %v2388 = vpop.f32.mrf.mxu0
        %v2389 = vpop.f32.mrf.mxu0
        %v2390 = vadd.f32 %v2325, %v2389
        %v2391 = vpop.f32.mrf.mxu0
        %2392 = vmatprep.mubr.bf16.mxu0 0
        %2393 = vmatmul.mubr.bf16.gmra.mxu0 %v1607
        %v2394 = vpop.f32.mrf.mxu0
        %v2395 = vadd.f32 %v2330, %v2394
        %v2396 = vpop.f32.mrf.mxu0
        %v2397 = vpop.f32.mrf.mxu0
        %v2398 = vadd.f32 %v2333, %v2397
        %v2399 = vpop.f32.mrf.mxu0
        %2400 = vdwg.mxu0
        %v2401 = vld [vmem:[%s333] sm:$0x1]
        %v2402 = vlaneseq
        %v2403 = vshrl.u32 %v2402, 7
        %v2404 = vsub.s32 0, %v2403
        %v2405 = vrot.slane %v2401, %v2404
        %v2406 = vmul.f32 %v2371, %v2405
        %v2407 = vmul.f32 %v2374, %v2405
        %v2408 = vmul.f32 %v2379, %v2405
        %v2409 = vmul.f32 %v2382, %v2405
        %v2410 = vmul.f32 %v2387, %v2405
        %v2411 = vmul.f32 %v2390, %v2405
        %v2412 = vmul.f32 %v2395, %v2405
        %v2413 = vmul.f32 %v2398, %v2405
        %v2414 = vld [vmem:[%s342] sm:$0x1]
        %v2415 = vlaneseq
        %v2416 = vshrl.u32 %v2415, 7
        %v2417 = vsub.s32 0, %v2416
        %v2418 = vrot.slane %v2414, %v2417
        %v2419 = vadd.f32 %v2406, %v2418
        %v2420 = vadd.f32 %v2407, %v2418
        %v2421 = vadd.f32 %v2408, %v2418
        %v2422 = vadd.f32 %v2409, %v2418
        %v2423 = vadd.f32 %v2410, %v2418
        %v2424 = vadd.f32 %v2411, %v2418
        %v2425 = vadd.f32 %v2412, %v2418
        %v2426 = vadd.f32 %v2413, %v2418
        %v2427 = vmul.f32 %v2419, 0.5
        %v2428 = vmul.f32 %v2420, 0.5
        %v2429 = vmul.f32 %v2421, 0.5
        %v2430 = vmul.f32 %v2422, 0.5
        %v2431 = vmul.f32 %v2423, 0.5
        %v2432 = vmul.f32 %v2424, 0.5
        %v2433 = vmul.f32 %v2425, 0.5
        %v2434 = vmul.f32 %v2426, 0.5
        %v2435 = vtanh.pop %v2427
        %v2436 = vtanh.pop %v2428
        %v2437 = vtanh.pop %v2429
        %v2438 = vtanh.pop %v2430
        %v2439 = vtanh.pop %v2431
        %v2440 = vtanh.pop %v2432
        %v2441 = vtanh.pop %v2433
        %v2442 = vtanh.pop %v2434
        %v2443 = vmul.f32 %v2435, 0.5
        %v2444 = vmul.f32 %v2436, 0.5
        %v2445 = vmul.f32 %v2437, 0.5
        %v2446 = vmul.f32 %v2438, 0.5
        %v2447 = vmul.f32 %v2439, 0.5
        %v2448 = vmul.f32 %v2440, 0.5
        %v2449 = vmul.f32 %v2441, 0.5
        %v2450 = vmul.f32 %v2442, 0.5
        %v2451 = vadd.f32 %v2443, 0.5
        %v2452 = vadd.f32 %v2444, 0.5
        %v2453 = vadd.f32 %v2445, 0.5
        %v2454 = vadd.f32 %v2446, 0.5
        %v2455 = vadd.f32 %v2447, 0.5
        %v2456 = vadd.f32 %v2448, 0.5
        %v2457 = vadd.f32 %v2449, 0.5
        %v2458 = vadd.f32 %v2450, 0.5
        %v2459 = vmul.f32 %v2419, %v2451
        %v2460 = vmul.f32 %v2420, %v2452
        %v2461 = vmul.f32 %v2421, %v2453
        %v2462 = vmul.f32 %v2422, %v2454
        %v2463 = vmul.f32 %v2423, %v2455
        %v2464 = vmul.f32 %v2424, %v2456
        %v2465 = vmul.f32 %v2425, %v2457
        %v2466 = vmul.f32 %v2426, %v2458
        %v2467 = vpack.c.bf16 %v2459, %v2459
        %v2468 = vpack.c.bf16 %v2460, %v2460
        %v2469 = vpack.c.bf16 %v2461, %v2461
        %v2470 = vpack.c.bf16 %v2462, %v2462
        %v2471 = vpack.c.bf16 %v2463, %v2463
        %v2472 = vpack.c.bf16 %v2464, %v2464
        %v2473 = vpack.c.bf16 %v2465, %v2465
        %v2474 = vpack.c.bf16 %v2466, %v2466
        %v2483 = vunpack.c.l.b16 %v2467
        %v2484 = vunpack.c.l.b16 %v2468
        %v2485 = vunpack.c.l.b16 %v2469
        %v2486 = vunpack.c.l.b16 %v2470
        %v2487 = vunpack.c.l.b16 %v2471
        %v2488 = vunpack.c.l.b16 %v2472
        %v2489 = vunpack.c.l.b16 %v2473
        %v2490 = vunpack.c.l.b16 %v2474
        %v2491 = vpack.c.b16 %v2483, %v2483
        %v2492 = vpack.c.b16 %v2484, %v2484
        %v2493 = vpack.c.b16 %v2485, %v2485
        %v2494 = vpack.c.b16 %v2486, %v2486
        %v2495 = vpack.c.b16 %v2487, %v2487
        %v2496 = vpack.c.b16 %v2488, %v2488
        %v2497 = vpack.c.b16 %v2489, %v2489
        %v2498 = vpack.c.b16 %v2490, %v2490
        %v2500 = vshrl.u32 %v2491, 16
        %v2502 = vrot.slane %v2500, 7
        %v2503 = vshll.u32 %v2491, 16
        %v2505 = vor.u32 %v2502, %v2503
        %v2506 = vrot.slane %v2502, 4
        %v2508 = vshrl.u32 %v2492, 16
        %v2510 = vrot.slane %v2508, 7
        %v2511 = vshll.u32 %v2492, 16
        %v2513 = vor.u32 %v2510, %v2511
        %v2514 = vrot.slane %v2510, 4
        %v2516 = vshrl.u32 %v2493, 16
        %v2518 = vrot.slane %v2516, 7
        %v2519 = vshll.u32 %v2493, 16
        %v2521 = vor.u32 %v2518, %v2519
        %v2522 = vrot.slane %v2518, 4
        %v2524 = vshrl.u32 %v2494, 16
        %v2526 = vrot.slane %v2524, 7
        %v2527 = vshll.u32 %v2494, 16
        %v2529 = vor.u32 %v2526, %v2527
        %v2530 = vrot.slane %v2526, 4
        %v2532 = vshrl.u32 %v2495, 16
        %v2534 = vrot.slane %v2532, 7
        %v2535 = vshll.u32 %v2495, 16
        %v2537 = vor.u32 %v2534, %v2535
        %v2538 = vrot.slane %v2534, 4
        %v2540 = vshrl.u32 %v2496, 16
        %v2542 = vrot.slane %v2540, 7
        %v2543 = vshll.u32 %v2496, 16
        %v2545 = vor.u32 %v2542, %v2543
        %v2546 = vrot.slane %v2542, 4
        %v2548 = vshrl.u32 %v2497, 16
        %v2550 = vrot.slane %v2548, 7
        %v2551 = vshll.u32 %v2497, 16
        %v2553 = vor.u32 %v2550, %v2551
        %v2554 = vrot.slane %v2550, 4
        %v2556 = vshrl.u32 %v2498, 16
        %v2558 = vrot.slane %v2556, 7
        %v2559 = vshll.u32 %v2498, 16
        %v2561 = vor.u32 %v2558, %v2559
        %v2562 = vrot.slane %v2558, 4
        %vm2579 = vcmask 1043456
        %vm2580 = vmand %vm2579, %vm496
        %v2581 = vld [vmem:[%s494] sm:$0xf]
        %v2582 = vsel %vm2580, %v2505, %v2581
        %2583 = vst [vmem:[%s494] sm:$0xf] %v2582
        %vm2584 = vcmask 1040384
        %vm2585 = vmand %vm2584, %vm502
        %v2586 = vld [vmem:[%s494 + $0x4] sm:$0x1]
        %v2587 = vsel %vm2585, %v2506, %v2586
        %2588 = vst [vmem:[%s494 + $0x4] sm:$0x1] %v2587
        %v2589 = vld [vmem:[%s494 + $0x8] sm:$0xf]
        %v2590 = vsel %vm2580, %v2513, %v2589
        %2591 = vst [vmem:[%s494 + $0x8] sm:$0xf] %v2590
        %v2592 = vld [vmem:[%s494 + $0xc] sm:$0x1]
        %v2593 = vsel %vm2585, %v2514, %v2592
        %2594 = vst [vmem:[%s494 + $0xc] sm:$0x1] %v2593
        %v2595 = vld [vmem:[%s494 + $0x10] sm:$0xf]
        %v2596 = vsel %vm2580, %v2521, %v2595
        %2597 = vst [vmem:[%s494 + $0x10] sm:$0xf] %v2596
        %v2598 = vld [vmem:[%s494 + $0x14] sm:$0x1]
        %v2599 = vsel %vm2585, %v2522, %v2598
        %2600 = vst [vmem:[%s494 + $0x14] sm:$0x1] %v2599
        %v2601 = vld [vmem:[%s494 + $0x18] sm:$0xf]
        %v2602 = vsel %vm2580, %v2529, %v2601
        %2603 = vst [vmem:[%s494 + $0x18] sm:$0xf] %v2602
        %v2604 = vld [vmem:[%s494 + $0x1c] sm:$0x1]
        %v2605 = vsel %vm2585, %v2530, %v2604
        %2606 = vst [vmem:[%s494 + $0x1c] sm:$0x1] %v2605
        %v2607 = vld [vmem:[%s494 + $0x20] sm:$0xf]
        %v2608 = vsel %vm2580, %v2537, %v2607
        %2609 = vst [vmem:[%s494 + $0x20] sm:$0xf] %v2608
        %v2610 = vld [vmem:[%s494 + $0x24] sm:$0x1]
        %v2611 = vsel %vm2585, %v2538, %v2610
        %2612 = vst [vmem:[%s494 + $0x24] sm:$0x1] %v2611
        %v2613 = vld [vmem:[%s494 + $0x28] sm:$0xf]
        %v2614 = vsel %vm2580, %v2545, %v2613
        %2615 = vst [vmem:[%s494 + $0x28] sm:$0xf] %v2614
        %v2616 = vld [vmem:[%s494 + $0x2c] sm:$0x1]
        %v2617 = vsel %vm2585, %v2546, %v2616
        %2618 = vst [vmem:[%s494 + $0x2c] sm:$0x1] %v2617
        %v2619 = vld [vmem:[%s494 + $0x30] sm:$0xf]
        %v2620 = vsel %vm2580, %v2553, %v2619
        %2621 = vst [vmem:[%s494 + $0x30] sm:$0xf] %v2620
        %v2622 = vld [vmem:[%s494 + $0x34] sm:$0x1]
        %v2623 = vsel %vm2585, %v2554, %v2622
        %2624 = vst [vmem:[%s494 + $0x34] sm:$0x1] %v2623
        %v2625 = vld [vmem:[%s494 + $0x38] sm:$0xf]
        %v2626 = vsel %vm2580, %v2561, %v2625
        %2627 = vst [vmem:[%s494 + $0x38] sm:$0xf] %v2626
        %v2628 = vld [vmem:[%s494 + $0x3c] sm:$0x1]
        %v2629 = vsel %vm2585, %v2562, %v2628
        %2630 = vst [vmem:[%s494 + $0x3c] sm:$0x1] %v2629
        %v2631 = vld [vmem:[#allocation2] sm:$0xf]
        %v2632 = vld [vmem:[#allocation2 + $0x8] sm:$0xf]
        %v2633 = vld [vmem:[#allocation2 + $0x10] sm:$0xf]
        %v2634 = vld [vmem:[#allocation2 + $0x18] sm:$0xf]
        %v2635 = vld [vmem:[#allocation2 + $0x20] sm:$0xf]
        %v2636 = vld [vmem:[#allocation2 + $0x28] sm:$0xf]
        %v2637 = vld [vmem:[#allocation2 + $0x30] sm:$0xf]
        %v2638 = vld [vmem:[#allocation2 + $0x38] sm:$0xf]
        %2639 = vst [vmem:[#allocation3] sm:$0xf] %v2631
        %2640 = vst [vmem:[#allocation3 + $0x24] sm:$0xf] %v2632
        %2641 = vst [vmem:[#allocation3 + $0x48] sm:$0xf] %v2633
        %2642 = vst [vmem:[#allocation3 + $0x6c] sm:$0xf] %v2634
        %2643 = vst [vmem:[#allocation3 + $0x90] sm:$0xf] %v2635
        %2644 = vst [vmem:[#allocation3 + $0xb4] sm:$0xf] %v2636
        %2645 = vst [vmem:[#allocation3 + $0xd8] sm:$0xf] %v2637
        %2646 = vst [vmem:[#allocation3 + $0xfc] sm:$0xf] %v2638
        %v2647 = vld [vmem:[#allocation2] sm:$0xf]
        %v2648 = vld [vmem:[#allocation2 + $0x4] sm:$0x1]
        %v2649 = vld [vmem:[#allocation2 + $0x8] sm:$0xf]
        %v2650 = vld [vmem:[#allocation2 + $0xc] sm:$0x1]
        %v2651 = vld [vmem:[#allocation2 + $0x10] sm:$0xf]
        %v2652 = vld [vmem:[#allocation2 + $0x14] sm:$0x1]
        %v2653 = vld [vmem:[#allocation2 + $0x18] sm:$0xf]
        %v2654 = vld [vmem:[#allocation2 + $0x1c] sm:$0x1]
        %v2655 = vld [vmem:[#allocation2 + $0x20] sm:$0xf]
        %v2656 = vld [vmem:[#allocation2 + $0x24] sm:$0x1]
        %v2657 = vld [vmem:[#allocation2 + $0x28] sm:$0xf]
        %v2658 = vld [vmem:[#allocation2 + $0x2c] sm:$0x1]
        %v2659 = vld [vmem:[#allocation2 + $0x30] sm:$0xf]
        %v2660 = vld [vmem:[#allocation2 + $0x34] sm:$0x1]
        %v2661 = vld [vmem:[#allocation2 + $0x38] sm:$0xf]
        %v2662 = vld [vmem:[#allocation2 + $0x3c] sm:$0x1]
        %v2664 = vshrl.u32 %v2647, 16
        %v2666 = vrot.slane %v2664, 4
        %v2667 = vshll.u32 %v2647, 16
        %v2669 = vrot.slane %v2667, 5
        %v2670 = vor.u32 %v2666, %v2669
        %v2671 = vrot.slane %v2670, 4
        %v2673 = vshll.u32 %v2648, 16
        %v2675 = vrot.slane %v2673, 5
        %v2676 = vsel %vm583, %v2671, %v2675
        %v2678 = vshrl.u32 %v2649, 16
        %v2680 = vrot.slane %v2678, 4
        %v2681 = vshll.u32 %v2649, 16
        %v2683 = vrot.slane %v2681, 5
        %v2684 = vor.u32 %v2680, %v2683
        %v2685 = vrot.slane %v2684, 4
        %v2687 = vshll.u32 %v2650, 16
        %v2689 = vrot.slane %v2687, 5
        %v2690 = vsel %vm583, %v2685, %v2689
        %v2692 = vshrl.u32 %v2651, 16
        %v2694 = vrot.slane %v2692, 4
        %v2695 = vshll.u32 %v2651, 16
        %v2697 = vrot.slane %v2695, 5
        %v2698 = vor.u32 %v2694, %v2697
        %v2699 = vrot.slane %v2698, 4
        %v2701 = vshll.u32 %v2652, 16
        %v2703 = vrot.slane %v2701, 5
        %v2704 = vsel %vm583, %v2699, %v2703
        %v2706 = vshrl.u32 %v2653, 16
        %v2708 = vrot.slane %v2706, 4
        %v2709 = vshll.u32 %v2653, 16
        %v2711 = vrot.slane %v2709, 5
        %v2712 = vor.u32 %v2708, %v2711
        %v2713 = vrot.slane %v2712, 4
        %v2715 = vshll.u32 %v2654, 16
        %v2717 = vrot.slane %v2715, 5
        %v2718 = vsel %vm583, %v2713, %v2717
        %v2720 = vshrl.u32 %v2655, 16
        %v2722 = vrot.slane %v2720, 4
        %v2723 = vshll.u32 %v2655, 16
        %v2725 = vrot.slane %v2723, 5
        %v2726 = vor.u32 %v2722, %v2725
        %v2727 = vrot.slane %v2726, 4
        %v2729 = vshll.u32 %v2656, 16
        %v2731 = vrot.slane %v2729, 5
        %v2732 = vsel %vm583, %v2727, %v2731
        %v2734 = vshrl.u32 %v2657, 16
        %v2736 = vrot.slane %v2734, 4
        %v2737 = vshll.u32 %v2657, 16
        %v2739 = vrot.slane %v2737, 5
        %v2740 = vor.u32 %v2736, %v2739
        %v2741 = vrot.slane %v2740, 4
        %v2743 = vshll.u32 %v2658, 16
        %v2745 = vrot.slane %v2743, 5
        %v2746 = vsel %vm583, %v2741, %v2745
        %v2748 = vshrl.u32 %v2659, 16
        %v2750 = vrot.slane %v2748, 4
        %v2751 = vshll.u32 %v2659, 16
        %v2753 = vrot.slane %v2751, 5
        %v2754 = vor.u32 %v2750, %v2753
        %v2755 = vrot.slane %v2754, 4
        %v2757 = vshll.u32 %v2660, 16
        %v2759 = vrot.slane %v2757, 5
        %v2760 = vsel %vm583, %v2755, %v2759
        %v2762 = vshrl.u32 %v2661, 16
        %v2764 = vrot.slane %v2762, 4
        %v2765 = vshll.u32 %v2661, 16
        %v2767 = vrot.slane %v2765, 5
        %v2768 = vor.u32 %v2764, %v2767
        %v2769 = vrot.slane %v2768, 4
        %v2771 = vshll.u32 %v2662, 16
        %v2773 = vrot.slane %v2771, 5
        %v2774 = vsel %vm583, %v2769, %v2773
        %2783 = vst [vmem:[#allocation3 + $0x4] sm:$0xf] %v2676
        %2784 = vst [vmem:[#allocation3 + $0x28] sm:$0xf] %v2690
        %2785 = vst [vmem:[#allocation3 + $0x4c] sm:$0xf] %v2704
        %2786 = vst [vmem:[#allocation3 + $0x70] sm:$0xf] %v2718
        %2787 = vst [vmem:[#allocation3 + $0x94] sm:$0xf] %v2732
        %2788 = vst [vmem:[#allocation3 + $0xb8] sm:$0xf] %v2746
        %2789 = vst [vmem:[#allocation3 + $0xdc] sm:$0xf] %v2760
        %2790 = vst [vmem:[#allocation3 + $0x100] sm:$0xf] %v2774
        %v2791 = vld [vmem:[#allocation2] sm:$0xe]
        %v2792 = vld [vmem:[#allocation2 + $0x4] sm:$0x1]
        %v2793 = vld [vmem:[#allocation2 + $0x8] sm:$0xe]
        %v2794 = vld [vmem:[#allocation2 + $0xc] sm:$0x1]
        %v2795 = vld [vmem:[#allocation2 + $0x10] sm:$0xe]
        %v2796 = vld [vmem:[#allocation2 + $0x14] sm:$0x1]
        %v2797 = vld [vmem:[#allocation2 + $0x18] sm:$0xe]
        %v2798 = vld [vmem:[#allocation2 + $0x1c] sm:$0x1]
        %v2799 = vld [vmem:[#allocation2 + $0x20] sm:$0xe]
        %v2800 = vld [vmem:[#allocation2 + $0x24] sm:$0x1]
        %v2801 = vld [vmem:[#allocation2 + $0x28] sm:$0xe]
        %v2802 = vld [vmem:[#allocation2 + $0x2c] sm:$0x1]
        %v2803 = vld [vmem:[#allocation2 + $0x30] sm:$0xe]
        %v2804 = vld [vmem:[#allocation2 + $0x34] sm:$0x1]
        %v2805 = vld [vmem:[#allocation2 + $0x38] sm:$0xe]
        %v2806 = vld [vmem:[#allocation2 + $0x3c] sm:$0x1]
        %v2823 = vrot.slane %v2791, 5
        %v2824 = vrot.slane %v2823, 4
        %v2825 = vrot.slane %v2792, 5
        %v2826 = vsel %vm746, %v2824, %v2825
        %v2827 = vrot.slane %v2793, 5
        %v2828 = vrot.slane %v2827, 4
        %v2829 = vrot.slane %v2794, 5
        %v2830 = vsel %vm746, %v2828, %v2829
        %v2831 = vrot.slane %v2795, 5
        %v2832 = vrot.slane %v2831, 4
        %v2833 = vrot.slane %v2796, 5
        %v2834 = vsel %vm746, %v2832, %v2833
        %v2835 = vrot.slane %v2797, 5
        %v2836 = vrot.slane %v2835, 4
        %v2837 = vrot.slane %v2798, 5
        %v2838 = vsel %vm746, %v2836, %v2837
        %v2839 = vrot.slane %v2799, 5
        %v2840 = vrot.slane %v2839, 4
        %v2841 = vrot.slane %v2800, 5
        %v2842 = vsel %vm746, %v2840, %v2841
        %v2843 = vrot.slane %v2801, 5
        %v2844 = vrot.slane %v2843, 4
        %v2845 = vrot.slane %v2802, 5
        %v2846 = vsel %vm746, %v2844, %v2845
        %v2847 = vrot.slane %v2803, 5
        %v2848 = vrot.slane %v2847, 4
        %v2849 = vrot.slane %v2804, 5
        %v2850 = vsel %vm746, %v2848, %v2849
        %v2851 = vrot.slane %v2805, 5
        %v2852 = vrot.slane %v2851, 4
        %v2853 = vrot.slane %v2806, 5
        %v2854 = vsel %vm746, %v2852, %v2853
        %2863 = vst [vmem:[#allocation3 + $0x8] sm:$0xf] %v2826
        %2864 = vst [vmem:[#allocation3 + $0x2c] sm:$0xf] %v2830
        %2865 = vst [vmem:[#allocation3 + $0x50] sm:$0xf] %v2834
        %2866 = vst [vmem:[#allocation3 + $0x74] sm:$0xf] %v2838
        %2867 = vst [vmem:[#allocation3 + $0x98] sm:$0xf] %v2842
        %2868 = vst [vmem:[#allocation3 + $0xbc] sm:$0xf] %v2846
        %2869 = vst [vmem:[#allocation3 + $0xe0] sm:$0xf] %v2850
        %2870 = vst [vmem:[#allocation3 + $0x104] sm:$0xf] %v2854
        %v2871 = vld [vmem:[%s494] sm:$0xf]
        %v2872 = vld [vmem:[%s494 + $0x8] sm:$0xf]
        %v2873 = vld [vmem:[%s494 + $0x10] sm:$0xf]
        %v2874 = vld [vmem:[%s494 + $0x18] sm:$0xf]
        %v2875 = vld [vmem:[%s494 + $0x20] sm:$0xf]
        %v2876 = vld [vmem:[%s494 + $0x28] sm:$0xf]
        %v2877 = vld [vmem:[%s494 + $0x30] sm:$0xf]
        %v2878 = vld [vmem:[%s494 + $0x38] sm:$0xf]
        %2879 = vst [vmem:[#allocation3 + $0xc] sm:$0xf] %v2871
        %2880 = vst [vmem:[#allocation3 + $0x30] sm:$0xf] %v2872
        %2881 = vst [vmem:[#allocation3 + $0x54] sm:$0xf] %v2873
        %2882 = vst [vmem:[#allocation3 + $0x78] sm:$0xf] %v2874
        %2883 = vst [vmem:[#allocation3 + $0x9c] sm:$0xf] %v2875
        %2884 = vst [vmem:[#allocation3 + $0xc0] sm:$0xf] %v2876
        %2885 = vst [vmem:[#allocation3 + $0xe4] sm:$0xf] %v2877
        %2886 = vst [vmem:[#allocation3 + $0x108] sm:$0xf] %v2878
        %v2887 = vld [vmem:[%s494] sm:$0xf]
        %v2888 = vld [vmem:[%s494 + $0x4] sm:$0x1]
        %v2889 = vld [vmem:[%s494 + $0x8] sm:$0xf]
        %v2890 = vld [vmem:[%s494 + $0xc] sm:$0x1]
        %v2891 = vld [vmem:[%s494 + $0x10] sm:$0xf]
        %v2892 = vld [vmem:[%s494 + $0x14] sm:$0x1]
        %v2893 = vld [vmem:[%s494 + $0x18] sm:$0xf]
        %v2894 = vld [vmem:[%s494 + $0x1c] sm:$0x1]
        %v2895 = vld [vmem:[%s494 + $0x20] sm:$0xf]
        %v2896 = vld [vmem:[%s494 + $0x24] sm:$0x1]
        %v2897 = vld [vmem:[%s494 + $0x28] sm:$0xf]
        %v2898 = vld [vmem:[%s494 + $0x2c] sm:$0x1]
        %v2899 = vld [vmem:[%s494 + $0x30] sm:$0xf]
        %v2900 = vld [vmem:[%s494 + $0x34] sm:$0x1]
        %v2901 = vld [vmem:[%s494 + $0x38] sm:$0xf]
        %v2902 = vld [vmem:[%s494 + $0x3c] sm:$0x1]
        %v2904 = vshrl.u32 %v2887, 16
        %v2906 = vrot.slane %v2904, 4
        %v2907 = vshll.u32 %v2887, 16
        %v2909 = vrot.slane %v2907, 5
        %v2910 = vor.u32 %v2906, %v2909
        %v2911 = vrot.slane %v2910, 4
        %v2913 = vshll.u32 %v2888, 16
        %v2915 = vrot.slane %v2913, 5
        %v2916 = vsel %vm583, %v2911, %v2915
        %v2918 = vshrl.u32 %v2889, 16
        %v2920 = vrot.slane %v2918, 4
        %v2921 = vshll.u32 %v2889, 16
        %v2923 = vrot.slane %v2921, 5
        %v2924 = vor.u32 %v2920, %v2923
        %v2925 = vrot.slane %v2924, 4
        %v2927 = vshll.u32 %v2890, 16
        %v2929 = vrot.slane %v2927, 5
        %v2930 = vsel %vm583, %v2925, %v2929
        %v2932 = vshrl.u32 %v2891, 16
        %v2934 = vrot.slane %v2932, 4
        %v2935 = vshll.u32 %v2891, 16
        %v2937 = vrot.slane %v2935, 5
        %v2938 = vor.u32 %v2934, %v2937
        %v2939 = vrot.slane %v2938, 4
        %v2941 = vshll.u32 %v2892, 16
        %v2943 = vrot.slane %v2941, 5
        %v2944 = vsel %vm583, %v2939, %v2943
        %v2946 = vshrl.u32 %v2893, 16
        %v2948 = vrot.slane %v2946, 4
        %v2949 = vshll.u32 %v2893, 16
        %v2951 = vrot.slane %v2949, 5
        %v2952 = vor.u32 %v2948, %v2951
        %v2953 = vrot.slane %v2952, 4
        %v2955 = vshll.u32 %v2894, 16
        %v2957 = vrot.slane %v2955, 5
        %v2958 = vsel %vm583, %v2953, %v2957
        %v2960 = vshrl.u32 %v2895, 16
        %v2962 = vrot.slane %v2960, 4
        %v2963 = vshll.u32 %v2895, 16
        %v2965 = vrot.slane %v2963, 5
        %v2966 = vor.u32 %v2962, %v2965
        %v2967 = vrot.slane %v2966, 4
        %v2969 = vshll.u32 %v2896, 16
        %v2971 = vrot.slane %v2969, 5
        %v2972 = vsel %vm583, %v2967, %v2971
        %v2974 = vshrl.u32 %v2897, 16
        %v2976 = vrot.slane %v2974, 4
        %v2977 = vshll.u32 %v2897, 16
        %v2979 = vrot.slane %v2977, 5
        %v2980 = vor.u32 %v2976, %v2979
        %v2981 = vrot.slane %v2980, 4
        %v2983 = vshll.u32 %v2898, 16
        %v2985 = vrot.slane %v2983, 5
        %v2986 = vsel %vm583, %v2981, %v2985
        %v2988 = vshrl.u32 %v2899, 16
        %v2990 = vrot.slane %v2988, 4
        %v2991 = vshll.u32 %v2899, 16
        %v2993 = vrot.slane %v2991, 5
        %v2994 = vor.u32 %v2990, %v2993
        %v2995 = vrot.slane %v2994, 4
        %v2997 = vshll.u32 %v2900, 16
        %v2999 = vrot.slane %v2997, 5
        %v3000 = vsel %vm583, %v2995, %v2999
        %v3002 = vshrl.u32 %v2901, 16
        %v3004 = vrot.slane %v3002, 4
        %v3005 = vshll.u32 %v2901, 16
        %v3007 = vrot.slane %v3005, 5
        %v3008 = vor.u32 %v3004, %v3007
        %v3009 = vrot.slane %v3008, 4
        %v3011 = vshll.u32 %v2902, 16
        %v3013 = vrot.slane %v3011, 5
        %v3014 = vsel %vm583, %v3009, %v3013
        %3023 = vst [vmem:[#allocation3 + $0x10] sm:$0xf] %v2916
        %3024 = vst [vmem:[#allocation3 + $0x34] sm:$0xf] %v2930
        %3025 = vst [vmem:[#allocation3 + $0x58] sm:$0xf] %v2944
        %3026 = vst [vmem:[#allocation3 + $0x7c] sm:$0xf] %v2958
        %3027 = vst [vmem:[#allocation3 + $0xa0] sm:$0xf] %v2972
        %3028 = vst [vmem:[#allocation3 + $0xc4] sm:$0xf] %v2986
        %3029 = vst [vmem:[#allocation3 + $0xe8] sm:$0xf] %v3000
        %3030 = vst [vmem:[#allocation3 + $0x10c] sm:$0xf] %v3014
        %v3031 = vld [vmem:[%s494] sm:$0xe]
        %v3032 = vld [vmem:[%s494 + $0x4] sm:$0x1]
        %v3033 = vld [vmem:[%s494 + $0x8] sm:$0xe]
        %v3034 = vld [vmem:[%s494 + $0xc] sm:$0x1]
        %v3035 = vld [vmem:[%s494 + $0x10] sm:$0xe]
        %v3036 = vld [vmem:[%s494 + $0x14] sm:$0x1]
        %v3037 = vld [vmem:[%s494 + $0x18] sm:$0xe]
        %v3038 = vld [vmem:[%s494 + $0x1c] sm:$0x1]
        %v3039 = vld [vmem:[%s494 + $0x20] sm:$0xe]
        %v3040 = vld [vmem:[%s494 + $0x24] sm:$0x1]
        %v3041 = vld [vmem:[%s494 + $0x28] sm:$0xe]
        %v3042 = vld [vmem:[%s494 + $0x2c] sm:$0x1]
        %v3043 = vld [vmem:[%s494 + $0x30] sm:$0xe]
        %v3044 = vld [vmem:[%s494 + $0x34] sm:$0x1]
        %v3045 = vld [vmem:[%s494 + $0x38] sm:$0xe]
        %v3046 = vld [vmem:[%s494 + $0x3c] sm:$0x1]
        %v3063 = vrot.slane %v3031, 5
        %v3064 = vrot.slane %v3063, 4
        %v3065 = vrot.slane %v3032, 5
        %v3066 = vsel %vm746, %v3064, %v3065
        %v3067 = vrot.slane %v3033, 5
        %v3068 = vrot.slane %v3067, 4
        %v3069 = vrot.slane %v3034, 5
        %v3070 = vsel %vm746, %v3068, %v3069
        %v3071 = vrot.slane %v3035, 5
        %v3072 = vrot.slane %v3071, 4
        %v3073 = vrot.slane %v3036, 5
        %v3074 = vsel %vm746, %v3072, %v3073
        %v3075 = vrot.slane %v3037, 5
        %v3076 = vrot.slane %v3075, 4
        %v3077 = vrot.slane %v3038, 5
        %v3078 = vsel %vm746, %v3076, %v3077
        %v3079 = vrot.slane %v3039, 5
        %v3080 = vrot.slane %v3079, 4
        %v3081 = vrot.slane %v3040, 5
        %v3082 = vsel %vm746, %v3080, %v3081
        %v3083 = vrot.slane %v3041, 5
        %v3084 = vrot.slane %v3083, 4
        %v3085 = vrot.slane %v3042, 5
        %v3086 = vsel %vm746, %v3084, %v3085
        %v3087 = vrot.slane %v3043, 5
        %v3088 = vrot.slane %v3087, 4
        %v3089 = vrot.slane %v3044, 5
        %v3090 = vsel %vm746, %v3088, %v3089
        %v3091 = vrot.slane %v3045, 5
        %v3092 = vrot.slane %v3091, 4
        %v3093 = vrot.slane %v3046, 5
        %v3094 = vsel %vm746, %v3092, %v3093
        %3103 = vst [vmem:[#allocation3 + $0x14] sm:$0xf] %v3066
        %3104 = vst [vmem:[#allocation3 + $0x38] sm:$0xf] %v3070
        %3105 = vst [vmem:[#allocation3 + $0x5c] sm:$0xf] %v3074
        %3106 = vst [vmem:[#allocation3 + $0x80] sm:$0xf] %v3078
        %3107 = vst [vmem:[#allocation3 + $0xa4] sm:$0xf] %v3082
        %3108 = vst [vmem:[#allocation3 + $0xc8] sm:$0xf] %v3086
        %3109 = vst [vmem:[#allocation3 + $0xec] sm:$0xf] %v3090
        %3110 = vst [vmem:[#allocation3 + $0x110] sm:$0xf] %v3094
        %v3111 = vld [vmem:[%s1035] sm:$0xf]
        %v3112 = vld [vmem:[%s1035 + $0x8] sm:$0xf]
        %v3113 = vld [vmem:[%s1035 + $0x10] sm:$0xf]
        %v3114 = vld [vmem:[%s1035 + $0x18] sm:$0xf]
        %v3115 = vld [vmem:[%s1035 + $0x20] sm:$0xf]
        %v3116 = vld [vmem:[%s1035 + $0x28] sm:$0xf]
        %v3117 = vld [vmem:[%s1035 + $0x30] sm:$0xf]
        %v3118 = vld [vmem:[%s1035 + $0x38] sm:$0xf]
        %3119 = vst [vmem:[#allocation3 + $0x18] sm:$0xf] %v3111
        %3120 = vst [vmem:[#allocation3 + $0x3c] sm:$0xf] %v3112
        %3121 = vst [vmem:[#allocation3 + $0x60] sm:$0xf] %v3113
        %3122 = vst [vmem:[#allocation3 + $0x84] sm:$0xf] %v3114
        %3123 = vst [vmem:[#allocation3 + $0xa8] sm:$0xf] %v3115
        %3124 = vst [vmem:[#allocation3 + $0xcc] sm:$0xf] %v3116
        %3125 = vst [vmem:[#allocation3 + $0xf0] sm:$0xf] %v3117
        %3126 = vst [vmem:[#allocation3 + $0x114] sm:$0xf] %v3118
        %v3127 = vld [vmem:[%s1035] sm:$0xf]
        %v3128 = vld [vmem:[%s1035 + $0x4] sm:$0x1]
        %v3129 = vld [vmem:[%s1035 + $0x8] sm:$0xf]
        %v3130 = vld [vmem:[%s1035 + $0xc] sm:$0x1]
        %v3131 = vld [vmem:[%s1035 + $0x10] sm:$0xf]
        %v3132 = vld [vmem:[%s1035 + $0x14] sm:$0x1]
        %v3133 = vld [vmem:[%s1035 + $0x18] sm:$0xf]
        %v3134 = vld [vmem:[%s1035 + $0x1c] sm:$0x1]
        %v3135 = vld [vmem:[%s1035 + $0x20] sm:$0xf]
        %v3136 = vld [vmem:[%s1035 + $0x24] sm:$0x1]
        %v3137 = vld [vmem:[%s1035 + $0x28] sm:$0xf]
        %v3138 = vld [vmem:[%s1035 + $0x2c] sm:$0x1]
        %v3139 = vld [vmem:[%s1035 + $0x30] sm:$0xf]
        %v3140 = vld [vmem:[%s1035 + $0x34] sm:$0x1]
        %v3141 = vld [vmem:[%s1035 + $0x38] sm:$0xf]
        %v3142 = vld [vmem:[%s1035 + $0x3c] sm:$0x1]
        %v3144 = vshrl.u32 %v3127, 16
        %v3146 = vrot.slane %v3144, 4
        %v3147 = vshll.u32 %v3127, 16
        %v3149 = vrot.slane %v3147, 5
        %v3150 = vor.u32 %v3146, %v3149
        %v3151 = vrot.slane %v3150, 4
        %v3153 = vshll.u32 %v3128, 16
        %v3155 = vrot.slane %v3153, 5
        %v3156 = vsel %vm583, %v3151, %v3155
        %v3158 = vshrl.u32 %v3129, 16
        %v3160 = vrot.slane %v3158, 4
        %v3161 = vshll.u32 %v3129, 16
        %v3163 = vrot.slane %v3161, 5
        %v3164 = vor.u32 %v3160, %v3163
        %v3165 = vrot.slane %v3164, 4
        %v3167 = vshll.u32 %v3130, 16
        %v3169 = vrot.slane %v3167, 5
        %v3170 = vsel %vm583, %v3165, %v3169
        %v3172 = vshrl.u32 %v3131, 16
        %v3174 = vrot.slane %v3172, 4
        %v3175 = vshll.u32 %v3131, 16
        %v3177 = vrot.slane %v3175, 5
        %v3178 = vor.u32 %v3174, %v3177
        %v3179 = vrot.slane %v3178, 4
        %v3181 = vshll.u32 %v3132, 16
        %v3183 = vrot.slane %v3181, 5
        %v3184 = vsel %vm583, %v3179, %v3183
        %v3186 = vshrl.u32 %v3133, 16
        %v3188 = vrot.slane %v3186, 4
        %v3189 = vshll.u32 %v3133, 16
        %v3191 = vrot.slane %v3189, 5
        %v3192 = vor.u32 %v3188, %v3191
        %v3193 = vrot.slane %v3192, 4
        %v3195 = vshll.u32 %v3134, 16
        %v3197 = vrot.slane %v3195, 5
        %v3198 = vsel %vm583, %v3193, %v3197
        %v3200 = vshrl.u32 %v3135, 16
        %v3202 = vrot.slane %v3200, 4
        %v3203 = vshll.u32 %v3135, 16
        %v3205 = vrot.slane %v3203, 5
        %v3206 = vor.u32 %v3202, %v3205
        %v3207 = vrot.slane %v3206, 4
        %v3209 = vshll.u32 %v3136, 16
        %v3211 = vrot.slane %v3209, 5
        %v3212 = vsel %vm583, %v3207, %v3211
        %v3214 = vshrl.u32 %v3137, 16
        %v3216 = vrot.slane %v3214, 4
        %v3217 = vshll.u32 %v3137, 16
        %v3219 = vrot.slane %v3217, 5
        %v3220 = vor.u32 %v3216, %v3219
        %v3221 = vrot.slane %v3220, 4
        %v3223 = vshll.u32 %v3138, 16
        %v3225 = vrot.slane %v3223, 5
        %v3226 = vsel %vm583, %v3221, %v3225
        %v3228 = vshrl.u32 %v3139, 16
        %v3230 = vrot.slane %v3228, 4
        %v3231 = vshll.u32 %v3139, 16
        %v3233 = vrot.slane %v3231, 5
        %v3234 = vor.u32 %v3230, %v3233
        %v3235 = vrot.slane %v3234, 4
        %v3237 = vshll.u32 %v3140, 16
        %v3239 = vrot.slane %v3237, 5
        %v3240 = vsel %vm583, %v3235, %v3239
        %v3242 = vshrl.u32 %v3141, 16
        %v3244 = vrot.slane %v3242, 4
        %v3245 = vshll.u32 %v3141, 16
        %v3247 = vrot.slane %v3245, 5
        %v3248 = vor.u32 %v3244, %v3247
        %v3249 = vrot.slane %v3248, 4
        %v3251 = vshll.u32 %v3142, 16
        %v3253 = vrot.slane %v3251, 5
        %v3254 = vsel %vm583, %v3249, %v3253
        %3263 = vst [vmem:[#allocation3 + $0x1c] sm:$0xf] %v3156
        %3264 = vst [vmem:[#allocation3 + $0x40] sm:$0xf] %v3170
        %3265 = vst [vmem:[#allocation3 + $0x64] sm:$0xf] %v3184
        %3266 = vst [vmem:[#allocation3 + $0x88] sm:$0xf] %v3198
        %3267 = vst [vmem:[#allocation3 + $0xac] sm:$0xf] %v3212
        %3268 = vst [vmem:[#allocation3 + $0xd0] sm:$0xf] %v3226
        %3269 = vst [vmem:[#allocation3 + $0xf4] sm:$0xf] %v3240
        %3270 = vst [vmem:[#allocation3 + $0x118] sm:$0xf] %v3254
        %v3271 = vld [vmem:[%s1035] sm:$0xe]
        %v3272 = vld [vmem:[%s1035 + $0x4] sm:$0x1]
        %v3273 = vld [vmem:[%s1035 + $0x8] sm:$0xe]
        %v3274 = vld [vmem:[%s1035 + $0xc] sm:$0x1]
        %v3275 = vld [vmem:[%s1035 + $0x10] sm:$0xe]
        %v3276 = vld [vmem:[%s1035 + $0x14] sm:$0x1]
        %v3277 = vld [vmem:[%s1035 + $0x18] sm:$0xe]
        %v3278 = vld [vmem:[%s1035 + $0x1c] sm:$0x1]
        %v3279 = vld [vmem:[%s1035 + $0x20] sm:$0xe]
        %v3280 = vld [vmem:[%s1035 + $0x24] sm:$0x1]
        %v3281 = vld [vmem:[%s1035 + $0x28] sm:$0xe]
        %v3282 = vld [vmem:[%s1035 + $0x2c] sm:$0x1]
        %v3283 = vld [vmem:[%s1035 + $0x30] sm:$0xe]
        %v3284 = vld [vmem:[%s1035 + $0x34] sm:$0x1]
        %v3285 = vld [vmem:[%s1035 + $0x38] sm:$0xe]
        %v3286 = vld [vmem:[%s1035 + $0x3c] sm:$0x1]
        %v3303 = vrot.slane %v3271, 5
        %v3304 = vrot.slane %v3303, 4
        %v3305 = vrot.slane %v3272, 5
        %v3306 = vsel %vm746, %v3304, %v3305
        %v3307 = vrot.slane %v3273, 5
        %v3308 = vrot.slane %v3307, 4
        %v3309 = vrot.slane %v3274, 5
        %v3310 = vsel %vm746, %v3308, %v3309
        %v3311 = vrot.slane %v3275, 5
        %v3312 = vrot.slane %v3311, 4
        %v3313 = vrot.slane %v3276, 5
        %v3314 = vsel %vm746, %v3312, %v3313
        %v3315 = vrot.slane %v3277, 5
        %v3316 = vrot.slane %v3315, 4
        %v3317 = vrot.slane %v3278, 5
        %v3318 = vsel %vm746, %v3316, %v3317
        %v3319 = vrot.slane %v3279, 5
        %v3320 = vrot.slane %v3319, 4
        %v3321 = vrot.slane %v3280, 5
        %v3322 = vsel %vm746, %v3320, %v3321
        %v3323 = vrot.slane %v3281, 5
        %v3324 = vrot.slane %v3323, 4
        %v3325 = vrot.slane %v3282, 5
        %v3326 = vsel %vm746, %v3324, %v3325
        %v3327 = vrot.slane %v3283, 5
        %v3328 = vrot.slane %v3327, 4
        %v3329 = vrot.slane %v3284, 5
        %v3330 = vsel %vm746, %v3328, %v3329
        %v3331 = vrot.slane %v3285, 5
        %v3332 = vrot.slane %v3331, 4
        %v3333 = vrot.slane %v3286, 5
        %v3334 = vsel %vm746, %v3332, %v3333
        %3343 = vst [vmem:[#allocation3 + $0x20] sm:$0xf] %v3306
        %3344 = vst [vmem:[#allocation3 + $0x44] sm:$0xf] %v3310
        %3345 = vst [vmem:[#allocation3 + $0x68] sm:$0xf] %v3314
        %3346 = vst [vmem:[#allocation3 + $0x8c] sm:$0xf] %v3318
        %3347 = vst [vmem:[#allocation3 + $0xb0] sm:$0xf] %v3322
        %3348 = vst [vmem:[#allocation3 + $0xd4] sm:$0xf] %v3326
        %3349 = vst [vmem:[#allocation3 + $0xf8] sm:$0xf] %v3330
        %3350 = vst [vmem:[#allocation3 + $0x11c] sm:$0xf] %v3334
        %v3351 = vld [vmem:[#allocation3] sm:$0xff]
        %v3352 = vld [vmem:[#allocation3 + $0x8] sm:$0xff]
        %v3353 = vld [vmem:[#allocation3 + $0x10] sm:$0xff]
        %v3354 = vld [vmem:[#allocation3 + $0x18] sm:$0xff]
        %v3355 = vld [vmem:[#allocation3 + $0x20] sm:$0xf]
        %v3356 = vld [vmem:[#allocation3 + $0x24] sm:$0xff]
        %v3357 = vld [vmem:[#allocation3 + $0x2c] sm:$0xff]
        %v3358 = vld [vmem:[#allocation3 + $0x34] sm:$0xff]
        %v3359 = vld [vmem:[#allocation3 + $0x3c] sm:$0xff]
        %v3360 = vld [vmem:[#allocation3 + $0x44] sm:$0xf]
        %v3361 = vld [vmem:[#allocation3 + $0x48] sm:$0xff]
        %v3362 = vld [vmem:[#allocation3 + $0x50] sm:$0xff]
        %v3363 = vld [vmem:[#allocation3 + $0x58] sm:$0xff]
        %v3364 = vld [vmem:[#allocation3 + $0x60] sm:$0xff]
        %v3365 = vld [vmem:[#allocation3 + $0x68] sm:$0xf]
        %v3366 = vld [vmem:[#allocation3 + $0x6c] sm:$0xff]
        %v3367 = vld [vmem:[#allocation3 + $0x74] sm:$0xff]
        %v3368 = vld [vmem:[#allocation3 + $0x7c] sm:$0xff]
        %v3369 = vld [vmem:[#allocation3 + $0x84] sm:$0xff]
        %v3370 = vld [vmem:[#allocation3 + $0x8c] sm:$0xf]
        %v3371 = vld [vmem:[#allocation3 + $0x90] sm:$0xff]
        %v3372 = vld [vmem:[#allocation3 + $0x98] sm:$0xff]
        %v3373 = vld [vmem:[#allocation3 + $0xa0] sm:$0xff]
        %v3374 = vld [vmem:[#allocation3 + $0xa8] sm:$0xff]
        %v3375 = vld [vmem:[#allocation3 + $0xb0] sm:$0xf]
        %v3376 = vld [vmem:[#allocation3 + $0xb4] sm:$0xff]
        %v3377 = vld [vmem:[#allocation3 + $0xbc] sm:$0xff]
        %v3378 = vld [vmem:[#allocation3 + $0xc4] sm:$0xff]
        %v3379 = vld [vmem:[#allocation3 + $0xcc] sm:$0xff]
        %v3380 = vld [vmem:[#allocation3 + $0xd4] sm:$0xf]
        %v3381 = vld [vmem:[#allocation3 + $0xd8] sm:$0xff]
        %v3382 = vld [vmem:[#allocation3 + $0xe0] sm:$0xff]
        %v3383 = vld [vmem:[#allocation3 + $0xe8] sm:$0xff]
        %v3384 = vld [vmem:[#allocation3 + $0xf0] sm:$0xff]
        %v3385 = vld [vmem:[#allocation3 + $0xf8] sm:$0xf]
        %v3386 = vld [vmem:[#allocation3 + $0xfc] sm:$0xff]
        %v3387 = vld [vmem:[#allocation3 + $0x104] sm:$0xff]
        %v3388 = vld [vmem:[#allocation3 + $0x10c] sm:$0xff]
        %v3389 = vld [vmem:[#allocation3 + $0x114] sm:$0xff]
        %v3390 = vld [vmem:[#allocation3 + $0x11c] sm:$0xf]
        %s3391 = scalar_lea.vmem [#allocation7], 576
        %v3392 = vld [vmem:[%s3391] sm:$0xf]
        %v3393 = vld [vmem:[%s3391 + $0x4] sm:$0xf]
        %v3394 = vld [vmem:[%s3391 + $0x8] sm:$0xf]
        %v3395 = vld [vmem:[%s3391 + $0xc] sm:$0xf]
        %v3396 = vld [vmem:[%s3391 + $0x10] sm:$0xf]
        %v3397 = vld [vmem:[%s3391 + $0x14] sm:$0xf]
        %v3398 = vld [vmem:[%s3391 + $0x18] sm:$0xf]
        %v3399 = vld [vmem:[%s3391 + $0x1c] sm:$0xf]
        %v3400 = vld [vmem:[%s3391 + $0x20] sm:$0xf]
        %v3401 = vld [vmem:[%s3391 + $0x24] sm:$0xf]
        %v3402 = vld [vmem:[%s3391 + $0x28] sm:$0xf]
        %v3403 = vld [vmem:[%s3391 + $0x2c] sm:$0xf]
        %v3404 = vld [vmem:[%s3391 + $0x30] sm:$0xf]
        %v3405 = vld [vmem:[%s3391 + $0x34] sm:$0xf]
        %v3406 = vld [vmem:[%s3391 + $0x38] sm:$0xf]
        %v3407 = vld [vmem:[%s3391 + $0x3c] sm:$0xf]
        %v3408 = vld [vmem:[%s3391 + $0x40] sm:$0xf]
        %v3409 = vld [vmem:[%s3391 + $0x44] sm:$0xf]
        %v3410 = vld [vmem:[%s3391 + $0x48] sm:$0xf]
        %v3411 = vld [vmem:[%s3391 + $0x4c] sm:$0xf]
        %v3412 = vld [vmem:[%s3391 + $0x50] sm:$0xf]
        %v3413 = vld [vmem:[%s3391 + $0x54] sm:$0xf]
        %v3414 = vld [vmem:[%s3391 + $0x58] sm:$0xf]
        %v3415 = vld [vmem:[%s3391 + $0x5c] sm:$0xf]
        %v3416 = vld [vmem:[%s3391 + $0x60] sm:$0xf]
        %v3417 = vld [vmem:[%s3391 + $0x64] sm:$0xf]
        %v3418 = vld [vmem:[%s3391 + $0x68] sm:$0xf]
        %v3419 = vld [vmem:[%s3391 + $0x6c] sm:$0xf]
        %v3420 = vld [vmem:[%s3391 + $0x70] sm:$0xf]
        %v3421 = vld [vmem:[%s3391 + $0x74] sm:$0xf]
        %v3422 = vld [vmem:[%s3391 + $0x78] sm:$0xf]
        %v3423 = vld [vmem:[%s3391 + $0x7c] sm:$0xf]
        %v3424 = vld [vmem:[%s3391 + $0x80] sm:$0xf]
        %v3425 = vld [vmem:[%s3391 + $0x84] sm:$0xf]
        %v3426 = vld [vmem:[%s3391 + $0x88] sm:$0xf]
        %v3427 = vld [vmem:[%s3391 + $0x8c] sm:$0xf]
        %v3428 = vld [vmem:[%s3391 + $0x90] sm:$0xf]
        %v3429 = vld [vmem:[%s3391 + $0x94] sm:$0xf]
        %v3430 = vld [vmem:[%s3391 + $0x98] sm:$0xf]
        %v3431 = vld [vmem:[%s3391 + $0x9c] sm:$0xf]
        %v3432 = vld [vmem:[%s3391 + $0xa0] sm:$0xf]
        %v3433 = vld [vmem:[%s3391 + $0xa4] sm:$0xf]
        %v3434 = vld [vmem:[%s3391 + $0xa8] sm:$0xf]
        %v3435 = vld [vmem:[%s3391 + $0xac] sm:$0xf]
        %v3436 = vld [vmem:[%s3391 + $0xb0] sm:$0xf]
        %v3437 = vld [vmem:[%s3391 + $0xb4] sm:$0xf]
        %v3438 = vld [vmem:[%s3391 + $0xb8] sm:$0xf]
        %v3439 = vld [vmem:[%s3391 + $0xbc] sm:$0xf]
        %v3440 = vld [vmem:[%s3391 + $0xc0] sm:$0xf]
        %v3441 = vld [vmem:[%s3391 + $0xc4] sm:$0xf]
        %v3442 = vld [vmem:[%s3391 + $0xc8] sm:$0xf]
        %v3443 = vld [vmem:[%s3391 + $0xcc] sm:$0xf]
        %v3444 = vld [vmem:[%s3391 + $0xd0] sm:$0xf]
        %v3445 = vld [vmem:[%s3391 + $0xd4] sm:$0xf]
        %v3446 = vld [vmem:[%s3391 + $0xd8] sm:$0xf]
        %v3447 = vld [vmem:[%s3391 + $0xdc] sm:$0xf]
        %v3448 = vld [vmem:[%s3391 + $0xe0] sm:$0xf]
        %v3449 = vld [vmem:[%s3391 + $0xe4] sm:$0xf]
        %v3450 = vld [vmem:[%s3391 + $0xe8] sm:$0xf]
        %v3451 = vld [vmem:[%s3391 + $0xec] sm:$0xf]
        %v3452 = vld [vmem:[%s3391 + $0xf0] sm:$0xf]
        %v3453 = vld [vmem:[%s3391 + $0xf4] sm:$0xf]
        %v3454 = vld [vmem:[%s3391 + $0xf8] sm:$0xf]
        %v3455 = vld [vmem:[%s3391 + $0xfc] sm:$0xf]
        %v3456 = vld [vmem:[%s3391 + $0x100] sm:$0xf]
        %v3457 = vld [vmem:[%s3391 + $0x104] sm:$0xf]
        %v3458 = vld [vmem:[%s3391 + $0x108] sm:$0xf]
        %v3459 = vld [vmem:[%s3391 + $0x10c] sm:$0xf]
        %v3460 = vld [vmem:[%s3391 + $0x110] sm:$0xf]
        %v3461 = vld [vmem:[%s3391 + $0x114] sm:$0xf]
        %v3462 = vld [vmem:[%s3391 + $0x118] sm:$0xf]
        %v3463 = vld [vmem:[%s3391 + $0x11c] sm:$0xf]
        %v3464 = vld [vmem:[%s3391 + $0x120] sm:$0xf]
        %v3465 = vld [vmem:[%s3391 + $0x124] sm:$0xf]
        %v3466 = vld [vmem:[%s3391 + $0x128] sm:$0xf]
        %v3467 = vld [vmem:[%s3391 + $0x12c] sm:$0xf]
        %v3468 = vld [vmem:[%s3391 + $0x130] sm:$0xf]
        %v3469 = vld [vmem:[%s3391 + $0x134] sm:$0xf]
        %v3470 = vld [vmem:[%s3391 + $0x138] sm:$0xf]
        %v3471 = vld [vmem:[%s3391 + $0x13c] sm:$0xf]
        %v3472 = vld [vmem:[%s3391 + $0x140] sm:$0xf]
        %v3473 = vld [vmem:[%s3391 + $0x144] sm:$0xf]
        %v3474 = vld [vmem:[%s3391 + $0x148] sm:$0xf]
        %v3475 = vld [vmem:[%s3391 + $0x14c] sm:$0xf]
        %v3476 = vld [vmem:[%s3391 + $0x150] sm:$0xf]
        %v3477 = vld [vmem:[%s3391 + $0x154] sm:$0xf]
        %v3478 = vld [vmem:[%s3391 + $0x158] sm:$0xf]
        %v3479 = vld [vmem:[%s3391 + $0x15c] sm:$0xf]
        %v3480 = vld [vmem:[%s3391 + $0x160] sm:$0xf]
        %v3481 = vld [vmem:[%s3391 + $0x164] sm:$0xf]
        %v3482 = vld [vmem:[%s3391 + $0x168] sm:$0xf]
        %v3483 = vld [vmem:[%s3391 + $0x16c] sm:$0xf]
        %v3484 = vld [vmem:[%s3391 + $0x170] sm:$0xf]
        %v3485 = vld [vmem:[%s3391 + $0x174] sm:$0xf]
        %v3486 = vld [vmem:[%s3391 + $0x178] sm:$0xf]
        %v3487 = vld [vmem:[%s3391 + $0x17c] sm:$0xf]
        %v3488 = vld [vmem:[%s3391 + $0x180] sm:$0xf]
        %v3489 = vld [vmem:[%s3391 + $0x184] sm:$0xf]
        %v3490 = vld [vmem:[%s3391 + $0x188] sm:$0xf]
        %v3491 = vld [vmem:[%s3391 + $0x18c] sm:$0xf]
        %v3492 = vld [vmem:[%s3391 + $0x190] sm:$0xf]
        %v3493 = vld [vmem:[%s3391 + $0x194] sm:$0xf]
        %v3494 = vld [vmem:[%s3391 + $0x198] sm:$0xf]
        %v3495 = vld [vmem:[%s3391 + $0x19c] sm:$0xf]
        %v3496 = vld [vmem:[%s3391 + $0x1a0] sm:$0xf]
        %v3497 = vld [vmem:[%s3391 + $0x1a4] sm:$0xf]
        %v3498 = vld [vmem:[%s3391 + $0x1a8] sm:$0xf]
        %v3499 = vld [vmem:[%s3391 + $0x1ac] sm:$0xf]
        %v3500 = vld [vmem:[%s3391 + $0x1b0] sm:$0xf]
        %v3501 = vld [vmem:[%s3391 + $0x1b4] sm:$0xf]
        %v3502 = vld [vmem:[%s3391 + $0x1b8] sm:$0xf]
        %v3503 = vld [vmem:[%s3391 + $0x1bc] sm:$0xf]
        %v3504 = vld [vmem:[%s3391 + $0x1c0] sm:$0xf]
        %v3505 = vld [vmem:[%s3391 + $0x1c4] sm:$0xf]
        %v3506 = vld [vmem:[%s3391 + $0x1c8] sm:$0xf]
        %v3507 = vld [vmem:[%s3391 + $0x1cc] sm:$0xf]
        %v3508 = vld [vmem:[%s3391 + $0x1d0] sm:$0xf]
        %v3509 = vld [vmem:[%s3391 + $0x1d4] sm:$0xf]
        %v3510 = vld [vmem:[%s3391 + $0x1d8] sm:$0xf]
        %v3511 = vld [vmem:[%s3391 + $0x1dc] sm:$0xf]
        %v3512 = vld [vmem:[%s3391 + $0x1e0] sm:$0xf]
        %v3513 = vld [vmem:[%s3391 + $0x1e4] sm:$0xf]
        %v3514 = vld [vmem:[%s3391 + $0x1e8] sm:$0xf]
        %v3515 = vld [vmem:[%s3391 + $0x1ec] sm:$0xf]
        %v3516 = vld [vmem:[%s3391 + $0x1f0] sm:$0xf]
        %v3517 = vld [vmem:[%s3391 + $0x1f4] sm:$0xf]
        %v3518 = vld [vmem:[%s3391 + $0x1f8] sm:$0xf]
        %v3519 = vld [vmem:[%s3391 + $0x1fc] sm:$0xf]
        %v3520 = vld [vmem:[%s3391 + $0x200] sm:$0xf]
        %v3521 = vld [vmem:[%s3391 + $0x204] sm:$0xf]
        %v3522 = vld [vmem:[%s3391 + $0x208] sm:$0xf]
        %v3523 = vld [vmem:[%s3391 + $0x20c] sm:$0xf]
        %v3524 = vld [vmem:[%s3391 + $0x210] sm:$0xf]
        %v3525 = vld [vmem:[%s3391 + $0x214] sm:$0xf]
        %v3526 = vld [vmem:[%s3391 + $0x218] sm:$0xf]
        %v3527 = vld [vmem:[%s3391 + $0x21c] sm:$0xf]
        %v3528 = vld [vmem:[%s3391 + $0x220] sm:$0xf]
        %v3529 = vld [vmem:[%s3391 + $0x224] sm:$0xf]
        %v3530 = vld [vmem:[%s3391 + $0x228] sm:$0xf]
        %v3531 = vld [vmem:[%s3391 + $0x22c] sm:$0xf]
        %v3532 = vld [vmem:[%s3391 + $0x230] sm:$0xf]
        %v3533 = vld [vmem:[%s3391 + $0x234] sm:$0xf]
        %v3534 = vld [vmem:[%s3391 + $0x238] sm:$0xf]
        %v3535 = vld [vmem:[%s3391 + $0x23c] sm:$0xf]
        %v3576 = vunpack.c.l.b16 %v3351
        %v3577 = vunpack.c.h.b16 %v3351
        %v3578 = vunpack.c.l.b16 %v3352
        %v3579 = vunpack.c.h.b16 %v3352
        %v3580 = vunpack.c.l.b16 %v3353
        %v3581 = vunpack.c.h.b16 %v3353
        %v3582 = vunpack.c.l.b16 %v3354
        %v3583 = vunpack.c.h.b16 %v3354
        %v3584 = vunpack.c.l.b16 %v3355
        %v3585 = vunpack.c.l.b16 %v3356
        %v3586 = vunpack.c.h.b16 %v3356
        %v3587 = vunpack.c.l.b16 %v3357
        %v3588 = vunpack.c.h.b16 %v3357
        %v3589 = vunpack.c.l.b16 %v3358
        %v3590 = vunpack.c.h.b16 %v3358
        %v3591 = vunpack.c.l.b16 %v3359
        %v3592 = vunpack.c.h.b16 %v3359
        %v3593 = vunpack.c.l.b16 %v3360
        %v3594 = vunpack.c.l.b16 %v3361
        %v3595 = vunpack.c.h.b16 %v3361
        %v3596 = vunpack.c.l.b16 %v3362
        %v3597 = vunpack.c.h.b16 %v3362
        %v3598 = vunpack.c.l.b16 %v3363
        %v3599 = vunpack.c.h.b16 %v3363
        %v3600 = vunpack.c.l.b16 %v3364
        %v3601 = vunpack.c.h.b16 %v3364
        %v3602 = vunpack.c.l.b16 %v3365
        %v3603 = vunpack.c.l.b16 %v3366
        %v3604 = vunpack.c.h.b16 %v3366
        %v3605 = vunpack.c.l.b16 %v3367
        %v3606 = vunpack.c.h.b16 %v3367
        %v3607 = vunpack.c.l.b16 %v3368
        %v3608 = vunpack.c.h.b16 %v3368
        %v3609 = vunpack.c.l.b16 %v3369
        %v3610 = vunpack.c.h.b16 %v3369
        %v3611 = vunpack.c.l.b16 %v3370
        %v3612 = vunpack.c.l.b16 %v3371
        %v3613 = vunpack.c.h.b16 %v3371
        %v3614 = vunpack.c.l.b16 %v3372
        %v3615 = vunpack.c.h.b16 %v3372
        %v3616 = vunpack.c.l.b16 %v3373
        %v3617 = vunpack.c.h.b16 %v3373
        %v3618 = vunpack.c.l.b16 %v3374
        %v3619 = vunpack.c.h.b16 %v3374
        %v3620 = vunpack.c.l.b16 %v3375
        %v3621 = vunpack.c.l.b16 %v3376
        %v3622 = vunpack.c.h.b16 %v3376
        %v3623 = vunpack.c.l.b16 %v3377
        %v3624 = vunpack.c.h.b16 %v3377
        %v3625 = vunpack.c.l.b16 %v3378
        %v3626 = vunpack.c.h.b16 %v3378
        %v3627 = vunpack.c.l.b16 %v3379
        %v3628 = vunpack.c.h.b16 %v3379
        %v3629 = vunpack.c.l.b16 %v3380
        %v3630 = vunpack.c.l.b16 %v3381
        %v3631 = vunpack.c.h.b16 %v3381
        %v3632 = vunpack.c.l.b16 %v3382
        %v3633 = vunpack.c.h.b16 %v3382
        %v3634 = vunpack.c.l.b16 %v3383
        %v3635 = vunpack.c.h.b16 %v3383
        %v3636 = vunpack.c.l.b16 %v3384
        %v3637 = vunpack.c.h.b16 %v3384
        %v3638 = vunpack.c.l.b16 %v3385
        %v3639 = vunpack.c.l.b16 %v3386
        %v3640 = vunpack.c.h.b16 %v3386
        %v3641 = vunpack.c.l.b16 %v3387
        %v3642 = vunpack.c.h.b16 %v3387
        %v3643 = vunpack.c.l.b16 %v3388
        %v3644 = vunpack.c.h.b16 %v3388
        %v3645 = vunpack.c.l.b16 %v3389
        %v3646 = vunpack.c.h.b16 %v3389
        %v3647 = vunpack.c.l.b16 %v3390
        %v3648 = vpack.c.b16 %v3585, %v3576
        %v3649 = vpack.c.b16 %v3586, %v3577
        %v3650 = vpack.c.b16 %v3587, %v3578
        %v3651 = vpack.c.b16 %v3588, %v3579
        %v3652 = vpack.c.b16 %v3589, %v3580
        %v3653 = vpack.c.b16 %v3590, %v3581
        %v3654 = vpack.c.b16 %v3591, %v3582
        %v3655 = vpack.c.b16 %v3592, %v3583
        %v3656 = vpack.c.b16 %v3593, %v3584
        %v3657 = vpack.c.b16 %v3603, %v3594
        %v3658 = vpack.c.b16 %v3604, %v3595
        %v3659 = vpack.c.b16 %v3605, %v3596
        %v3660 = vpack.c.b16 %v3606, %v3597
        %v3661 = vpack.c.b16 %v3607, %v3598
        %v3662 = vpack.c.b16 %v3608, %v3599
        %v3663 = vpack.c.b16 %v3609, %v3600
        %v3664 = vpack.c.b16 %v3610, %v3601
        %v3665 = vpack.c.b16 %v3611, %v3602
        %v3666 = vpack.c.b16 %v3621, %v3612
        %v3667 = vpack.c.b16 %v3622, %v3613
        %v3668 = vpack.c.b16 %v3623, %v3614
        %v3669 = vpack.c.b16 %v3624, %v3615
        %v3670 = vpack.c.b16 %v3625, %v3616
        %v3671 = vpack.c.b16 %v3626, %v3617
        %v3672 = vpack.c.b16 %v3627, %v3618
        %v3673 = vpack.c.b16 %v3628, %v3619
        %v3674 = vpack.c.b16 %v3629, %v3620
        %v3675 = vpack.c.b16 %v3639, %v3630
        %v3676 = vpack.c.b16 %v3640, %v3631
        %v3677 = vpack.c.b16 %v3641, %v3632
        %v3678 = vpack.c.b16 %v3642, %v3633
        %v3679 = vpack.c.b16 %v3643, %v3634
        %v3680 = vpack.c.b16 %v3644, %v3635
        %v3681 = vpack.c.b16 %v3645, %v3636
        %v3682 = vpack.c.b16 %v3646, %v3637
        %v3683 = vpack.c.b16 %v3647, %v3638
        %v3864 = vunpack.c.l.b16 %v3392
        %v3865 = vunpack.c.l.b16 %v3393
        %v3866 = vunpack.c.l.b16 %v3394
        %v3867 = vunpack.c.l.b16 %v3395
        %v3868 = vunpack.c.l.b16 %v3396
        %v3869 = vunpack.c.l.b16 %v3397
        %v3870 = vunpack.c.l.b16 %v3398
        %v3871 = vunpack.c.l.b16 %v3399
        %v3872 = vunpack.c.l.b16 %v3400
        %v3873 = vunpack.c.l.b16 %v3401
        %v3874 = vunpack.c.l.b16 %v3402
        %v3875 = vunpack.c.l.b16 %v3403
        %v3876 = vunpack.c.l.b16 %v3404
        %v3877 = vunpack.c.l.b16 %v3405
        %v3878 = vunpack.c.l.b16 %v3406
        %v3879 = vunpack.c.l.b16 %v3407
        %v3880 = vunpack.c.l.b16 %v3408
        %v3881 = vunpack.c.l.b16 %v3409
        %v3882 = vunpack.c.l.b16 %v3410
        %v3883 = vunpack.c.l.b16 %v3411
        %v3884 = vunpack.c.l.b16 %v3412
        %v3885 = vunpack.c.l.b16 %v3413
        %v3886 = vunpack.c.l.b16 %v3414
        %v3887 = vunpack.c.l.b16 %v3415
        %v3888 = vunpack.c.l.b16 %v3416
        %v3889 = vunpack.c.l.b16 %v3417
        %v3890 = vunpack.c.l.b16 %v3418
        %v3891 = vunpack.c.l.b16 %v3419
        %v3892 = vunpack.c.l.b16 %v3420
        %v3893 = vunpack.c.l.b16 %v3421
        %v3894 = vunpack.c.l.b16 %v3422
        %v3895 = vunpack.c.l.b16 %v3423
        %v3896 = vunpack.c.l.b16 %v3424
        %v3897 = vunpack.c.l.b16 %v3425
        %v3898 = vunpack.c.l.b16 %v3426
        %v3899 = vunpack.c.l.b16 %v3427
        %v3900 = vunpack.c.l.b16 %v3428
        %v3901 = vunpack.c.l.b16 %v3429
        %v3902 = vunpack.c.l.b16 %v3430
        %v3903 = vunpack.c.l.b16 %v3431
        %v3904 = vunpack.c.l.b16 %v3432
        %v3905 = vunpack.c.l.b16 %v3433
        %v3906 = vunpack.c.l.b16 %v3434
        %v3907 = vunpack.c.l.b16 %v3435
        %v3908 = vunpack.c.l.b16 %v3436
        %v3909 = vunpack.c.l.b16 %v3437
        %v3910 = vunpack.c.l.b16 %v3438
        %v3911 = vunpack.c.l.b16 %v3439
        %v3912 = vunpack.c.l.b16 %v3440
        %v3913 = vunpack.c.l.b16 %v3441
        %v3914 = vunpack.c.l.b16 %v3442
        %v3915 = vunpack.c.l.b16 %v3443
        %v3916 = vunpack.c.l.b16 %v3444
        %v3917 = vunpack.c.l.b16 %v3445
        %v3918 = vunpack.c.l.b16 %v3446
        %v3919 = vunpack.c.l.b16 %v3447
        %v3920 = vunpack.c.l.b16 %v3448
        %v3921 = vunpack.c.l.b16 %v3449
        %v3922 = vunpack.c.l.b16 %v3450
        %v3923 = vunpack.c.l.b16 %v3451
        %v3924 = vunpack.c.l.b16 %v3452
        %v3925 = vunpack.c.l.b16 %v3453
        %v3926 = vunpack.c.l.b16 %v3454
        %v3927 = vunpack.c.l.b16 %v3455
        %v3928 = vunpack.c.l.b16 %v3456
        %v3929 = vunpack.c.l.b16 %v3457
        %v3930 = vunpack.c.l.b16 %v3458
        %v3931 = vunpack.c.l.b16 %v3459
        %v3932 = vunpack.c.l.b16 %v3460
        %v3933 = vunpack.c.l.b16 %v3461
        %v3934 = vunpack.c.l.b16 %v3462
        %v3935 = vunpack.c.l.b16 %v3463
        %v3936 = vunpack.c.l.b16 %v3464
        %v3937 = vunpack.c.l.b16 %v3465
        %v3938 = vunpack.c.l.b16 %v3466
        %v3939 = vunpack.c.l.b16 %v3467
        %v3940 = vunpack.c.l.b16 %v3468
        %v3941 = vunpack.c.l.b16 %v3469
        %v3942 = vunpack.c.l.b16 %v3470
        %v3943 = vunpack.c.l.b16 %v3471
        %v3944 = vunpack.c.l.b16 %v3472
        %v3945 = vunpack.c.l.b16 %v3473
        %v3946 = vunpack.c.l.b16 %v3474
        %v3947 = vunpack.c.l.b16 %v3475
        %v3948 = vunpack.c.l.b16 %v3476
        %v3949 = vunpack.c.l.b16 %v3477
        %v3950 = vunpack.c.l.b16 %v3478
        %v3951 = vunpack.c.l.b16 %v3479
        %v3952 = vunpack.c.l.b16 %v3480
        %v3953 = vunpack.c.l.b16 %v3481
        %v3954 = vunpack.c.l.b16 %v3482
        %v3955 = vunpack.c.l.b16 %v3483
        %v3956 = vunpack.c.l.b16 %v3484
        %v3957 = vunpack.c.l.b16 %v3485
        %v3958 = vunpack.c.l.b16 %v3486
        %v3959 = vunpack.c.l.b16 %v3487
        %v3960 = vunpack.c.l.b16 %v3488
        %v3961 = vunpack.c.l.b16 %v3489
        %v3962 = vunpack.c.l.b16 %v3490
        %v3963 = vunpack.c.l.b16 %v3491
        %v3964 = vunpack.c.l.b16 %v3492
        %v3965 = vunpack.c.l.b16 %v3493
        %v3966 = vunpack.c.l.b16 %v3494
        %v3967 = vunpack.c.l.b16 %v3495
        %v3968 = vunpack.c.l.b16 %v3496
        %v3969 = vunpack.c.l.b16 %v3497
        %v3970 = vunpack.c.l.b16 %v3498
        %v3971 = vunpack.c.l.b16 %v3499
        %v3972 = vunpack.c.l.b16 %v3500
        %v3973 = vunpack.c.l.b16 %v3501
        %v3974 = vunpack.c.l.b16 %v3502
        %v3975 = vunpack.c.l.b16 %v3503
        %v3976 = vunpack.c.l.b16 %v3504
        %v3977 = vunpack.c.l.b16 %v3505
        %v3978 = vunpack.c.l.b16 %v3506
        %v3979 = vunpack.c.l.b16 %v3507
        %v3980 = vunpack.c.l.b16 %v3508
        %v3981 = vunpack.c.l.b16 %v3509
        %v3982 = vunpack.c.l.b16 %v3510
        %v3983 = vunpack.c.l.b16 %v3511
        %v3984 = vunpack.c.l.b16 %v3512
        %v3985 = vunpack.c.l.b16 %v3513
        %v3986 = vunpack.c.l.b16 %v3514
        %v3987 = vunpack.c.l.b16 %v3515
        %v3988 = vunpack.c.l.b16 %v3516
        %v3989 = vunpack.c.l.b16 %v3517
        %v3990 = vunpack.c.l.b16 %v3518
        %v3991 = vunpack.c.l.b16 %v3519
        %v3992 = vunpack.c.l.b16 %v3520
        %v3993 = vunpack.c.l.b16 %v3521
        %v3994 = vunpack.c.l.b16 %v3522
        %v3995 = vunpack.c.l.b16 %v3523
        %v3996 = vunpack.c.l.b16 %v3524
        %v3997 = vunpack.c.l.b16 %v3525
        %v3998 = vunpack.c.l.b16 %v3526
        %v3999 = vunpack.c.l.b16 %v3527
        %v4000 = vunpack.c.l.b16 %v3528
        %v4001 = vunpack.c.l.b16 %v3529
        %v4002 = vunpack.c.l.b16 %v3530
        %v4003 = vunpack.c.l.b16 %v3531
        %v4004 = vunpack.c.l.b16 %v3532
        %v4005 = vunpack.c.l.b16 %v3533
        %v4006 = vunpack.c.l.b16 %v3534
        %v4007 = vunpack.c.l.b16 %v3535
        %v4008 = vpack.c.b16 %v3865, %v3864
        %v4009 = vpack.c.b16 %v3867, %v3866
        %v4010 = vpack.c.b16 %v3869, %v3868
        %v4011 = vpack.c.b16 %v3871, %v3870
        %v4012 = vpack.c.b16 %v3873, %v3872
        %v4013 = vpack.c.b16 %v3875, %v3874
        %v4014 = vpack.c.b16 %v3877, %v3876
        %v4015 = vpack.c.b16 %v3879, %v3878
        %v4016 = vpack.c.b16 %v3881, %v3880
        %v4017 = vpack.c.b16 %v3883, %v3882
        %v4018 = vpack.c.b16 %v3885, %v3884
        %v4019 = vpack.c.b16 %v3887, %v3886
        %v4020 = vpack.c.b16 %v3889, %v3888
        %v4021 = vpack.c.b16 %v3891, %v3890
        %v4022 = vpack.c.b16 %v3893, %v3892
        %v4023 = vpack.c.b16 %v3895, %v3894
        %v4024 = vpack.c.b16 %v3897, %v3896
        %v4025 = vpack.c.b16 %v3899, %v3898
        %v4026 = vpack.c.b16 %v3901, %v3900
        %v4027 = vpack.c.b16 %v3903, %v3902
        %v4028 = vpack.c.b16 %v3905, %v3904
        %v4029 = vpack.c.b16 %v3907, %v3906
        %v4030 = vpack.c.b16 %v3909, %v3908
        %v4031 = vpack.c.b16 %v3911, %v3910
        %v4032 = vpack.c.b16 %v3913, %v3912
        %v4033 = vpack.c.b16 %v3915, %v3914
        %v4034 = vpack.c.b16 %v3917, %v3916
        %v4035 = vpack.c.b16 %v3919, %v3918
        %v4036 = vpack.c.b16 %v3921, %v3920
        %v4037 = vpack.c.b16 %v3923, %v3922
        %v4038 = vpack.c.b16 %v3925, %v3924
        %v4039 = vpack.c.b16 %v3927, %v3926
        %v4040 = vpack.c.b16 %v3929, %v3928
        %v4041 = vpack.c.b16 %v3931, %v3930
        %v4042 = vpack.c.b16 %v3933, %v3932
        %v4043 = vpack.c.b16 %v3935, %v3934
        %v4044 = vpack.c.b16 %v3937, %v3936
        %v4045 = vpack.c.b16 %v3939, %v3938
        %v4046 = vpack.c.b16 %v3941, %v3940
        %v4047 = vpack.c.b16 %v3943, %v3942
        %v4048 = vpack.c.b16 %v3945, %v3944
        %v4049 = vpack.c.b16 %v3947, %v3946
        %v4050 = vpack.c.b16 %v3949, %v3948
        %v4051 = vpack.c.b16 %v3951, %v3950
        %v4052 = vpack.c.b16 %v3953, %v3952
        %v4053 = vpack.c.b16 %v3955, %v3954
        %v4054 = vpack.c.b16 %v3957, %v3956
        %v4055 = vpack.c.b16 %v3959, %v3958
        %v4056 = vpack.c.b16 %v3961, %v3960
        %v4057 = vpack.c.b16 %v3963, %v3962
        %v4058 = vpack.c.b16 %v3965, %v3964
        %v4059 = vpack.c.b16 %v3967, %v3966
        %v4060 = vpack.c.b16 %v3969, %v3968
        %v4061 = vpack.c.b16 %v3971, %v3970
        %v4062 = vpack.c.b16 %v3973, %v3972
        %v4063 = vpack.c.b16 %v3975, %v3974
        %v4064 = vpack.c.b16 %v3977, %v3976
        %v4065 = vpack.c.b16 %v3979, %v3978
        %v4066 = vpack.c.b16 %v3981, %v3980
        %v4067 = vpack.c.b16 %v3983, %v3982
        %v4068 = vpack.c.b16 %v3985, %v3984
        %v4069 = vpack.c.b16 %v3987, %v3986
        %v4070 = vpack.c.b16 %v3989, %v3988
        %v4071 = vpack.c.b16 %v3991, %v3990
        %v4072 = vpack.c.b16 %v3993, %v3992
        %v4073 = vpack.c.b16 %v3995, %v3994
        %v4074 = vpack.c.b16 %v3997, %v3996
        %v4075 = vpack.c.b16 %v3999, %v3998
        %v4076 = vpack.c.b16 %v4001, %v4000
        %v4077 = vpack.c.b16 %v4003, %v4002
        %v4078 = vpack.c.b16 %v4005, %v4004
        %v4079 = vpack.c.b16 %v4007, %v4006
        %4152 = vmatprep.subr.bf16.mxu0 0
        %4153 = vmatpush1.bf16.msra.mxu0 %v4015
        %4154 = vmatprep.subr.bf16.mxu0 0
        %4155 = vmatpush1.bf16.msra.mxu0 %v4014
        %4156 = vmatprep.subr.bf16.mxu0 0
        %4157 = vmatpush1.bf16.msra.mxu0 %v4013
        %4158 = vmatprep.subr.bf16.mxu0 0
        %4159 = vmatpush1.bf16.msra.mxu0 %v4012
        %4160 = vmatprep.subr.bf16.mxu0 0
        %4161 = vmatpush1.bf16.msra.mxu0 %v4011
        %4162 = vmatprep.subr.bf16.mxu0 0
        %4163 = vmatpush1.bf16.msra.mxu0 %v4010
        %4164 = vmatprep.subr.bf16.mxu0 0
        %4165 = vmatpush1.bf16.msra.mxu0 %v4009
        %4166 = vmatprep.subr.bf16.mxu0 0
        %4167 = vmatpush1.bf16.msra.mxu0 %v4008
        %4168 = vmatprep.subr.bf16.mxu0 0
        %4169 = vmatpush2.bf16.msra.mxu0 %v4023
        %4170 = vmatprep.subr.bf16.mxu0 0
        %4171 = vmatpush2.bf16.msra.mxu0 %v4022
        %4172 = vmatprep.subr.bf16.mxu0 0
        %4173 = vmatpush2.bf16.msra.mxu0 %v4021
        %4174 = vmatprep.subr.bf16.mxu0 0
        %4175 = vmatpush2.bf16.msra.mxu0 %v4020
        %4176 = vmatprep.subr.bf16.mxu0 0
        %4177 = vmatpush2.bf16.msra.mxu0 %v4019
        %4178 = vmatprep.subr.bf16.mxu0 0
        %4179 = vmatpush2.bf16.msra.mxu0 %v4018
        %4180 = vmatprep.subr.bf16.mxu0 0
        %4181 = vmatpush2.bf16.msra.mxu0 %v4017
        %4182 = vmatprep.subr.bf16.mxu0 0
        %4183 = vmatpush2.bf16.msra.mxu0 %v4016
        %4184 = vmatprep.mubr.bf16.mxu0 %v3649
        %4185 = vmatmul.mubr.bf16.gmra.mxu0 %v3648
        %v4186 = vpop.f32.mrf.mxu0
        %v4187 = vadd.f32 0.0, %v4186
        %v4188 = vpop.f32.mrf.mxu0
        %v4189 = vpop.f32.mrf.mxu0
        %v4190 = vadd.f32 0.0, %v4189
        %v4191 = vpop.f32.mrf.mxu0
        %4192 = vmatprep.mubr.bf16.mxu0 %v3658
        %4193 = vmatmul.mubr.bf16.gmra.mxu0 %v3657
        %v4194 = vpop.f32.mrf.mxu0
        %v4195 = vadd.f32 0.0, %v4194
        %v4196 = vpop.f32.mrf.mxu0
        %v4197 = vpop.f32.mrf.mxu0
        %v4198 = vadd.f32 0.0, %v4197
        %v4199 = vpop.f32.mrf.mxu0
        %4200 = vmatprep.mubr.bf16.mxu0 %v3667
        %4201 = vmatmul.mubr.bf16.gmra.mxu0 %v3666
        %v4202 = vpop.f32.mrf.mxu0
        %v4203 = vadd.f32 0.0, %v4202
        %v4204 = vpop.f32.mrf.mxu0
        %v4205 = vpop.f32.mrf.mxu0
        %v4206 = vadd.f32 0.0, %v4205
        %v4207 = vpop.f32.mrf.mxu0
        %4208 = vmatprep.mubr.bf16.mxu0 %v3676
        %4209 = vmatmul.mubr.bf16.gmra.mxu0 %v3675
        %v4210 = vpop.f32.mrf.mxu0
        %v4211 = vadd.f32 0.0, %v4210
        %v4212 = vpop.f32.mrf.mxu0
        %v4213 = vpop.f32.mrf.mxu0
        %v4214 = vadd.f32 0.0, %v4213
        %v4215 = vpop.f32.mrf.mxu0
        %4216 = vdwg.mxu0
        %4217 = vmatprep.subr.bf16.mxu0 0
        %4218 = vmatpush1.bf16.msra.mxu0 %v4031
        %4219 = vmatprep.subr.bf16.mxu0 0
        %4220 = vmatpush1.bf16.msra.mxu0 %v4030
        %4221 = vmatprep.subr.bf16.mxu0 0
        %4222 = vmatpush1.bf16.msra.mxu0 %v4029
        %4223 = vmatprep.subr.bf16.mxu0 0
        %4224 = vmatpush1.bf16.msra.mxu0 %v4028
        %4225 = vmatprep.subr.bf16.mxu0 0
        %4226 = vmatpush1.bf16.msra.mxu0 %v4027
        %4227 = vmatprep.subr.bf16.mxu0 0
        %4228 = vmatpush1.bf16.msra.mxu0 %v4026
        %4229 = vmatprep.subr.bf16.mxu0 0
        %4230 = vmatpush1.bf16.msra.mxu0 %v4025
        %4231 = vmatprep.subr.bf16.mxu0 0
        %4232 = vmatpush1.bf16.msra.mxu0 %v4024
        %4233 = vmatprep.subr.bf16.mxu0 0
        %4234 = vmatpush2.bf16.msra.mxu0 %v4039
        %4235 = vmatprep.subr.bf16.mxu0 0
        %4236 = vmatpush2.bf16.msra.mxu0 %v4038
        %4237 = vmatprep.subr.bf16.mxu0 0
        %4238 = vmatpush2.bf16.msra.mxu0 %v4037
        %4239 = vmatprep.subr.bf16.mxu0 0
        %4240 = vmatpush2.bf16.msra.mxu0 %v4036
        %4241 = vmatprep.subr.bf16.mxu0 0
        %4242 = vmatpush2.bf16.msra.mxu0 %v4035
        %4243 = vmatprep.subr.bf16.mxu0 0
        %4244 = vmatpush2.bf16.msra.mxu0 %v4034
        %4245 = vmatprep.subr.bf16.mxu0 0
        %4246 = vmatpush2.bf16.msra.mxu0 %v4033
        %4247 = vmatprep.subr.bf16.mxu0 0
        %4248 = vmatpush2.bf16.msra.mxu0 %v4032
        %4249 = vmatprep.mubr.bf16.mxu0 %v3651
        %4250 = vmatmul.mubr.bf16.gmra.mxu0 %v3650
        %v4251 = vpop.f32.mrf.mxu0
        %v4252 = vadd.f32 %v4187, %v4251
        %v4253 = vpop.f32.mrf.mxu0
        %v4254 = vpop.f32.mrf.mxu0
        %v4255 = vadd.f32 %v4190, %v4254
        %v4256 = vpop.f32.mrf.mxu0
        %4257 = vmatprep.mubr.bf16.mxu0 %v3660
        %4258 = vmatmul.mubr.bf16.gmra.mxu0 %v3659
        %v4259 = vpop.f32.mrf.mxu0
        %v4260 = vadd.f32 %v4195, %v4259
        %v4261 = vpop.f32.mrf.mxu0
        %v4262 = vpop.f32.mrf.mxu0
        %v4263 = vadd.f32 %v4198, %v4262
        %v4264 = vpop.f32.mrf.mxu0
        %4265 = vmatprep.mubr.bf16.mxu0 %v3669
        %4266 = vmatmul.mubr.bf16.gmra.mxu0 %v3668
        %v4267 = vpop.f32.mrf.mxu0
        %v4268 = vadd.f32 %v4203, %v4267
        %v4269 = vpop.f32.mrf.mxu0
        %v4270 = vpop.f32.mrf.mxu0
        %v4271 = vadd.f32 %v4206, %v4270
        %v4272 = vpop.f32.mrf.mxu0
        %4273 = vmatprep.mubr.bf16.mxu0 %v3678
        %4274 = vmatmul.mubr.bf16.gmra.mxu0 %v3677
        %v4275 = vpop.f32.mrf.mxu0
        %v4276 = vadd.f32 %v4211, %v4275
        %v4277 = vpop.f32.mrf.mxu0
        %v4278 = vpop.f32.mrf.mxu0
        %v4279 = vadd.f32 %v4214, %v4278
        %v4280 = vpop.f32.mrf.mxu0
        %4281 = vdwg.mxu0
        %4282 = vmatprep.subr.bf16.mxu0 0
        %4283 = vmatpush1.bf16.msra.mxu0 %v4047
        %4284 = vmatprep.subr.bf16.mxu0 0
        %4285 = vmatpush1.bf16.msra.mxu0 %v4046
        %4286 = vmatprep.subr.bf16.mxu0 0
        %4287 = vmatpush1.bf16.msra.mxu0 %v4045
        %4288 = vmatprep.subr.bf16.mxu0 0
        %4289 = vmatpush1.bf16.msra.mxu0 %v4044
        %4290 = vmatprep.subr.bf16.mxu0 0
        %4291 = vmatpush1.bf16.msra.mxu0 %v4043
        %4292 = vmatprep.subr.bf16.mxu0 0
        %4293 = vmatpush1.bf16.msra.mxu0 %v4042
        %4294 = vmatprep.subr.bf16.mxu0 0
        %4295 = vmatpush1.bf16.msra.mxu0 %v4041
        %4296 = vmatprep.subr.bf16.mxu0 0
        %4297 = vmatpush1.bf16.msra.mxu0 %v4040
        %4298 = vmatprep.subr.bf16.mxu0 0
        %4299 = vmatpush2.bf16.msra.mxu0 %v4055
        %4300 = vmatprep.subr.bf16.mxu0 0
        %4301 = vmatpush2.bf16.msra.mxu0 %v4054
        %4302 = vmatprep.subr.bf16.mxu0 0
        %4303 = vmatpush2.bf16.msra.mxu0 %v4053
        %4304 = vmatprep.subr.bf16.mxu0 0
        %4305 = vmatpush2.bf16.msra.mxu0 %v4052
        %4306 = vmatprep.subr.bf16.mxu0 0
        %4307 = vmatpush2.bf16.msra.mxu0 %v4051
        %4308 = vmatprep.subr.bf16.mxu0 0
        %4309 = vmatpush2.bf16.msra.mxu0 %v4050
        %4310 = vmatprep.subr.bf16.mxu0 0
        %4311 = vmatpush2.bf16.msra.mxu0 %v4049
        %4312 = vmatprep.subr.bf16.mxu0 0
        %4313 = vmatpush2.bf16.msra.mxu0 %v4048
        %4314 = vmatprep.mubr.bf16.mxu0 %v3653
        %4315 = vmatmul.mubr.bf16.gmra.mxu0 %v3652
        %v4316 = vpop.f32.mrf.mxu0
        %v4317 = vadd.f32 %v4252, %v4316
        %v4318 = vpop.f32.mrf.mxu0
        %v4319 = vpop.f32.mrf.mxu0
        %v4320 = vadd.f32 %v4255, %v4319
        %v4321 = vpop.f32.mrf.mxu0
        %4322 = vmatprep.mubr.bf16.mxu0 %v3662
        %4323 = vmatmul.mubr.bf16.gmra.mxu0 %v3661
        %v4324 = vpop.f32.mrf.mxu0
        %v4325 = vadd.f32 %v4260, %v4324
        %v4326 = vpop.f32.mrf.mxu0
        %v4327 = vpop.f32.mrf.mxu0
        %v4328 = vadd.f32 %v4263, %v4327
        %v4329 = vpop.f32.mrf.mxu0
        %4330 = vmatprep.mubr.bf16.mxu0 %v3671
        %4331 = vmatmul.mubr.bf16.gmra.mxu0 %v3670
        %v4332 = vpop.f32.mrf.mxu0
        %v4333 = vadd.f32 %v4268, %v4332
        %v4334 = vpop.f32.mrf.mxu0
        %v4335 = vpop.f32.mrf.mxu0
        %v4336 = vadd.f32 %v4271, %v4335
        %v4337 = vpop.f32.mrf.mxu0
        %4338 = vmatprep.mubr.bf16.mxu0 %v3680
        %4339 = vmatmul.mubr.bf16.gmra.mxu0 %v3679
        %v4340 = vpop.f32.mrf.mxu0
        %v4341 = vadd.f32 %v4276, %v4340
        %v4342 = vpop.f32.mrf.mxu0
        %v4343 = vpop.f32.mrf.mxu0
        %v4344 = vadd.f32 %v4279, %v4343
        %v4345 = vpop.f32.mrf.mxu0
        %4346 = vdwg.mxu0
        %4347 = vmatprep.subr.bf16.mxu0 0
        %4348 = vmatpush1.bf16.msra.mxu0 %v4063
        %4349 = vmatprep.subr.bf16.mxu0 0
        %4350 = vmatpush1.bf16.msra.mxu0 %v4062
        %4351 = vmatprep.subr.bf16.mxu0 0
        %4352 = vmatpush1.bf16.msra.mxu0 %v4061
        %4353 = vmatprep.subr.bf16.mxu0 0
        %4354 = vmatpush1.bf16.msra.mxu0 %v4060
        %4355 = vmatprep.subr.bf16.mxu0 0
        %4356 = vmatpush1.bf16.msra.mxu0 %v4059
        %4357 = vmatprep.subr.bf16.mxu0 0
        %4358 = vmatpush1.bf16.msra.mxu0 %v4058
        %4359 = vmatprep.subr.bf16.mxu0 0
        %4360 = vmatpush1.bf16.msra.mxu0 %v4057
        %4361 = vmatprep.subr.bf16.mxu0 0
        %4362 = vmatpush1.bf16.msra.mxu0 %v4056
        %4363 = vmatprep.subr.bf16.mxu0 0
        %4364 = vmatpush2.bf16.msra.mxu0 %v4071
        %4365 = vmatprep.subr.bf16.mxu0 0
        %4366 = vmatpush2.bf16.msra.mxu0 %v4070
        %4367 = vmatprep.subr.bf16.mxu0 0
        %4368 = vmatpush2.bf16.msra.mxu0 %v4069
        %4369 = vmatprep.subr.bf16.mxu0 0
        %4370 = vmatpush2.bf16.msra.mxu0 %v4068
        %4371 = vmatprep.subr.bf16.mxu0 0
        %4372 = vmatpush2.bf16.msra.mxu0 %v4067
        %4373 = vmatprep.subr.bf16.mxu0 0
        %4374 = vmatpush2.bf16.msra.mxu0 %v4066
        %4375 = vmatprep.subr.bf16.mxu0 0
        %4376 = vmatpush2.bf16.msra.mxu0 %v4065
        %4377 = vmatprep.subr.bf16.mxu0 0
        %4378 = vmatpush2.bf16.msra.mxu0 %v4064
        %4379 = vmatprep.mubr.bf16.mxu0 %v3655
        %4380 = vmatmul.mubr.bf16.gmra.mxu0 %v3654
        %v4381 = vpop.f32.mrf.mxu0
        %v4382 = vadd.f32 %v4317, %v4381
        %v4383 = vpop.f32.mrf.mxu0
        %v4384 = vpop.f32.mrf.mxu0
        %v4385 = vadd.f32 %v4320, %v4384
        %v4386 = vpop.f32.mrf.mxu0
        %4387 = vmatprep.mubr.bf16.mxu0 %v3664
        %4388 = vmatmul.mubr.bf16.gmra.mxu0 %v3663
        %v4389 = vpop.f32.mrf.mxu0
        %v4390 = vadd.f32 %v4325, %v4389
        %v4391 = vpop.f32.mrf.mxu0
        %v4392 = vpop.f32.mrf.mxu0
        %v4393 = vadd.f32 %v4328, %v4392
        %v4394 = vpop.f32.mrf.mxu0
        %4395 = vmatprep.mubr.bf16.mxu0 %v3673
        %4396 = vmatmul.mubr.bf16.gmra.mxu0 %v3672
        %v4397 = vpop.f32.mrf.mxu0
        %v4398 = vadd.f32 %v4333, %v4397
        %v4399 = vpop.f32.mrf.mxu0
        %v4400 = vpop.f32.mrf.mxu0
        %v4401 = vadd.f32 %v4336, %v4400
        %v4402 = vpop.f32.mrf.mxu0
        %4403 = vmatprep.mubr.bf16.mxu0 %v3682
        %4404 = vmatmul.mubr.bf16.gmra.mxu0 %v3681
        %v4405 = vpop.f32.mrf.mxu0
        %v4406 = vadd.f32 %v4341, %v4405
        %v4407 = vpop.f32.mrf.mxu0
        %v4408 = vpop.f32.mrf.mxu0
        %v4409 = vadd.f32 %v4344, %v4408
        %v4410 = vpop.f32.mrf.mxu0
        %4411 = vdwg.mxu0
        %4412 = vmatprep.subr.bf16.mxu0 0
        %4413 = vmatpush1.bf16.msra.mxu0 %v4079
        %4414 = vmatprep.subr.bf16.mxu0 0
        %4415 = vmatpush1.bf16.msra.mxu0 %v4078
        %4416 = vmatprep.subr.bf16.mxu0 0
        %4417 = vmatpush1.bf16.msra.mxu0 %v4077
        %4418 = vmatprep.subr.bf16.mxu0 0
        %4419 = vmatpush1.bf16.msra.mxu0 %v4076
        %4420 = vmatprep.subr.bf16.mxu0 0
        %4421 = vmatpush1.bf16.msra.mxu0 %v4075
        %4422 = vmatprep.subr.bf16.mxu0 0
        %4423 = vmatpush1.bf16.msra.mxu0 %v4074
        %4424 = vmatprep.subr.bf16.mxu0 0
        %4425 = vmatpush1.bf16.msra.mxu0 %v4073
        %4426 = vmatprep.subr.bf16.mxu0 0
        %4427 = vmatpush1.bf16.msra.mxu0 %v4072
        %4428 = vmatprep.subr.bf16.mxu0 0
        %4429 = vmatpush2.bf16.msra.mxu0 0
        %4430 = vmatprep.subr.bf16.mxu0 0
        %4431 = vmatpush2.bf16.msra.mxu0 0
        %4432 = vmatprep.subr.bf16.mxu0 0
        %4433 = vmatpush2.bf16.msra.mxu0 0
        %4434 = vmatprep.subr.bf16.mxu0 0
        %4435 = vmatpush2.bf16.msra.mxu0 0
        %4436 = vmatprep.subr.bf16.mxu0 0
        %4437 = vmatpush2.bf16.msra.mxu0 0
        %4438 = vmatprep.subr.bf16.mxu0 0
        %4439 = vmatpush2.bf16.msra.mxu0 0
        %4440 = vmatprep.subr.bf16.mxu0 0
        %4441 = vmatpush2.bf16.msra.mxu0 0
        %4442 = vmatprep.subr.bf16.mxu0 0
        %4443 = vmatpush2.bf16.msra.mxu0 0
        %4444 = vmatprep.mubr.bf16.mxu0 0
        %4445 = vmatmul.mubr.bf16.gmra.mxu0 %v3656
        %v4446 = vpop.f32.mrf.mxu0
        %v4447 = vadd.f32 %v4382, %v4446
        %v4448 = vpop.f32.mrf.mxu0
        %v4449 = vpop.f32.mrf.mxu0
        %v4450 = vadd.f32 %v4385, %v4449
        %v4451 = vpop.f32.mrf.mxu0
        %4452 = vmatprep.mubr.bf16.mxu0 0
        %4453 = vmatmul.mubr.bf16.gmra.mxu0 %v3665
        %v4454 = vpop.f32.mrf.mxu0
        %v4455 = vadd.f32 %v4390, %v4454
        %v4456 = vpop.f32.mrf.mxu0
        %v4457 = vpop.f32.mrf.mxu0
        %v4458 = vadd.f32 %v4393, %v4457
        %v4459 = vpop.f32.mrf.mxu0
        %4460 = vmatprep.mubr.bf16.mxu0 0
        %4461 = vmatmul.mubr.bf16.gmra.mxu0 %v3674
        %v4462 = vpop.f32.mrf.mxu0
        %v4463 = vadd.f32 %v4398, %v4462
        %v4464 = vpop.f32.mrf.mxu0
        %v4465 = vpop.f32.mrf.mxu0
        %v4466 = vadd.f32 %v4401, %v4465
        %v4467 = vpop.f32.mrf.mxu0
        %4468 = vmatprep.mubr.bf16.mxu0 0
        %4469 = vmatmul.mubr.bf16.gmra.mxu0 %v3683
        %v4470 = vpop.f32.mrf.mxu0
        %v4471 = vadd.f32 %v4406, %v4470
        %v4472 = vpop.f32.mrf.mxu0
        %v4473 = vpop.f32.mrf.mxu0
        %v4474 = vadd.f32 %v4409, %v4473
        %v4475 = vpop.f32.mrf.mxu0
        %4476 = vdwg.mxu0
        %v4477 = vld [vmem:[%s333 + $0x1] sm:$0x1]
        %v4478 = vlaneseq
        %v4479 = vshrl.u32 %v4478, 7
        %v4480 = vsub.s32 0, %v4479
        %v4481 = vrot.slane %v4477, %v4480
        %v4482 = vmul.f32 %v4447, %v4481
        %v4483 = vmul.f32 %v4450, %v4481
        %v4484 = vmul.f32 %v4455, %v4481
        %v4485 = vmul.f32 %v4458, %v4481
        %v4486 = vmul.f32 %v4463, %v4481
        %v4487 = vmul.f32 %v4466, %v4481
        %v4488 = vmul.f32 %v4471, %v4481
        %v4489 = vmul.f32 %v4474, %v4481
        %v4490 = vld [vmem:[%s342 + $0x1] sm:$0x1]
        %v4491 = vlaneseq
        %v4492 = vshrl.u32 %v4491, 7
        %v4493 = vsub.s32 0, %v4492
        %v4494 = vrot.slane %v4490, %v4493
        %v4495 = vadd.f32 %v4482, %v4494
        %v4496 = vadd.f32 %v4483, %v4494
        %v4497 = vadd.f32 %v4484, %v4494
        %v4498 = vadd.f32 %v4485, %v4494
        %v4499 = vadd.f32 %v4486, %v4494
        %v4500 = vadd.f32 %v4487, %v4494
        %v4501 = vadd.f32 %v4488, %v4494
        %v4502 = vadd.f32 %v4489, %v4494
        %v4503 = vmul.f32 %v4495, 0.5
        %v4504 = vmul.f32 %v4496, 0.5
        %v4505 = vmul.f32 %v4497, 0.5
        %v4506 = vmul.f32 %v4498, 0.5
        %v4507 = vmul.f32 %v4499, 0.5
        %v4508 = vmul.f32 %v4500, 0.5
        %v4509 = vmul.f32 %v4501, 0.5
        %v4510 = vmul.f32 %v4502, 0.5
        %v4511 = vtanh.pop %v4503
        %v4512 = vtanh.pop %v4504
        %v4513 = vtanh.pop %v4505
        %v4514 = vtanh.pop %v4506
        %v4515 = vtanh.pop %v4507
        %v4516 = vtanh.pop %v4508
        %v4517 = vtanh.pop %v4509
        %v4518 = vtanh.pop %v4510
        %v4519 = vmul.f32 %v4511, 0.5
        %v4520 = vmul.f32 %v4512, 0.5
        %v4521 = vmul.f32 %v4513, 0.5
        %v4522 = vmul.f32 %v4514, 0.5
        %v4523 = vmul.f32 %v4515, 0.5
        %v4524 = vmul.f32 %v4516, 0.5
        %v4525 = vmul.f32 %v4517, 0.5
        %v4526 = vmul.f32 %v4518, 0.5
        %v4527 = vadd.f32 %v4519, 0.5
        %v4528 = vadd.f32 %v4520, 0.5
        %v4529 = vadd.f32 %v4521, 0.5
        %v4530 = vadd.f32 %v4522, 0.5
        %v4531 = vadd.f32 %v4523, 0.5
        %v4532 = vadd.f32 %v4524, 0.5
        %v4533 = vadd.f32 %v4525, 0.5
        %v4534 = vadd.f32 %v4526, 0.5
        %v4535 = vmul.f32 %v4495, %v4527
        %v4536 = vmul.f32 %v4496, %v4528
        %v4537 = vmul.f32 %v4497, %v4529
        %v4538 = vmul.f32 %v4498, %v4530
        %v4539 = vmul.f32 %v4499, %v4531
        %v4540 = vmul.f32 %v4500, %v4532
        %v4541 = vmul.f32 %v4501, %v4533
        %v4542 = vmul.f32 %v4502, %v4534
        %v4543 = vpack.c.bf16 %v4535, %v4535
        %v4544 = vpack.c.bf16 %v4536, %v4536
        %v4545 = vpack.c.bf16 %v4537, %v4537
        %v4546 = vpack.c.bf16 %v4538, %v4538
        %v4547 = vpack.c.bf16 %v4539, %v4539
        %v4548 = vpack.c.bf16 %v4540, %v4540
        %v4549 = vpack.c.bf16 %v4541, %v4541
        %v4550 = vpack.c.bf16 %v4542, %v4542
        %v4559 = vunpack.c.l.b16 %v4543
        %v4560 = vunpack.c.l.b16 %v4544
        %v4561 = vunpack.c.l.b16 %v4545
        %v4562 = vunpack.c.l.b16 %v4546
        %v4563 = vunpack.c.l.b16 %v4547
        %v4564 = vunpack.c.l.b16 %v4548
        %v4565 = vunpack.c.l.b16 %v4549
        %v4566 = vunpack.c.l.b16 %v4550
        %v4567 = vpack.c.b16 %v4559, %v4559
        %v4568 = vpack.c.b16 %v4560, %v4560
        %v4569 = vpack.c.b16 %v4561, %v4561
        %v4570 = vpack.c.b16 %v4562, %v4562
        %v4571 = vpack.c.b16 %v4563, %v4563
        %v4572 = vpack.c.b16 %v4564, %v4564
        %v4573 = vpack.c.b16 %v4565, %v4565
        %v4574 = vpack.c.b16 %v4566, %v4566
        %v4576 = vshrl.u32 %v4567, 16
        %v4578 = vrot.slane %v4576, 7
        %v4579 = vshll.u32 %v4567, 16
        %v4581 = vor.u32 %v4578, %v4579
        %v4582 = vrot.slane %v4578, 4
        %v4584 = vshrl.u32 %v4568, 16
        %v4586 = vrot.slane %v4584, 7
        %v4587 = vshll.u32 %v4568, 16
        %v4589 = vor.u32 %v4586, %v4587
        %v4590 = vrot.slane %v4586, 4
        %v4592 = vshrl.u32 %v4569, 16
        %v4594 = vrot.slane %v4592, 7
        %v4595 = vshll.u32 %v4569, 16
        %v4597 = vor.u32 %v4594, %v4595
        %v4598 = vrot.slane %v4594, 4
        %v4600 = vshrl.u32 %v4570, 16
        %v4602 = vrot.slane %v4600, 7
        %v4603 = vshll.u32 %v4570, 16
        %v4605 = vor.u32 %v4602, %v4603
        %v4606 = vrot.slane %v4602, 4
        %v4608 = vshrl.u32 %v4571, 16
        %v4610 = vrot.slane %v4608, 7
        %v4611 = vshll.u32 %v4571, 16
        %v4613 = vor.u32 %v4610, %v4611
        %v4614 = vrot.slane %v4610, 4
        %v4616 = vshrl.u32 %v4572, 16
        %v4618 = vrot.slane %v4616, 7
        %v4619 = vshll.u32 %v4572, 16
        %v4621 = vor.u32 %v4618, %v4619
        %v4622 = vrot.slane %v4618, 4
        %v4624 = vshrl.u32 %v4573, 16
        %v4626 = vrot.slane %v4624, 7
        %v4627 = vshll.u32 %v4573, 16
        %v4629 = vor.u32 %v4626, %v4627
        %v4630 = vrot.slane %v4626, 4
        %v4632 = vshrl.u32 %v4574, 16
        %v4634 = vrot.slane %v4632, 7
        %v4635 = vshll.u32 %v4574, 16
        %v4637 = vor.u32 %v4634, %v4635
        %v4638 = vrot.slane %v4634, 4
        %v4655 = vld [vmem:[%s494] sm:$0xf]
        %v4656 = vsel %vm2580, %v4581, %v4655
        %4657 = vst [vmem:[%s494] sm:$0xf] %v4656
        %v4658 = vld [vmem:[%s494 + $0x4] sm:$0x1]
        %v4659 = vsel %vm2585, %v4582, %v4658
        %4660 = vst [vmem:[%s494 + $0x4] sm:$0x1] %v4659
        %v4661 = vld [vmem:[%s494 + $0x8] sm:$0xf]
        %v4662 = vsel %vm2580, %v4589, %v4661
        %4663 = vst [vmem:[%s494 + $0x8] sm:$0xf] %v4662
        %v4664 = vld [vmem:[%s494 + $0xc] sm:$0x1]
        %v4665 = vsel %vm2585, %v4590, %v4664
        %4666 = vst [vmem:[%s494 + $0xc] sm:$0x1] %v4665
        %v4667 = vld [vmem:[%s494 + $0x10] sm:$0xf]
        %v4668 = vsel %vm2580, %v4597, %v4667
        %4669 = vst [vmem:[%s494 + $0x10] sm:$0xf] %v4668
        %v4670 = vld [vmem:[%s494 + $0x14] sm:$0x1]
        %v4671 = vsel %vm2585, %v4598, %v4670
        %4672 = vst [vmem:[%s494 + $0x14] sm:$0x1] %v4671
        %v4673 = vld [vmem:[%s494 + $0x18] sm:$0xf]
        %v4674 = vsel %vm2580, %v4605, %v4673
        %4675 = vst [vmem:[%s494 + $0x18] sm:$0xf] %v4674
        %v4676 = vld [vmem:[%s494 + $0x1c] sm:$0x1]
        %v4677 = vsel %vm2585, %v4606, %v4676
        %4678 = vst [vmem:[%s494 + $0x1c] sm:$0x1] %v4677
        %v4679 = vld [vmem:[%s494 + $0x20] sm:$0xf]
        %v4680 = vsel %vm2580, %v4613, %v4679
        %4681 = vst [vmem:[%s494 + $0x20] sm:$0xf] %v4680
        %v4682 = vld [vmem:[%s494 + $0x24] sm:$0x1]
        %v4683 = vsel %vm2585, %v4614, %v4682
        %4684 = vst [vmem:[%s494 + $0x24] sm:$0x1] %v4683
        %v4685 = vld [vmem:[%s494 + $0x28] sm:$0xf]
        %v4686 = vsel %vm2580, %v4621, %v4685
        %4687 = vst [vmem:[%s494 + $0x28] sm:$0xf] %v4686
        %v4688 = vld [vmem:[%s494 + $0x2c] sm:$0x1]
        %v4689 = vsel %vm2585, %v4622, %v4688
        %4690 = vst [vmem:[%s494 + $0x2c] sm:$0x1] %v4689
        %v4691 = vld [vmem:[%s494 + $0x30] sm:$0xf]
        %v4692 = vsel %vm2580, %v4629, %v4691
        %4693 = vst [vmem:[%s494 + $0x30] sm:$0xf] %v4692
        %v4694 = vld [vmem:[%s494 + $0x34] sm:$0x1]
        %v4695 = vsel %vm2585, %v4630, %v4694
        %4696 = vst [vmem:[%s494 + $0x34] sm:$0x1] %v4695
        %v4697 = vld [vmem:[%s494 + $0x38] sm:$0xf]
        %v4698 = vsel %vm2580, %v4637, %v4697
        %4699 = vst [vmem:[%s494 + $0x38] sm:$0xf] %v4698
        %v4700 = vld [vmem:[%s494 + $0x3c] sm:$0x1]
        %v4701 = vsel %vm2585, %v4638, %v4700
        %4702 = vst [vmem:[%s494 + $0x3c] sm:$0x1] %v4701
        %v4703 = vld [vmem:[#allocation2] sm:$0xf]
        %v4704 = vld [vmem:[#allocation2 + $0x8] sm:$0xf]
        %v4705 = vld [vmem:[#allocation2 + $0x10] sm:$0xf]
        %v4706 = vld [vmem:[#allocation2 + $0x18] sm:$0xf]
        %v4707 = vld [vmem:[#allocation2 + $0x20] sm:$0xf]
        %v4708 = vld [vmem:[#allocation2 + $0x28] sm:$0xf]
        %v4709 = vld [vmem:[#allocation2 + $0x30] sm:$0xf]
        %v4710 = vld [vmem:[#allocation2 + $0x38] sm:$0xf]
        %4711 = vst [vmem:[#allocation3] sm:$0xf] %v4703
        %4712 = vst [vmem:[#allocation3 + $0x24] sm:$0xf] %v4704
        %4713 = vst [vmem:[#allocation3 + $0x48] sm:$0xf] %v4705
        %4714 = vst [vmem:[#allocation3 + $0x6c] sm:$0xf] %v4706
        %4715 = vst [vmem:[#allocation3 + $0x90] sm:$0xf] %v4707
        %4716 = vst [vmem:[#allocation3 + $0xb4] sm:$0xf] %v4708
        %4717 = vst [vmem:[#allocation3 + $0xd8] sm:$0xf] %v4709
        %4718 = vst [vmem:[#allocation3 + $0xfc] sm:$0xf] %v4710
        %v4719 = vld [vmem:[#allocation2] sm:$0xf]
        %v4720 = vld [vmem:[#allocation2 + $0x4] sm:$0x1]
        %v4721 = vld [vmem:[#allocation2 + $0x8] sm:$0xf]
        %v4722 = vld [vmem:[#allocation2 + $0xc] sm:$0x1]
        %v4723 = vld [vmem:[#allocation2 + $0x10] sm:$0xf]
        %v4724 = vld [vmem:[#allocation2 + $0x14] sm:$0x1]
        %v4725 = vld [vmem:[#allocation2 + $0x18] sm:$0xf]
        %v4726 = vld [vmem:[#allocation2 + $0x1c] sm:$0x1]
        %v4727 = vld [vmem:[#allocation2 + $0x20] sm:$0xf]
        %v4728 = vld [vmem:[#allocation2 + $0x24] sm:$0x1]
        %v4729 = vld [vmem:[#allocation2 + $0x28] sm:$0xf]
        %v4730 = vld [vmem:[#allocation2 + $0x2c] sm:$0x1]
        %v4731 = vld [vmem:[#allocation2 + $0x30] sm:$0xf]
        %v4732 = vld [vmem:[#allocation2 + $0x34] sm:$0x1]
        %v4733 = vld [vmem:[#allocation2 + $0x38] sm:$0xf]
        %v4734 = vld [vmem:[#allocation2 + $0x3c] sm:$0x1]
        %v4736 = vshrl.u32 %v4719, 16
        %v4738 = vrot.slane %v4736, 4
        %v4739 = vshll.u32 %v4719, 16
        %v4741 = vrot.slane %v4739, 5
        %v4742 = vor.u32 %v4738, %v4741
        %v4743 = vrot.slane %v4742, 4
        %v4745 = vshll.u32 %v4720, 16
        %v4747 = vrot.slane %v4745, 5
        %v4748 = vsel %vm583, %v4743, %v4747
        %v4750 = vshrl.u32 %v4721, 16
        %v4752 = vrot.slane %v4750, 4
        %v4753 = vshll.u32 %v4721, 16
        %v4755 = vrot.slane %v4753, 5
        %v4756 = vor.u32 %v4752, %v4755
        %v4757 = vrot.slane %v4756, 4
        %v4759 = vshll.u32 %v4722, 16
        %v4761 = vrot.slane %v4759, 5
        %v4762 = vsel %vm583, %v4757, %v4761
        %v4764 = vshrl.u32 %v4723, 16
        %v4766 = vrot.slane %v4764, 4
        %v4767 = vshll.u32 %v4723, 16
        %v4769 = vrot.slane %v4767, 5
        %v4770 = vor.u32 %v4766, %v4769
        %v4771 = vrot.slane %v4770, 4
        %v4773 = vshll.u32 %v4724, 16
        %v4775 = vrot.slane %v4773, 5
        %v4776 = vsel %vm583, %v4771, %v4775
        %v4778 = vshrl.u32 %v4725, 16
        %v4780 = vrot.slane %v4778, 4
        %v4781 = vshll.u32 %v4725, 16
        %v4783 = vrot.slane %v4781, 5
        %v4784 = vor.u32 %v4780, %v4783
        %v4785 = vrot.slane %v4784, 4
        %v4787 = vshll.u32 %v4726, 16
        %v4789 = vrot.slane %v4787, 5
        %v4790 = vsel %vm583, %v4785, %v4789
        %v4792 = vshrl.u32 %v4727, 16
        %v4794 = vrot.slane %v4792, 4
        %v4795 = vshll.u32 %v4727, 16
        %v4797 = vrot.slane %v4795, 5
        %v4798 = vor.u32 %v4794, %v4797
        %v4799 = vrot.slane %v4798, 4
        %v4801 = vshll.u32 %v4728, 16
        %v4803 = vrot.slane %v4801, 5
        %v4804 = vsel %vm583, %v4799, %v4803
        %v4806 = vshrl.u32 %v4729, 16
        %v4808 = vrot.slane %v4806, 4
        %v4809 = vshll.u32 %v4729, 16
        %v4811 = vrot.slane %v4809, 5
        %v4812 = vor.u32 %v4808, %v4811
        %v4813 = vrot.slane %v4812, 4
        %v4815 = vshll.u32 %v4730, 16
        %v4817 = vrot.slane %v4815, 5
        %v4818 = vsel %vm583, %v4813, %v4817
        %v4820 = vshrl.u32 %v4731, 16
        %v4822 = vrot.slane %v4820, 4
        %v4823 = vshll.u32 %v4731, 16
        %v4825 = vrot.slane %v4823, 5
        %v4826 = vor.u32 %v4822, %v4825
        %v4827 = vrot.slane %v4826, 4
        %v4829 = vshll.u32 %v4732, 16
        %v4831 = vrot.slane %v4829, 5
        %v4832 = vsel %vm583, %v4827, %v4831
        %v4834 = vshrl.u32 %v4733, 16
        %v4836 = vrot.slane %v4834, 4
        %v4837 = vshll.u32 %v4733, 16
        %v4839 = vrot.slane %v4837, 5
        %v4840 = vor.u32 %v4836, %v4839
        %v4841 = vrot.slane %v4840, 4
        %v4843 = vshll.u32 %v4734, 16
        %v4845 = vrot.slane %v4843, 5
        %v4846 = vsel %vm583, %v4841, %v4845
        %4855 = vst [vmem:[#allocation3 + $0x4] sm:$0xf] %v4748
        %4856 = vst [vmem:[#allocation3 + $0x28] sm:$0xf] %v4762
        %4857 = vst [vmem:[#allocation3 + $0x4c] sm:$0xf] %v4776
        %4858 = vst [vmem:[#allocation3 + $0x70] sm:$0xf] %v4790
        %4859 = vst [vmem:[#allocation3 + $0x94] sm:$0xf] %v4804
        %4860 = vst [vmem:[#allocation3 + $0xb8] sm:$0xf] %v4818
        %4861 = vst [vmem:[#allocation3 + $0xdc] sm:$0xf] %v4832
        %4862 = vst [vmem:[#allocation3 + $0x100] sm:$0xf] %v4846
        %v4863 = vld [vmem:[#allocation2] sm:$0xe]
        %v4864 = vld [vmem:[#allocation2 + $0x4] sm:$0x1]
        %v4865 = vld [vmem:[#allocation2 + $0x8] sm:$0xe]
        %v4866 = vld [vmem:[#allocation2 + $0xc] sm:$0x1]
        %v4867 = vld [vmem:[#allocation2 + $0x10] sm:$0xe]
        %v4868 = vld [vmem:[#allocation2 + $0x14] sm:$0x1]
        %v4869 = vld [vmem:[#allocation2 + $0x18] sm:$0xe]
        %v4870 = vld [vmem:[#allocation2 + $0x1c] sm:$0x1]
        %v4871 = vld [vmem:[#allocation2 + $0x20] sm:$0xe]
        %v4872 = vld [vmem:[#allocation2 + $0x24] sm:$0x1]
        %v4873 = vld [vmem:[#allocation2 + $0x28] sm:$0xe]
        %v4874 = vld [vmem:[#allocation2 + $0x2c] sm:$0x1]
        %v4875 = vld [vmem:[#allocation2 + $0x30] sm:$0xe]
        %v4876 = vld [vmem:[#allocation2 + $0x34] sm:$0x1]
        %v4877 = vld [vmem:[#allocation2 + $0x38] sm:$0xe]
        %v4878 = vld [vmem:[#allocation2 + $0x3c] sm:$0x1]
        %v4895 = vrot.slane %v4863, 5
        %v4896 = vrot.slane %v4895, 4
        %v4897 = vrot.slane %v4864, 5
        %v4898 = vsel %vm746, %v4896, %v4897
        %v4899 = vrot.slane %v4865, 5
        %v4900 = vrot.slane %v4899, 4
        %v4901 = vrot.slane %v4866, 5
        %v4902 = vsel %vm746, %v4900, %v4901
        %v4903 = vrot.slane %v4867, 5
        %v4904 = vrot.slane %v4903, 4
        %v4905 = vrot.slane %v4868, 5
        %v4906 = vsel %vm746, %v4904, %v4905
        %v4907 = vrot.slane %v4869, 5
        %v4908 = vrot.slane %v4907, 4
        %v4909 = vrot.slane %v4870, 5
        %v4910 = vsel %vm746, %v4908, %v4909
        %v4911 = vrot.slane %v4871, 5
        %v4912 = vrot.slane %v4911, 4
        %v4913 = vrot.slane %v4872, 5
        %v4914 = vsel %vm746, %v4912, %v4913
        %v4915 = vrot.slane %v4873, 5
        %v4916 = vrot.slane %v4915, 4
        %v4917 = vrot.slane %v4874, 5
        %v4918 = vsel %vm746, %v4916, %v4917
        %v4919 = vrot.slane %v4875, 5
        %v4920 = vrot.slane %v4919, 4
        %v4921 = vrot.slane %v4876, 5
        %v4922 = vsel %vm746, %v4920, %v4921
        %v4923 = vrot.slane %v4877, 5
        %v4924 = vrot.slane %v4923, 4
        %v4925 = vrot.slane %v4878, 5
        %v4926 = vsel %vm746, %v4924, %v4925
        %4935 = vst [vmem:[#allocation3 + $0x8] sm:$0xf] %v4898
        %4936 = vst [vmem:[#allocation3 + $0x2c] sm:$0xf] %v4902
        %4937 = vst [vmem:[#allocation3 + $0x50] sm:$0xf] %v4906
        %4938 = vst [vmem:[#allocation3 + $0x74] sm:$0xf] %v4910
        %4939 = vst [vmem:[#allocation3 + $0x98] sm:$0xf] %v4914
        %4940 = vst [vmem:[#allocation3 + $0xbc] sm:$0xf] %v4918
        %4941 = vst [vmem:[#allocation3 + $0xe0] sm:$0xf] %v4922
        %4942 = vst [vmem:[#allocation3 + $0x104] sm:$0xf] %v4926
        %v4943 = vld [vmem:[%s494] sm:$0xf]
        %v4944 = vld [vmem:[%s494 + $0x8] sm:$0xf]
        %v4945 = vld [vmem:[%s494 + $0x10] sm:$0xf]
        %v4946 = vld [vmem:[%s494 + $0x18] sm:$0xf]
        %v4947 = vld [vmem:[%s494 + $0x20] sm:$0xf]
        %v4948 = vld [vmem:[%s494 + $0x28] sm:$0xf]
        %v4949 = vld [vmem:[%s494 + $0x30] sm:$0xf]
        %v4950 = vld [vmem:[%s494 + $0x38] sm:$0xf]
        %4951 = vst [vmem:[#allocation3 + $0xc] sm:$0xf] %v4943
        %4952 = vst [vmem:[#allocation3 + $0x30] sm:$0xf] %v4944
        %4953 = vst [vmem:[#allocation3 + $0x54] sm:$0xf] %v4945
        %4954 = vst [vmem:[#allocation3 + $0x78] sm:$0xf] %v4946
        %4955 = vst [vmem:[#allocation3 + $0x9c] sm:$0xf] %v4947
        %4956 = vst [vmem:[#allocation3 + $0xc0] sm:$0xf] %v4948
        %4957 = vst [vmem:[#allocation3 + $0xe4] sm:$0xf] %v4949
        %4958 = vst [vmem:[#allocation3 + $0x108] sm:$0xf] %v4950
        %v4959 = vld [vmem:[%s494] sm:$0xf]
        %v4960 = vld [vmem:[%s494 + $0x4] sm:$0x1]
        %v4961 = vld [vmem:[%s494 + $0x8] sm:$0xf]
        %v4962 = vld [vmem:[%s494 + $0xc] sm:$0x1]
        %v4963 = vld [vmem:[%s494 + $0x10] sm:$0xf]
        %v4964 = vld [vmem:[%s494 + $0x14] sm:$0x1]
        %v4965 = vld [vmem:[%s494 + $0x18] sm:$0xf]
        %v4966 = vld [vmem:[%s494 + $0x1c] sm:$0x1]
        %v4967 = vld [vmem:[%s494 + $0x20] sm:$0xf]
        %v4968 = vld [vmem:[%s494 + $0x24] sm:$0x1]
        %v4969 = vld [vmem:[%s494 + $0x28] sm:$0xf]
        %v4970 = vld [vmem:[%s494 + $0x2c] sm:$0x1]
        %v4971 = vld [vmem:[%s494 + $0x30] sm:$0xf]
        %v4972 = vld [vmem:[%s494 + $0x34] sm:$0x1]
        %v4973 = vld [vmem:[%s494 + $0x38] sm:$0xf]
        %v4974 = vld [vmem:[%s494 + $0x3c] sm:$0x1]
        %v4976 = vshrl.u32 %v4959, 16
        %v4978 = vrot.slane %v4976, 4
        %v4979 = vshll.u32 %v4959, 16
        %v4981 = vrot.slane %v4979, 5
        %v4982 = vor.u32 %v4978, %v4981
        %v4983 = vrot.slane %v4982, 4
        %v4985 = vshll.u32 %v4960, 16
        %v4987 = vrot.slane %v4985, 5
        %v4988 = vsel %vm583, %v4983, %v4987
        %v4990 = vshrl.u32 %v4961, 16
        %v4992 = vrot.slane %v4990, 4
        %v4993 = vshll.u32 %v4961, 16
        %v4995 = vrot.slane %v4993, 5
        %v4996 = vor.u32 %v4992, %v4995
        %v4997 = vrot.slane %v4996, 4
        %v4999 = vshll.u32 %v4962, 16
        %v5001 = vrot.slane %v4999, 5
        %v5002 = vsel %vm583, %v4997, %v5001
        %v5004 = vshrl.u32 %v4963, 16
        %v5006 = vrot.slane %v5004, 4
        %v5007 = vshll.u32 %v4963, 16
        %v5009 = vrot.slane %v5007, 5
        %v5010 = vor.u32 %v5006, %v5009
        %v5011 = vrot.slane %v5010, 4
        %v5013 = vshll.u32 %v4964, 16
        %v5015 = vrot.slane %v5013, 5
        %v5016 = vsel %vm583, %v5011, %v5015
        %v5018 = vshrl.u32 %v4965, 16
        %v5020 = vrot.slane %v5018, 4
        %v5021 = vshll.u32 %v4965, 16
        %v5023 = vrot.slane %v5021, 5
        %v5024 = vor.u32 %v5020, %v5023
        %v5025 = vrot.slane %v5024, 4
        %v5027 = vshll.u32 %v4966, 16
        %v5029 = vrot.slane %v5027, 5
        %v5030 = vsel %vm583, %v5025, %v5029
        %v5032 = vshrl.u32 %v4967, 16
        %v5034 = vrot.slane %v5032, 4
        %v5035 = vshll.u32 %v4967, 16
        %v5037 = vrot.slane %v5035, 5
        %v5038 = vor.u32 %v5034, %v5037
        %v5039 = vrot.slane %v5038, 4
        %v5041 = vshll.u32 %v4968, 16
        %v5043 = vrot.slane %v5041, 5
        %v5044 = vsel %vm583, %v5039, %v5043
        %v5046 = vshrl.u32 %v4969, 16
        %v5048 = vrot.slane %v5046, 4
        %v5049 = vshll.u32 %v4969, 16
        %v5051 = vrot.slane %v5049, 5
        %v5052 = vor.u32 %v5048, %v5051
        %v5053 = vrot.slane %v5052, 4
        %v5055 = vshll.u32 %v4970, 16
        %v5057 = vrot.slane %v5055, 5
        %v5058 = vsel %vm583, %v5053, %v5057
        %v5060 = vshrl.u32 %v4971, 16
        %v5062 = vrot.slane %v5060, 4
        %v5063 = vshll.u32 %v4971, 16
        %v5065 = vrot.slane %v5063, 5
        %v5066 = vor.u32 %v5062, %v5065
        %v5067 = vrot.slane %v5066, 4
        %v5069 = vshll.u32 %v4972, 16
        %v5071 = vrot.slane %v5069, 5
        %v5072 = vsel %vm583, %v5067, %v5071
        %v5074 = vshrl.u32 %v4973, 16
        %v5076 = vrot.slane %v5074, 4
        %v5077 = vshll.u32 %v4973, 16
        %v5079 = vrot.slane %v5077, 5
        %v5080 = vor.u32 %v5076, %v5079
        %v5081 = vrot.slane %v5080, 4
        %v5083 = vshll.u32 %v4974, 16
        %v5085 = vrot.slane %v5083, 5
        %v5086 = vsel %vm583, %v5081, %v5085
        %5095 = vst [vmem:[#allocation3 + $0x10] sm:$0xf] %v4988
        %5096 = vst [vmem:[#allocation3 + $0x34] sm:$0xf] %v5002
        %5097 = vst [vmem:[#allocation3 + $0x58] sm:$0xf] %v5016
        %5098 = vst [vmem:[#allocation3 + $0x7c] sm:$0xf] %v5030
        %5099 = vst [vmem:[#allocation3 + $0xa0] sm:$0xf] %v5044
        %5100 = vst [vmem:[#allocation3 + $0xc4] sm:$0xf] %v5058
        %5101 = vst [vmem:[#allocation3 + $0xe8] sm:$0xf] %v5072
        %5102 = vst [vmem:[#allocation3 + $0x10c] sm:$0xf] %v5086
        %v5103 = vld [vmem:[%s494] sm:$0xe]
        %v5104 = vld [vmem:[%s494 + $0x4] sm:$0x1]
        %v5105 = vld [vmem:[%s494 + $0x8] sm:$0xe]
        %v5106 = vld [vmem:[%s494 + $0xc] sm:$0x1]
        %v5107 = vld [vmem:[%s494 + $0x10] sm:$0xe]
        %v5108 = vld [vmem:[%s494 + $0x14] sm:$0x1]
        %v5109 = vld [vmem:[%s494 + $0x18] sm:$0xe]
        %v5110 = vld [vmem:[%s494 + $0x1c] sm:$0x1]
        %v5111 = vld [vmem:[%s494 + $0x20] sm:$0xe]
        %v5112 = vld [vmem:[%s494 + $0x24] sm:$0x1]
        %v5113 = vld [vmem:[%s494 + $0x28] sm:$0xe]
        %v5114 = vld [vmem:[%s494 + $0x2c] sm:$0x1]
        %v5115 = vld [vmem:[%s494 + $0x30] sm:$0xe]
        %v5116 = vld [vmem:[%s494 + $0x34] sm:$0x1]
        %v5117 = vld [vmem:[%s494 + $0x38] sm:$0xe]
        %v5118 = vld [vmem:[%s494 + $0x3c] sm:$0x1]
        %v5135 = vrot.slane %v5103, 5
        %v5136 = vrot.slane %v5135, 4
        %v5137 = vrot.slane %v5104, 5
        %v5138 = vsel %vm746, %v5136, %v5137
        %v5139 = vrot.slane %v5105, 5
        %v5140 = vrot.slane %v5139, 4
        %v5141 = vrot.slane %v5106, 5
        %v5142 = vsel %vm746, %v5140, %v5141
        %v5143 = vrot.slane %v5107, 5
        %v5144 = vrot.slane %v5143, 4
        %v5145 = vrot.slane %v5108, 5
        %v5146 = vsel %vm746, %v5144, %v5145
        %v5147 = vrot.slane %v5109, 5
        %v5148 = vrot.slane %v5147, 4
        %v5149 = vrot.slane %v5110, 5
        %v5150 = vsel %vm746, %v5148, %v5149
        %v5151 = vrot.slane %v5111, 5
        %v5152 = vrot.slane %v5151, 4
        %v5153 = vrot.slane %v5112, 5
        %v5154 = vsel %vm746, %v5152, %v5153
        %v5155 = vrot.slane %v5113, 5
        %v5156 = vrot.slane %v5155, 4
        %v5157 = vrot.slane %v5114, 5
        %v5158 = vsel %vm746, %v5156, %v5157
        %v5159 = vrot.slane %v5115, 5
        %v5160 = vrot.slane %v5159, 4
        %v5161 = vrot.slane %v5116, 5
        %v5162 = vsel %vm746, %v5160, %v5161
        %v5163 = vrot.slane %v5117, 5
        %v5164 = vrot.slane %v5163, 4
        %v5165 = vrot.slane %v5118, 5
        %v5166 = vsel %vm746, %v5164, %v5165
        %5175 = vst [vmem:[#allocation3 + $0x14] sm:$0xf] %v5138
        %5176 = vst [vmem:[#allocation3 + $0x38] sm:$0xf] %v5142
        %5177 = vst [vmem:[#allocation3 + $0x5c] sm:$0xf] %v5146
        %5178 = vst [vmem:[#allocation3 + $0x80] sm:$0xf] %v5150
        %5179 = vst [vmem:[#allocation3 + $0xa4] sm:$0xf] %v5154
        %5180 = vst [vmem:[#allocation3 + $0xc8] sm:$0xf] %v5158
        %5181 = vst [vmem:[#allocation3 + $0xec] sm:$0xf] %v5162
        %5182 = vst [vmem:[#allocation3 + $0x110] sm:$0xf] %v5166
        %v5183 = vld [vmem:[%s1035] sm:$0xf]
        %v5184 = vld [vmem:[%s1035 + $0x8] sm:$0xf]
        %v5185 = vld [vmem:[%s1035 + $0x10] sm:$0xf]
        %v5186 = vld [vmem:[%s1035 + $0x18] sm:$0xf]
        %v5187 = vld [vmem:[%s1035 + $0x20] sm:$0xf]
        %v5188 = vld [vmem:[%s1035 + $0x28] sm:$0xf]
        %v5189 = vld [vmem:[%s1035 + $0x30] sm:$0xf]
        %v5190 = vld [vmem:[%s1035 + $0x38] sm:$0xf]
        %5191 = vst [vmem:[#allocation3 + $0x18] sm:$0xf] %v5183
        %5192 = vst [vmem:[#allocation3 + $0x3c] sm:$0xf] %v5184
        %5193 = vst [vmem:[#allocation3 + $0x60] sm:$0xf] %v5185
        %5194 = vst [vmem:[#allocation3 + $0x84] sm:$0xf] %v5186
        %5195 = vst [vmem:[#allocation3 + $0xa8] sm:$0xf] %v5187
        %5196 = vst [vmem:[#allocation3 + $0xcc] sm:$0xf] %v5188
        %5197 = vst [vmem:[#allocation3 + $0xf0] sm:$0xf] %v5189
        %5198 = vst [vmem:[#allocation3 + $0x114] sm:$0xf] %v5190
        %v5199 = vld [vmem:[%s1035] sm:$0xf]
        %v5200 = vld [vmem:[%s1035 + $0x4] sm:$0x1]
        %v5201 = vld [vmem:[%s1035 + $0x8] sm:$0xf]
        %v5202 = vld [vmem:[%s1035 + $0xc] sm:$0x1]
        %v5203 = vld [vmem:[%s1035 + $0x10] sm:$0xf]
        %v5204 = vld [vmem:[%s1035 + $0x14] sm:$0x1]
        %v5205 = vld [vmem:[%s1035 + $0x18] sm:$0xf]
        %v5206 = vld [vmem:[%s1035 + $0x1c] sm:$0x1]
        %v5207 = vld [vmem:[%s1035 + $0x20] sm:$0xf]
        %v5208 = vld [vmem:[%s1035 + $0x24] sm:$0x1]
        %v5209 = vld [vmem:[%s1035 + $0x28] sm:$0xf]
        %v5210 = vld [vmem:[%s1035 + $0x2c] sm:$0x1]
        %v5211 = vld [vmem:[%s1035 + $0x30] sm:$0xf]
        %v5212 = vld [vmem:[%s1035 + $0x34] sm:$0x1]
        %v5213 = vld [vmem:[%s1035 + $0x38] sm:$0xf]
        %v5214 = vld [vmem:[%s1035 + $0x3c] sm:$0x1]
        %v5216 = vshrl.u32 %v5199, 16
        %v5218 = vrot.slane %v5216, 4
        %v5219 = vshll.u32 %v5199, 16
        %v5221 = vrot.slane %v5219, 5
        %v5222 = vor.u32 %v5218, %v5221
        %v5223 = vrot.slane %v5222, 4
        %v5225 = vshll.u32 %v5200, 16
        %v5227 = vrot.slane %v5225, 5
        %v5228 = vsel %vm583, %v5223, %v5227
        %v5230 = vshrl.u32 %v5201, 16
        %v5232 = vrot.slane %v5230, 4
        %v5233 = vshll.u32 %v5201, 16
        %v5235 = vrot.slane %v5233, 5
        %v5236 = vor.u32 %v5232, %v5235
        %v5237 = vrot.slane %v5236, 4
        %v5239 = vshll.u32 %v5202, 16
        %v5241 = vrot.slane %v5239, 5
        %v5242 = vsel %vm583, %v5237, %v5241
        %v5244 = vshrl.u32 %v5203, 16
        %v5246 = vrot.slane %v5244, 4
        %v5247 = vshll.u32 %v5203, 16
        %v5249 = vrot.slane %v5247, 5
        %v5250 = vor.u32 %v5246, %v5249
        %v5251 = vrot.slane %v5250, 4
        %v5253 = vshll.u32 %v5204, 16
        %v5255 = vrot.slane %v5253, 5
        %v5256 = vsel %vm583, %v5251, %v5255
        %v5258 = vshrl.u32 %v5205, 16
        %v5260 = vrot.slane %v5258, 4
        %v5261 = vshll.u32 %v5205, 16
        %v5263 = vrot.slane %v5261, 5
        %v5264 = vor.u32 %v5260, %v5263
        %v5265 = vrot.slane %v5264, 4
        %v5267 = vshll.u32 %v5206, 16
        %v5269 = vrot.slane %v5267, 5
        %v5270 = vsel %vm583, %v5265, %v5269
        %v5272 = vshrl.u32 %v5207, 16
        %v5274 = vrot.slane %v5272, 4
        %v5275 = vshll.u32 %v5207, 16
        %v5277 = vrot.slane %v5275, 5
        %v5278 = vor.u32 %v5274, %v5277
        %v5279 = vrot.slane %v5278, 4
        %v5281 = vshll.u32 %v5208, 16
        %v5283 = vrot.slane %v5281, 5
        %v5284 = vsel %vm583, %v5279, %v5283
        %v5286 = vshrl.u32 %v5209, 16
        %v5288 = vrot.slane %v5286, 4
        %v5289 = vshll.u32 %v5209, 16
        %v5291 = vrot.slane %v5289, 5
        %v5292 = vor.u32 %v5288, %v5291
        %v5293 = vrot.slane %v5292, 4
        %v5295 = vshll.u32 %v5210, 16
        %v5297 = vrot.slane %v5295, 5
        %v5298 = vsel %vm583, %v5293, %v5297
        %v5300 = vshrl.u32 %v5211, 16
        %v5302 = vrot.slane %v5300, 4
        %v5303 = vshll.u32 %v5211, 16
        %v5305 = vrot.slane %v5303, 5
        %v5306 = vor.u32 %v5302, %v5305
        %v5307 = vrot.slane %v5306, 4
        %v5309 = vshll.u32 %v5212, 16
        %v5311 = vrot.slane %v5309, 5
        %v5312 = vsel %vm583, %v5307, %v5311
        %v5314 = vshrl.u32 %v5213, 16
        %v5316 = vrot.slane %v5314, 4
        %v5317 = vshll.u32 %v5213, 16
        %v5319 = vrot.slane %v5317, 5
        %v5320 = vor.u32 %v5316, %v5319
        %v5321 = vrot.slane %v5320, 4
        %v5323 = vshll.u32 %v5214, 16
        %v5325 = vrot.slane %v5323, 5
        %v5326 = vsel %vm583, %v5321, %v5325
        %5335 = vst [vmem:[#allocation3 + $0x1c] sm:$0xf] %v5228
        %5336 = vst [vmem:[#allocation3 + $0x40] sm:$0xf] %v5242
        %5337 = vst [vmem:[#allocation3 + $0x64] sm:$0xf] %v5256
        %5338 = vst [vmem:[#allocation3 + $0x88] sm:$0xf] %v5270
        %5339 = vst [vmem:[#allocation3 + $0xac] sm:$0xf] %v5284
        %5340 = vst [vmem:[#allocation3 + $0xd0] sm:$0xf] %v5298
        %5341 = vst [vmem:[#allocation3 + $0xf4] sm:$0xf] %v5312
        %5342 = vst [vmem:[#allocation3 + $0x118] sm:$0xf] %v5326
        %v5343 = vld [vmem:[%s1035] sm:$0xe]
        %v5344 = vld [vmem:[%s1035 + $0x4] sm:$0x1]
        %v5345 = vld [vmem:[%s1035 + $0x8] sm:$0xe]
        %v5346 = vld [vmem:[%s1035 + $0xc] sm:$0x1]
        %v5347 = vld [vmem:[%s1035 + $0x10] sm:$0xe]
        %v5348 = vld [vmem:[%s1035 + $0x14] sm:$0x1]
        %v5349 = vld [vmem:[%s1035 + $0x18] sm:$0xe]
        %v5350 = vld [vmem:[%s1035 + $0x1c] sm:$0x1]
        %v5351 = vld [vmem:[%s1035 + $0x20] sm:$0xe]
        %v5352 = vld [vmem:[%s1035 + $0x24] sm:$0x1]
        %v5353 = vld [vmem:[%s1035 + $0x28] sm:$0xe]
        %v5354 = vld [vmem:[%s1035 + $0x2c] sm:$0x1]
        %v5355 = vld [vmem:[%s1035 + $0x30] sm:$0xe]
        %v5356 = vld [vmem:[%s1035 + $0x34] sm:$0x1]
        %v5357 = vld [vmem:[%s1035 + $0x38] sm:$0xe]
        %v5358 = vld [vmem:[%s1035 + $0x3c] sm:$0x1]
        %v5375 = vrot.slane %v5343, 5
        %v5376 = vrot.slane %v5375, 4
        %v5377 = vrot.slane %v5344, 5
        %v5378 = vsel %vm746, %v5376, %v5377
        %v5379 = vrot.slane %v5345, 5
        %v5380 = vrot.slane %v5379, 4
        %v5381 = vrot.slane %v5346, 5
        %v5382 = vsel %vm746, %v5380, %v5381
        %v5383 = vrot.slane %v5347, 5
        %v5384 = vrot.slane %v5383, 4
        %v5385 = vrot.slane %v5348, 5
        %v5386 = vsel %vm746, %v5384, %v5385
        %v5387 = vrot.slane %v5349, 5
        %v5388 = vrot.slane %v5387, 4
        %v5389 = vrot.slane %v5350, 5
        %v5390 = vsel %vm746, %v5388, %v5389
        %v5391 = vrot.slane %v5351, 5
        %v5392 = vrot.slane %v5391, 4
        %v5393 = vrot.slane %v5352, 5
        %v5394 = vsel %vm746, %v5392, %v5393
        %v5395 = vrot.slane %v5353, 5
        %v5396 = vrot.slane %v5395, 4
        %v5397 = vrot.slane %v5354, 5
        %v5398 = vsel %vm746, %v5396, %v5397
        %v5399 = vrot.slane %v5355, 5
        %v5400 = vrot.slane %v5399, 4
        %v5401 = vrot.slane %v5356, 5
        %v5402 = vsel %vm746, %v5400, %v5401
        %v5403 = vrot.slane %v5357, 5
        %v5404 = vrot.slane %v5403, 4
        %v5405 = vrot.slane %v5358, 5
        %v5406 = vsel %vm746, %v5404, %v5405
        %5415 = vst [vmem:[#allocation3 + $0x20] sm:$0xf] %v5378
        %5416 = vst [vmem:[#allocation3 + $0x44] sm:$0xf] %v5382
        %5417 = vst [vmem:[#allocation3 + $0x68] sm:$0xf] %v5386
        %5418 = vst [vmem:[#allocation3 + $0x8c] sm:$0xf] %v5390
        %5419 = vst [vmem:[#allocation3 + $0xb0] sm:$0xf] %v5394
        %5420 = vst [vmem:[#allocation3 + $0xd4] sm:$0xf] %v5398
        %5421 = vst [vmem:[#allocation3 + $0xf8] sm:$0xf] %v5402
        %5422 = vst [vmem:[#allocation3 + $0x11c] sm:$0xf] %v5406
        %v5423 = vld [vmem:[#allocation3] sm:$0xff]
        %v5424 = vld [vmem:[#allocation3 + $0x8] sm:$0xff]
        %v5425 = vld [vmem:[#allocation3 + $0x10] sm:$0xff]
        %v5426 = vld [vmem:[#allocation3 + $0x18] sm:$0xff]
        %v5427 = vld [vmem:[#allocation3 + $0x20] sm:$0xf]
        %v5428 = vld [vmem:[#allocation3 + $0x24] sm:$0xff]
        %v5429 = vld [vmem:[#allocation3 + $0x2c] sm:$0xff]
        %v5430 = vld [vmem:[#allocation3 + $0x34] sm:$0xff]
        %v5431 = vld [vmem:[#allocation3 + $0x3c] sm:$0xff]
        %v5432 = vld [vmem:[#allocation3 + $0x44] sm:$0xf]
        %v5433 = vld [vmem:[#allocation3 + $0x48] sm:$0xff]
        %v5434 = vld [vmem:[#allocation3 + $0x50] sm:$0xff]
        %v5435 = vld [vmem:[#allocation3 + $0x58] sm:$0xff]
        %v5436 = vld [vmem:[#allocation3 + $0x60] sm:$0xff]
        %v5437 = vld [vmem:[#allocation3 + $0x68] sm:$0xf]
        %v5438 = vld [vmem:[#allocation3 + $0x6c] sm:$0xff]
        %v5439 = vld [vmem:[#allocation3 + $0x74] sm:$0xff]
        %v5440 = vld [vmem:[#allocation3 + $0x7c] sm:$0xff]
        %v5441 = vld [vmem:[#allocation3 + $0x84] sm:$0xff]
        %v5442 = vld [vmem:[#allocation3 + $0x8c] sm:$0xf]
        %v5443 = vld [vmem:[#allocation3 + $0x90] sm:$0xff]
        %v5444 = vld [vmem:[#allocation3 + $0x98] sm:$0xff]
        %v5445 = vld [vmem:[#allocation3 + $0xa0] sm:$0xff]
        %v5446 = vld [vmem:[#allocation3 + $0xa8] sm:$0xff]
        %v5447 = vld [vmem:[#allocation3 + $0xb0] sm:$0xf]
        %v5448 = vld [vmem:[#allocation3 + $0xb4] sm:$0xff]
        %v5449 = vld [vmem:[#allocation3 + $0xbc] sm:$0xff]
        %v5450 = vld [vmem:[#allocation3 + $0xc4] sm:$0xff]
        %v5451 = vld [vmem:[#allocation3 + $0xcc] sm:$0xff]
        %v5452 = vld [vmem:[#allocation3 + $0xd4] sm:$0xf]
        %v5453 = vld [vmem:[#allocation3 + $0xd8] sm:$0xff]
        %v5454 = vld [vmem:[#allocation3 + $0xe0] sm:$0xff]
        %v5455 = vld [vmem:[#allocation3 + $0xe8] sm:$0xff]
        %v5456 = vld [vmem:[#allocation3 + $0xf0] sm:$0xff]
        %v5457 = vld [vmem:[#allocation3 + $0xf8] sm:$0xf]
        %v5458 = vld [vmem:[#allocation3 + $0xfc] sm:$0xff]
        %v5459 = vld [vmem:[#allocation3 + $0x104] sm:$0xff]
        %v5460 = vld [vmem:[#allocation3 + $0x10c] sm:$0xff]
        %v5461 = vld [vmem:[#allocation3 + $0x114] sm:$0xff]
        %v5462 = vld [vmem:[#allocation3 + $0x11c] sm:$0xf]
        %v5463 = vld [vmem:[#allocation11] sm:$0xf]
        %v5464 = vld [vmem:[#allocation11 + $0x4] sm:$0xf]
        %v5465 = vld [vmem:[#allocation11 + $0x8] sm:$0xf]
        %v5466 = vld [vmem:[#allocation11 + $0xc] sm:$0xf]
        %v5467 = vld [vmem:[#allocation11 + $0x10] sm:$0xf]
        %v5468 = vld [vmem:[#allocation11 + $0x14] sm:$0xf]
        %v5469 = vld [vmem:[#allocation11 + $0x18] sm:$0xf]
        %v5470 = vld [vmem:[#allocation11 + $0x1c] sm:$0xf]
        %v5471 = vld [vmem:[#allocation11 + $0x20] sm:$0xf]
        %v5472 = vld [vmem:[#allocation11 + $0x24] sm:$0xf]
        %v5473 = vld [vmem:[#allocation11 + $0x28] sm:$0xf]
        %v5474 = vld [vmem:[#allocation11 + $0x2c] sm:$0xf]
        %v5475 = vld [vmem:[#allocation11 + $0x30] sm:$0xf]
        %v5476 = vld [vmem:[#allocation11 + $0x34] sm:$0xf]
        %v5477 = vld [vmem:[#allocation11 + $0x38] sm:$0xf]
        %v5478 = vld [vmem:[#allocation11 + $0x3c] sm:$0xf]
        %v5479 = vld [vmem:[#allocation11 + $0x40] sm:$0xf]
        %v5480 = vld [vmem:[#allocation11 + $0x44] sm:$0xf]
        %v5481 = vld [vmem:[#allocation11 + $0x48] sm:$0xf]
        %v5482 = vld [vmem:[#allocation11 + $0x4c] sm:$0xf]
        %v5483 = vld [vmem:[#allocation11 + $0x50] sm:$0xf]
        %v5484 = vld [vmem:[#allocation11 + $0x54] sm:$0xf]
        %v5485 = vld [vmem:[#allocation11 + $0x58] sm:$0xf]
        %v5486 = vld [vmem:[#allocation11 + $0x5c] sm:$0xf]
        %v5487 = vld [vmem:[#allocation11 + $0x60] sm:$0xf]
        %v5488 = vld [vmem:[#allocation11 + $0x64] sm:$0xf]
        %v5489 = vld [vmem:[#allocation11 + $0x68] sm:$0xf]
        %v5490 = vld [vmem:[#allocation11 + $0x6c] sm:$0xf]
        %v5491 = vld [vmem:[#allocation11 + $0x70] sm:$0xf]
        %v5492 = vld [vmem:[#allocation11 + $0x74] sm:$0xf]
        %v5493 = vld [vmem:[#allocation11 + $0x78] sm:$0xf]
        %v5494 = vld [vmem:[#allocation11 + $0x7c] sm:$0xf]
        %v5495 = vld [vmem:[#allocation11 + $0x80] sm:$0xf]
        %v5496 = vld [vmem:[#allocation11 + $0x84] sm:$0xf]
        %v5497 = vld [vmem:[#allocation11 + $0x88] sm:$0xf]
        %v5498 = vld [vmem:[#allocation11 + $0x8c] sm:$0xf]
        %v5499 = vld [vmem:[#allocation11 + $0x90] sm:$0xf]
        %v5500 = vld [vmem:[#allocation11 + $0x94] sm:$0xf]
        %v5501 = vld [vmem:[#allocation11 + $0x98] sm:$0xf]
        %v5502 = vld [vmem:[#allocation11 + $0x9c] sm:$0xf]
        %v5503 = vld [vmem:[#allocation11 + $0xa0] sm:$0xf]
        %v5504 = vld [vmem:[#allocation11 + $0xa4] sm:$0xf]
        %v5505 = vld [vmem:[#allocation11 + $0xa8] sm:$0xf]
        %v5506 = vld [vmem:[#allocation11 + $0xac] sm:$0xf]
        %v5507 = vld [vmem:[#allocation11 + $0xb0] sm:$0xf]
        %v5508 = vld [vmem:[#allocation11 + $0xb4] sm:$0xf]
        %v5509 = vld [vmem:[#allocation11 + $0xb8] sm:$0xf]
        %v5510 = vld [vmem:[#allocation11 + $0xbc] sm:$0xf]
        %v5511 = vld [vmem:[#allocation11 + $0xc0] sm:$0xf]
        %v5512 = vld [vmem:[#allocation11 + $0xc4] sm:$0xf]
        %v5513 = vld [vmem:[#allocation11 + $0xc8] sm:$0xf]
        %v5514 = vld [vmem:[#allocation11 + $0xcc] sm:$0xf]
        %v5515 = vld [vmem:[#allocation11 + $0xd0] sm:$0xf]
        %v5516 = vld [vmem:[#allocation11 + $0xd4] sm:$0xf]
        %v5517 = vld [vmem:[#allocation11 + $0xd8] sm:$0xf]
        %v5518 = vld [vmem:[#allocation11 + $0xdc] sm:$0xf]
        %v5519 = vld [vmem:[#allocation11 + $0xe0] sm:$0xf]
        %v5520 = vld [vmem:[#allocation11 + $0xe4] sm:$0xf]
        %v5521 = vld [vmem:[#allocation11 + $0xe8] sm:$0xf]
        %v5522 = vld [vmem:[#allocation11 + $0xec] sm:$0xf]
        %v5523 = vld [vmem:[#allocation11 + $0xf0] sm:$0xf]
        %v5524 = vld [vmem:[#allocation11 + $0xf4] sm:$0xf]
        %v5525 = vld [vmem:[#allocation11 + $0xf8] sm:$0xf]
        %v5526 = vld [vmem:[#allocation11 + $0xfc] sm:$0xf]
        %v5527 = vld [vmem:[#allocation11 + $0x100] sm:$0xf]
        %v5528 = vld [vmem:[#allocation11 + $0x104] sm:$0xf]
        %v5529 = vld [vmem:[#allocation11 + $0x108] sm:$0xf]
        %v5530 = vld [vmem:[#allocation11 + $0x10c] sm:$0xf]
        %v5531 = vld [vmem:[#allocation11 + $0x110] sm:$0xf]
        %v5532 = vld [vmem:[#allocation11 + $0x114] sm:$0xf]
        %v5533 = vld [vmem:[#allocation11 + $0x118] sm:$0xf]
        %v5534 = vld [vmem:[#allocation11 + $0x11c] sm:$0xf]
        %v5535 = vld [vmem:[#allocation11 + $0x120] sm:$0xf]
        %v5536 = vld [vmem:[#allocation11 + $0x124] sm:$0xf]
        %v5537 = vld [vmem:[#allocation11 + $0x128] sm:$0xf]
        %v5538 = vld [vmem:[#allocation11 + $0x12c] sm:$0xf]
        %v5539 = vld [vmem:[#allocation11 + $0x130] sm:$0xf]
        %v5540 = vld [vmem:[#allocation11 + $0x134] sm:$0xf]
        %v5541 = vld [vmem:[#allocation11 + $0x138] sm:$0xf]
        %v5542 = vld [vmem:[#allocation11 + $0x13c] sm:$0xf]
        %v5543 = vld [vmem:[#allocation11 + $0x140] sm:$0xf]
        %v5544 = vld [vmem:[#allocation11 + $0x144] sm:$0xf]
        %v5545 = vld [vmem:[#allocation11 + $0x148] sm:$0xf]
        %v5546 = vld [vmem:[#allocation11 + $0x14c] sm:$0xf]
        %v5547 = vld [vmem:[#allocation11 + $0x150] sm:$0xf]
        %v5548 = vld [vmem:[#allocation11 + $0x154] sm:$0xf]
        %v5549 = vld [vmem:[#allocation11 + $0x158] sm:$0xf]
        %v5550 = vld [vmem:[#allocation11 + $0x15c] sm:$0xf]
        %v5551 = vld [vmem:[#allocation11 + $0x160] sm:$0xf]
        %v5552 = vld [vmem:[#allocation11 + $0x164] sm:$0xf]
        %v5553 = vld [vmem:[#allocation11 + $0x168] sm:$0xf]
        %v5554 = vld [vmem:[#allocation11 + $0x16c] sm:$0xf]
        %v5555 = vld [vmem:[#allocation11 + $0x170] sm:$0xf]
        %v5556 = vld [vmem:[#allocation11 + $0x174] sm:$0xf]
        %v5557 = vld [vmem:[#allocation11 + $0x178] sm:$0xf]
        %v5558 = vld [vmem:[#allocation11 + $0x17c] sm:$0xf]
        %v5559 = vld [vmem:[#allocation11 + $0x180] sm:$0xf]
        %v5560 = vld [vmem:[#allocation11 + $0x184] sm:$0xf]
        %v5561 = vld [vmem:[#allocation11 + $0x188] sm:$0xf]
        %v5562 = vld [vmem:[#allocation11 + $0x18c] sm:$0xf]
        %v5563 = vld [vmem:[#allocation11 + $0x190] sm:$0xf]
        %v5564 = vld [vmem:[#allocation11 + $0x194] sm:$0xf]
        %v5565 = vld [vmem:[#allocation11 + $0x198] sm:$0xf]
        %v5566 = vld [vmem:[#allocation11 + $0x19c] sm:$0xf]
        %v5567 = vld [vmem:[#allocation11 + $0x1a0] sm:$0xf]
        %v5568 = vld [vmem:[#allocation11 + $0x1a4] sm:$0xf]
        %v5569 = vld [vmem:[#allocation11 + $0x1a8] sm:$0xf]
        %v5570 = vld [vmem:[#allocation11 + $0x1ac] sm:$0xf]
        %v5571 = vld [vmem:[#allocation11 + $0x1b0] sm:$0xf]
        %v5572 = vld [vmem:[#allocation11 + $0x1b4] sm:$0xf]
        %v5573 = vld [vmem:[#allocation11 + $0x1b8] sm:$0xf]
        %v5574 = vld [vmem:[#allocation11 + $0x1bc] sm:$0xf]
        %v5575 = vld [vmem:[#allocation11 + $0x1c0] sm:$0xf]
        %v5576 = vld [vmem:[#allocation11 + $0x1c4] sm:$0xf]
        %v5577 = vld [vmem:[#allocation11 + $0x1c8] sm:$0xf]
        %v5578 = vld [vmem:[#allocation11 + $0x1cc] sm:$0xf]
        %v5579 = vld [vmem:[#allocation11 + $0x1d0] sm:$0xf]
        %v5580 = vld [vmem:[#allocation11 + $0x1d4] sm:$0xf]
        %v5581 = vld [vmem:[#allocation11 + $0x1d8] sm:$0xf]
        %v5582 = vld [vmem:[#allocation11 + $0x1dc] sm:$0xf]
        %v5583 = vld [vmem:[#allocation11 + $0x1e0] sm:$0xf]
        %v5584 = vld [vmem:[#allocation11 + $0x1e4] sm:$0xf]
        %v5585 = vld [vmem:[#allocation11 + $0x1e8] sm:$0xf]
        %v5586 = vld [vmem:[#allocation11 + $0x1ec] sm:$0xf]
        %v5587 = vld [vmem:[#allocation11 + $0x1f0] sm:$0xf]
        %v5588 = vld [vmem:[#allocation11 + $0x1f4] sm:$0xf]
        %v5589 = vld [vmem:[#allocation11 + $0x1f8] sm:$0xf]
        %v5590 = vld [vmem:[#allocation11 + $0x1fc] sm:$0xf]
        %v5591 = vld [vmem:[#allocation11 + $0x200] sm:$0xf]
        %v5592 = vld [vmem:[#allocation11 + $0x204] sm:$0xf]
        %v5593 = vld [vmem:[#allocation11 + $0x208] sm:$0xf]
        %v5594 = vld [vmem:[#allocation11 + $0x20c] sm:$0xf]
        %v5595 = vld [vmem:[#allocation11 + $0x210] sm:$0xf]
        %v5596 = vld [vmem:[#allocation11 + $0x214] sm:$0xf]
        %v5597 = vld [vmem:[#allocation11 + $0x218] sm:$0xf]
        %v5598 = vld [vmem:[#allocation11 + $0x21c] sm:$0xf]
        %v5599 = vld [vmem:[#allocation11 + $0x220] sm:$0xf]
        %v5600 = vld [vmem:[#allocation11 + $0x224] sm:$0xf]
        %v5601 = vld [vmem:[#allocation11 + $0x228] sm:$0xf]
        %v5602 = vld [vmem:[#allocation11 + $0x22c] sm:$0xf]
        %v5603 = vld [vmem:[#allocation11 + $0x230] sm:$0xf]
        %v5604 = vld [vmem:[#allocation11 + $0x234] sm:$0xf]
        %v5605 = vld [vmem:[#allocation11 + $0x238] sm:$0xf]
        %v5606 = vld [vmem:[#allocation11 + $0x23c] sm:$0xf]
        %v5607 = vld [vmem:[%s5] sm:$0x1]
        %v5609 = vlaneseq
        %v5610 = vshrl.u32 %v5609, 7
        %v5611 = vsub.s32 0, %v5610
        %v5612 = vrot.slane %v5607, %v5611
        %v5654 = vunpack.c.l.b16 %v5423
        %v5655 = vunpack.c.h.b16 %v5423
        %v5656 = vunpack.c.l.b16 %v5424
        %v5657 = vunpack.c.h.b16 %v5424
        %v5658 = vunpack.c.l.b16 %v5425
        %v5659 = vunpack.c.h.b16 %v5425
        %v5660 = vunpack.c.l.b16 %v5426
        %v5661 = vunpack.c.h.b16 %v5426
        %v5662 = vunpack.c.l.b16 %v5427
        %v5663 = vunpack.c.l.b16 %v5428
        %v5664 = vunpack.c.h.b16 %v5428
        %v5665 = vunpack.c.l.b16 %v5429
        %v5666 = vunpack.c.h.b16 %v5429
        %v5667 = vunpack.c.l.b16 %v5430
        %v5668 = vunpack.c.h.b16 %v5430
        %v5669 = vunpack.c.l.b16 %v5431
        %v5670 = vunpack.c.h.b16 %v5431
        %v5671 = vunpack.c.l.b16 %v5432
        %v5672 = vunpack.c.l.b16 %v5433
        %v5673 = vunpack.c.h.b16 %v5433
        %v5674 = vunpack.c.l.b16 %v5434
        %v5675 = vunpack.c.h.b16 %v5434
        %v5676 = vunpack.c.l.b16 %v5435
        %v5677 = vunpack.c.h.b16 %v5435
        %v5678 = vunpack.c.l.b16 %v5436
        %v5679 = vunpack.c.h.b16 %v5436
        %v5680 = vunpack.c.l.b16 %v5437
        %v5681 = vunpack.c.l.b16 %v5438
        %v5682 = vunpack.c.h.b16 %v5438
        %v5683 = vunpack.c.l.b16 %v5439
        %v5684 = vunpack.c.h.b16 %v5439
        %v5685 = vunpack.c.l.b16 %v5440
        %v5686 = vunpack.c.h.b16 %v5440
        %v5687 = vunpack.c.l.b16 %v5441
        %v5688 = vunpack.c.h.b16 %v5441
        %v5689 = vunpack.c.l.b16 %v5442
        %v5690 = vunpack.c.l.b16 %v5443
        %v5691 = vunpack.c.h.b16 %v5443
        %v5692 = vunpack.c.l.b16 %v5444
        %v5693 = vunpack.c.h.b16 %v5444
        %v5694 = vunpack.c.l.b16 %v5445
        %v5695 = vunpack.c.h.b16 %v5445
        %v5696 = vunpack.c.l.b16 %v5446
        %v5697 = vunpack.c.h.b16 %v5446
        %v5698 = vunpack.c.l.b16 %v5447
        %v5699 = vunpack.c.l.b16 %v5448
        %v5700 = vunpack.c.h.b16 %v5448
        %v5701 = vunpack.c.l.b16 %v5449
        %v5702 = vunpack.c.h.b16 %v5449
        %v5703 = vunpack.c.l.b16 %v5450
        %v5704 = vunpack.c.h.b16 %v5450
        %v5705 = vunpack.c.l.b16 %v5451
        %v5706 = vunpack.c.h.b16 %v5451
        %v5707 = vunpack.c.l.b16 %v5452
        %v5708 = vunpack.c.l.b16 %v5453
        %v5709 = vunpack.c.h.b16 %v5453
        %v5710 = vunpack.c.l.b16 %v5454
        %v5711 = vunpack.c.h.b16 %v5454
        %v5712 = vunpack.c.l.b16 %v5455
        %v5713 = vunpack.c.h.b16 %v5455
        %v5714 = vunpack.c.l.b16 %v5456
        %v5715 = vunpack.c.h.b16 %v5456
        %v5716 = vunpack.c.l.b16 %v5457
        %v5717 = vunpack.c.l.b16 %v5458
        %v5718 = vunpack.c.h.b16 %v5458
        %v5719 = vunpack.c.l.b16 %v5459
        %v5720 = vunpack.c.h.b16 %v5459
        %v5721 = vunpack.c.l.b16 %v5460
        %v5722 = vunpack.c.h.b16 %v5460
        %v5723 = vunpack.c.l.b16 %v5461
        %v5724 = vunpack.c.h.b16 %v5461
        %v5725 = vunpack.c.l.b16 %v5462
        %v5726 = vpack.c.b16 %v5663, %v5654
        %v5727 = vpack.c.b16 %v5664, %v5655
        %v5728 = vpack.c.b16 %v5665, %v5656
        %v5729 = vpack.c.b16 %v5666, %v5657
        %v5730 = vpack.c.b16 %v5667, %v5658
        %v5731 = vpack.c.b16 %v5668, %v5659
        %v5732 = vpack.c.b16 %v5669, %v5660
        %v5733 = vpack.c.b16 %v5670, %v5661
        %v5734 = vpack.c.b16 %v5671, %v5662
        %v5735 = vpack.c.b16 %v5681, %v5672
        %v5736 = vpack.c.b16 %v5682, %v5673
        %v5737 = vpack.c.b16 %v5683, %v5674
        %v5738 = vpack.c.b16 %v5684, %v5675
        %v5739 = vpack.c.b16 %v5685, %v5676
        %v5740 = vpack.c.b16 %v5686, %v5677
        %v5741 = vpack.c.b16 %v5687, %v5678
        %v5742 = vpack.c.b16 %v5688, %v5679
        %v5743 = vpack.c.b16 %v5689, %v5680
        %v5744 = vpack.c.b16 %v5699, %v5690
        %v5745 = vpack.c.b16 %v5700, %v5691
        %v5746 = vpack.c.b16 %v5701, %v5692
        %v5747 = vpack.c.b16 %v5702, %v5693
        %v5748 = vpack.c.b16 %v5703, %v5694
        %v5749 = vpack.c.b16 %v5704, %v5695
        %v5750 = vpack.c.b16 %v5705, %v5696
        %v5751 = vpack.c.b16 %v5706, %v5697
        %v5752 = vpack.c.b16 %v5707, %v5698
        %v5753 = vpack.c.b16 %v5717, %v5708
        %v5754 = vpack.c.b16 %v5718, %v5709
        %v5755 = vpack.c.b16 %v5719, %v5710
        %v5756 = vpack.c.b16 %v5720, %v5711
        %v5757 = vpack.c.b16 %v5721, %v5712
        %v5758 = vpack.c.b16 %v5722, %v5713
        %v5759 = vpack.c.b16 %v5723, %v5714
        %v5760 = vpack.c.b16 %v5724, %v5715
        %v5761 = vpack.c.b16 %v5725, %v5716
        %v5942 = vunpack.c.l.b16 %v5463
        %v5943 = vunpack.c.l.b16 %v5464
        %v5944 = vunpack.c.l.b16 %v5465
        %v5945 = vunpack.c.l.b16 %v5466
        %v5946 = vunpack.c.l.b16 %v5467
        %v5947 = vunpack.c.l.b16 %v5468
        %v5948 = vunpack.c.l.b16 %v5469
        %v5949 = vunpack.c.l.b16 %v5470
        %v5950 = vunpack.c.l.b16 %v5471
        %v5951 = vunpack.c.l.b16 %v5472
        %v5952 = vunpack.c.l.b16 %v5473
        %v5953 = vunpack.c.l.b16 %v5474
        %v5954 = vunpack.c.l.b16 %v5475
        %v5955 = vunpack.c.l.b16 %v5476
        %v5956 = vunpack.c.l.b16 %v5477
        %v5957 = vunpack.c.l.b16 %v5478
        %v5958 = vunpack.c.l.b16 %v5479
        %v5959 = vunpack.c.l.b16 %v5480
        %v5960 = vunpack.c.l.b16 %v5481
        %v5961 = vunpack.c.l.b16 %v5482
        %v5962 = vunpack.c.l.b16 %v5483
        %v5963 = vunpack.c.l.b16 %v5484
        %v5964 = vunpack.c.l.b16 %v5485
        %v5965 = vunpack.c.l.b16 %v5486
        %v5966 = vunpack.c.l.b16 %v5487
        %v5967 = vunpack.c.l.b16 %v5488
        %v5968 = vunpack.c.l.b16 %v5489
        %v5969 = vunpack.c.l.b16 %v5490
        %v5970 = vunpack.c.l.b16 %v5491
        %v5971 = vunpack.c.l.b16 %v5492
        %v5972 = vunpack.c.l.b16 %v5493
        %v5973 = vunpack.c.l.b16 %v5494
        %v5974 = vunpack.c.l.b16 %v5495
        %v5975 = vunpack.c.l.b16 %v5496
        %v5976 = vunpack.c.l.b16 %v5497
        %v5977 = vunpack.c.l.b16 %v5498
        %v5978 = vunpack.c.l.b16 %v5499
        %v5979 = vunpack.c.l.b16 %v5500
        %v5980 = vunpack.c.l.b16 %v5501
        %v5981 = vunpack.c.l.b16 %v5502
        %v5982 = vunpack.c.l.b16 %v5503
        %v5983 = vunpack.c.l.b16 %v5504
        %v5984 = vunpack.c.l.b16 %v5505
        %v5985 = vunpack.c.l.b16 %v5506
        %v5986 = vunpack.c.l.b16 %v5507
        %v5987 = vunpack.c.l.b16 %v5508
        %v5988 = vunpack.c.l.b16 %v5509
        %v5989 = vunpack.c.l.b16 %v5510
        %v5990 = vunpack.c.l.b16 %v5511
        %v5991 = vunpack.c.l.b16 %v5512
        %v5992 = vunpack.c.l.b16 %v5513
        %v5993 = vunpack.c.l.b16 %v5514
        %v5994 = vunpack.c.l.b16 %v5515
        %v5995 = vunpack.c.l.b16 %v5516
        %v5996 = vunpack.c.l.b16 %v5517
        %v5997 = vunpack.c.l.b16 %v5518
        %v5998 = vunpack.c.l.b16 %v5519
        %v5999 = vunpack.c.l.b16 %v5520
        %v6000 = vunpack.c.l.b16 %v5521
        %v6001 = vunpack.c.l.b16 %v5522
        %v6002 = vunpack.c.l.b16 %v5523
        %v6003 = vunpack.c.l.b16 %v5524
        %v6004 = vunpack.c.l.b16 %v5525
        %v6005 = vunpack.c.l.b16 %v5526
        %v6006 = vunpack.c.l.b16 %v5527
        %v6007 = vunpack.c.l.b16 %v5528
        %v6008 = vunpack.c.l.b16 %v5529
        %v6009 = vunpack.c.l.b16 %v5530
        %v6010 = vunpack.c.l.b16 %v5531
        %v6011 = vunpack.c.l.b16 %v5532
        %v6012 = vunpack.c.l.b16 %v5533
        %v6013 = vunpack.c.l.b16 %v5534
        %v6014 = vunpack.c.l.b16 %v5535
        %v6015 = vunpack.c.l.b16 %v5536
        %v6016 = vunpack.c.l.b16 %v5537
        %v6017 = vunpack.c.l.b16 %v5538
        %v6018 = vunpack.c.l.b16 %v5539
        %v6019 = vunpack.c.l.b16 %v5540
        %v6020 = vunpack.c.l.b16 %v5541
        %v6021 = vunpack.c.l.b16 %v5542
        %v6022 = vunpack.c.l.b16 %v5543
        %v6023 = vunpack.c.l.b16 %v5544
        %v6024 = vunpack.c.l.b16 %v5545
        %v6025 = vunpack.c.l.b16 %v5546
        %v6026 = vunpack.c.l.b16 %v5547
        %v6027 = vunpack.c.l.b16 %v5548
        %v6028 = vunpack.c.l.b16 %v5549
        %v6029 = vunpack.c.l.b16 %v5550
        %v6030 = vunpack.c.l.b16 %v5551
        %v6031 = vunpack.c.l.b16 %v5552
        %v6032 = vunpack.c.l.b16 %v5553
        %v6033 = vunpack.c.l.b16 %v5554
        %v6034 = vunpack.c.l.b16 %v5555
        %v6035 = vunpack.c.l.b16 %v5556
        %v6036 = vunpack.c.l.b16 %v5557
        %v6037 = vunpack.c.l.b16 %v5558
        %v6038 = vunpack.c.l.b16 %v5559
        %v6039 = vunpack.c.l.b16 %v5560
        %v6040 = vunpack.c.l.b16 %v5561
        %v6041 = vunpack.c.l.b16 %v5562
        %v6042 = vunpack.c.l.b16 %v5563
        %v6043 = vunpack.c.l.b16 %v5564
        %v6044 = vunpack.c.l.b16 %v5565
        %v6045 = vunpack.c.l.b16 %v5566
        %v6046 = vunpack.c.l.b16 %v5567
        %v6047 = vunpack.c.l.b16 %v5568
        %v6048 = vunpack.c.l.b16 %v5569
        %v6049 = vunpack.c.l.b16 %v5570
        %v6050 = vunpack.c.l.b16 %v5571
        %v6051 = vunpack.c.l.b16 %v5572
        %v6052 = vunpack.c.l.b16 %v5573
        %v6053 = vunpack.c.l.b16 %v5574
        %v6054 = vunpack.c.l.b16 %v5575
        %v6055 = vunpack.c.l.b16 %v5576
        %v6056 = vunpack.c.l.b16 %v5577
        %v6057 = vunpack.c.l.b16 %v5578
        %v6058 = vunpack.c.l.b16 %v5579
        %v6059 = vunpack.c.l.b16 %v5580
        %v6060 = vunpack.c.l.b16 %v5581
        %v6061 = vunpack.c.l.b16 %v5582
        %v6062 = vunpack.c.l.b16 %v5583
        %v6063 = vunpack.c.l.b16 %v5584
        %v6064 = vunpack.c.l.b16 %v5585
        %v6065 = vunpack.c.l.b16 %v5586
        %v6066 = vunpack.c.l.b16 %v5587
        %v6067 = vunpack.c.l.b16 %v5588
        %v6068 = vunpack.c.l.b16 %v5589
        %v6069 = vunpack.c.l.b16 %v5590
        %v6070 = vunpack.c.l.b16 %v5591
        %v6071 = vunpack.c.l.b16 %v5592
        %v6072 = vunpack.c.l.b16 %v5593
        %v6073 = vunpack.c.l.b16 %v5594
        %v6074 = vunpack.c.l.b16 %v5595
        %v6075 = vunpack.c.l.b16 %v5596
        %v6076 = vunpack.c.l.b16 %v5597
        %v6077 = vunpack.c.l.b16 %v5598
        %v6078 = vunpack.c.l.b16 %v5599
        %v6079 = vunpack.c.l.b16 %v5600
        %v6080 = vunpack.c.l.b16 %v5601
        %v6081 = vunpack.c.l.b16 %v5602
        %v6082 = vunpack.c.l.b16 %v5603
        %v6083 = vunpack.c.l.b16 %v5604
        %v6084 = vunpack.c.l.b16 %v5605
        %v6085 = vunpack.c.l.b16 %v5606
        %v6086 = vpack.c.b16 %v5943, %v5942
        %v6087 = vpack.c.b16 %v5945, %v5944
        %v6088 = vpack.c.b16 %v5947, %v5946
        %v6089 = vpack.c.b16 %v5949, %v5948
        %v6090 = vpack.c.b16 %v5951, %v5950
        %v6091 = vpack.c.b16 %v5953, %v5952
        %v6092 = vpack.c.b16 %v5955, %v5954
        %v6093 = vpack.c.b16 %v5957, %v5956
        %v6094 = vpack.c.b16 %v5959, %v5958
        %v6095 = vpack.c.b16 %v5961, %v5960
        %v6096 = vpack.c.b16 %v5963, %v5962
        %v6097 = vpack.c.b16 %v5965, %v5964
        %v6098 = vpack.c.b16 %v5967, %v5966
        %v6099 = vpack.c.b16 %v5969, %v5968
        %v6100 = vpack.c.b16 %v5971, %v5970
        %v6101 = vpack.c.b16 %v5973, %v5972
        %v6102 = vpack.c.b16 %v5975, %v5974
        %v6103 = vpack.c.b16 %v5977, %v5976
        %v6104 = vpack.c.b16 %v5979, %v5978
        %v6105 = vpack.c.b16 %v5981, %v5980
        %v6106 = vpack.c.b16 %v5983, %v5982
        %v6107 = vpack.c.b16 %v5985, %v5984
        %v6108 = vpack.c.b16 %v5987, %v5986
        %v6109 = vpack.c.b16 %v5989, %v5988
        %v6110 = vpack.c.b16 %v5991, %v5990
        %v6111 = vpack.c.b16 %v5993, %v5992
        %v6112 = vpack.c.b16 %v5995, %v5994
        %v6113 = vpack.c.b16 %v5997, %v5996
        %v6114 = vpack.c.b16 %v5999, %v5998
        %v6115 = vpack.c.b16 %v6001, %v6000
        %v6116 = vpack.c.b16 %v6003, %v6002
        %v6117 = vpack.c.b16 %v6005, %v6004
        %v6118 = vpack.c.b16 %v6007, %v6006
        %v6119 = vpack.c.b16 %v6009, %v6008
        %v6120 = vpack.c.b16 %v6011, %v6010
        %v6121 = vpack.c.b16 %v6013, %v6012
        %v6122 = vpack.c.b16 %v6015, %v6014
        %v6123 = vpack.c.b16 %v6017, %v6016
        %v6124 = vpack.c.b16 %v6019, %v6018
        %v6125 = vpack.c.b16 %v6021, %v6020
        %v6126 = vpack.c.b16 %v6023, %v6022
        %v6127 = vpack.c.b16 %v6025, %v6024
        %v6128 = vpack.c.b16 %v6027, %v6026
        %v6129 = vpack.c.b16 %v6029, %v6028
        %v6130 = vpack.c.b16 %v6031, %v6030
        %v6131 = vpack.c.b16 %v6033, %v6032
        %v6132 = vpack.c.b16 %v6035, %v6034
        %v6133 = vpack.c.b16 %v6037, %v6036
        %v6134 = vpack.c.b16 %v6039, %v6038
        %v6135 = vpack.c.b16 %v6041, %v6040
        %v6136 = vpack.c.b16 %v6043, %v6042
        %v6137 = vpack.c.b16 %v6045, %v6044
        %v6138 = vpack.c.b16 %v6047, %v6046
        %v6139 = vpack.c.b16 %v6049, %v6048
        %v6140 = vpack.c.b16 %v6051, %v6050
        %v6141 = vpack.c.b16 %v6053, %v6052
        %v6142 = vpack.c.b16 %v6055, %v6054
        %v6143 = vpack.c.b16 %v6057, %v6056
        %v6144 = vpack.c.b16 %v6059, %v6058
        %v6145 = vpack.c.b16 %v6061, %v6060
        %v6146 = vpack.c.b16 %v6063, %v6062
        %v6147 = vpack.c.b16 %v6065, %v6064
        %v6148 = vpack.c.b16 %v6067, %v6066
        %v6149 = vpack.c.b16 %v6069, %v6068
        %v6150 = vpack.c.b16 %v6071, %v6070
        %v6151 = vpack.c.b16 %v6073, %v6072
        %v6152 = vpack.c.b16 %v6075, %v6074
        %v6153 = vpack.c.b16 %v6077, %v6076
        %v6154 = vpack.c.b16 %v6079, %v6078
        %v6155 = vpack.c.b16 %v6081, %v6080
        %v6156 = vpack.c.b16 %v6083, %v6082
        %v6157 = vpack.c.b16 %v6085, %v6084
        %6230 = vmatprep.subr.bf16.mxu0 0
        %6231 = vmatpush1.bf16.msra.mxu0 %v6093
        %6232 = vmatprep.subr.bf16.mxu0 0
        %6233 = vmatpush1.bf16.msra.mxu0 %v6092
        %6234 = vmatprep.subr.bf16.mxu0 0
        %6235 = vmatpush1.bf16.msra.mxu0 %v6091
        %6236 = vmatprep.subr.bf16.mxu0 0
        %6237 = vmatpush1.bf16.msra.mxu0 %v6090
        %6238 = vmatprep.subr.bf16.mxu0 0
        %6239 = vmatpush1.bf16.msra.mxu0 %v6089
        %6240 = vmatprep.subr.bf16.mxu0 0
        %6241 = vmatpush1.bf16.msra.mxu0 %v6088
        %6242 = vmatprep.subr.bf16.mxu0 0
        %6243 = vmatpush1.bf16.msra.mxu0 %v6087
        %6244 = vmatprep.subr.bf16.mxu0 0
        %6245 = vmatpush1.bf16.msra.mxu0 %v6086
        %6246 = vmatprep.subr.bf16.mxu0 0
        %6247 = vmatpush2.bf16.msra.mxu0 %v6101
        %6248 = vmatprep.subr.bf16.mxu0 0
        %6249 = vmatpush2.bf16.msra.mxu0 %v6100
        %6250 = vmatprep.subr.bf16.mxu0 0
        %6251 = vmatpush2.bf16.msra.mxu0 %v6099
        %6252 = vmatprep.subr.bf16.mxu0 0
        %6253 = vmatpush2.bf16.msra.mxu0 %v6098
        %6254 = vmatprep.subr.bf16.mxu0 0
        %6255 = vmatpush2.bf16.msra.mxu0 %v6097
        %6256 = vmatprep.subr.bf16.mxu0 0
        %6257 = vmatpush2.bf16.msra.mxu0 %v6096
        %6258 = vmatprep.subr.bf16.mxu0 0
        %6259 = vmatpush2.bf16.msra.mxu0 %v6095
        %6260 = vmatprep.subr.bf16.mxu0 0
        %6261 = vmatpush2.bf16.msra.mxu0 %v6094
        %6262 = vmatprep.mubr.bf16.mxu0 %v5727
        %6263 = vmatmul.mubr.bf16.gmra.mxu0 %v5726
        %v6264 = vpop.f32.mrf.mxu0
        %v6265 = vadd.f32 %v5612, %v6264
        %v6266 = vpop.f32.mrf.mxu0
        %v6267 = vpop.f32.mrf.mxu0
        %v6268 = vadd.f32 %v5612, %v6267
        %v6269 = vpop.f32.mrf.mxu0
        %6270 = vmatprep.mubr.bf16.mxu0 %v5736
        %6271 = vmatmul.mubr.bf16.gmra.mxu0 %v5735
        %v6272 = vpop.f32.mrf.mxu0
        %v6273 = vadd.f32 %v5612, %v6272
        %v6274 = vpop.f32.mrf.mxu0
        %v6275 = vpop.f32.mrf.mxu0
        %v6276 = vadd.f32 %v5612, %v6275
        %v6277 = vpop.f32.mrf.mxu0
        %6278 = vmatprep.mubr.bf16.mxu0 %v5745
        %6279 = vmatmul.mubr.bf16.gmra.mxu0 %v5744
        %v6280 = vpop.f32.mrf.mxu0
        %v6281 = vadd.f32 %v5612, %v6280
        %v6282 = vpop.f32.mrf.mxu0
        %v6283 = vpop.f32.mrf.mxu0
        %v6284 = vadd.f32 %v5612, %v6283
        %v6285 = vpop.f32.mrf.mxu0
        %6286 = vmatprep.mubr.bf16.mxu0 %v5754
        %6287 = vmatmul.mubr.bf16.gmra.mxu0 %v5753
        %v6288 = vpop.f32.mrf.mxu0
        %v6289 = vadd.f32 %v5612, %v6288
        %v6290 = vpop.f32.mrf.mxu0
        %v6291 = vpop.f32.mrf.mxu0
        %v6292 = vadd.f32 %v5612, %v6291
        %v6293 = vpop.f32.mrf.mxu0
        %6294 = vdwg.mxu0
        %6295 = vmatprep.subr.bf16.mxu0 0
        %6296 = vmatpush1.bf16.msra.mxu0 %v6109
        %6297 = vmatprep.subr.bf16.mxu0 0
        %6298 = vmatpush1.bf16.msra.mxu0 %v6108
        %6299 = vmatprep.subr.bf16.mxu0 0
        %6300 = vmatpush1.bf16.msra.mxu0 %v6107
        %6301 = vmatprep.subr.bf16.mxu0 0
        %6302 = vmatpush1.bf16.msra.mxu0 %v6106
        %6303 = vmatprep.subr.bf16.mxu0 0
        %6304 = vmatpush1.bf16.msra.mxu0 %v6105
        %6305 = vmatprep.subr.bf16.mxu0 0
        %6306 = vmatpush1.bf16.msra.mxu0 %v6104
        %6307 = vmatprep.subr.bf16.mxu0 0
        %6308 = vmatpush1.bf16.msra.mxu0 %v6103
        %6309 = vmatprep.subr.bf16.mxu0 0
        %6310 = vmatpush1.bf16.msra.mxu0 %v6102
        %6311 = vmatprep.subr.bf16.mxu0 0
        %6312 = vmatpush2.bf16.msra.mxu0 %v6117
        %6313 = vmatprep.subr.bf16.mxu0 0
        %6314 = vmatpush2.bf16.msra.mxu0 %v6116
        %6315 = vmatprep.subr.bf16.mxu0 0
        %6316 = vmatpush2.bf16.msra.mxu0 %v6115
        %6317 = vmatprep.subr.bf16.mxu0 0
        %6318 = vmatpush2.bf16.msra.mxu0 %v6114
        %6319 = vmatprep.subr.bf16.mxu0 0
        %6320 = vmatpush2.bf16.msra.mxu0 %v6113
        %6321 = vmatprep.subr.bf16.mxu0 0
        %6322 = vmatpush2.bf16.msra.mxu0 %v6112
        %6323 = vmatprep.subr.bf16.mxu0 0
        %6324 = vmatpush2.bf16.msra.mxu0 %v6111
        %6325 = vmatprep.subr.bf16.mxu0 0
        %6326 = vmatpush2.bf16.msra.mxu0 %v6110
        %6327 = vmatprep.mubr.bf16.mxu0 %v5729
        %6328 = vmatmul.mubr.bf16.gmra.mxu0 %v5728
        %v6329 = vpop.f32.mrf.mxu0
        %v6330 = vadd.f32 %v6265, %v6329
        %v6331 = vpop.f32.mrf.mxu0
        %v6332 = vpop.f32.mrf.mxu0
        %v6333 = vadd.f32 %v6268, %v6332
        %v6334 = vpop.f32.mrf.mxu0
        %6335 = vmatprep.mubr.bf16.mxu0 %v5738
        %6336 = vmatmul.mubr.bf16.gmra.mxu0 %v5737
        %v6337 = vpop.f32.mrf.mxu0
        %v6338 = vadd.f32 %v6273, %v6337
        %v6339 = vpop.f32.mrf.mxu0
        %v6340 = vpop.f32.mrf.mxu0
        %v6341 = vadd.f32 %v6276, %v6340
        %v6342 = vpop.f32.mrf.mxu0
        %6343 = vmatprep.mubr.bf16.mxu0 %v5747
        %6344 = vmatmul.mubr.bf16.gmra.mxu0 %v5746
        %v6345 = vpop.f32.mrf.mxu0
        %v6346 = vadd.f32 %v6281, %v6345
        %v6347 = vpop.f32.mrf.mxu0
        %v6348 = vpop.f32.mrf.mxu0
        %v6349 = vadd.f32 %v6284, %v6348
        %v6350 = vpop.f32.mrf.mxu0
        %6351 = vmatprep.mubr.bf16.mxu0 %v5756
        %6352 = vmatmul.mubr.bf16.gmra.mxu0 %v5755
        %v6353 = vpop.f32.mrf.mxu0
        %v6354 = vadd.f32 %v6289, %v6353
        %v6355 = vpop.f32.mrf.mxu0
        %v6356 = vpop.f32.mrf.mxu0
        %v6357 = vadd.f32 %v6292, %v6356
        %v6358 = vpop.f32.mrf.mxu0
        %6359 = vdwg.mxu0
        %6360 = vmatprep.subr.bf16.mxu0 0
        %6361 = vmatpush1.bf16.msra.mxu0 %v6125
        %6362 = vmatprep.subr.bf16.mxu0 0
        %6363 = vmatpush1.bf16.msra.mxu0 %v6124
        %6364 = vmatprep.subr.bf16.mxu0 0
        %6365 = vmatpush1.bf16.msra.mxu0 %v6123
        %6366 = vmatprep.subr.bf16.mxu0 0
        %6367 = vmatpush1.bf16.msra.mxu0 %v6122
        %6368 = vmatprep.subr.bf16.mxu0 0
        %6369 = vmatpush1.bf16.msra.mxu0 %v6121
        %6370 = vmatprep.subr.bf16.mxu0 0
        %6371 = vmatpush1.bf16.msra.mxu0 %v6120
        %6372 = vmatprep.subr.bf16.mxu0 0
        %6373 = vmatpush1.bf16.msra.mxu0 %v6119
        %6374 = vmatprep.subr.bf16.mxu0 0
        %6375 = vmatpush1.bf16.msra.mxu0 %v6118
        %6376 = vmatprep.subr.bf16.mxu0 0
        %6377 = vmatpush2.bf16.msra.mxu0 %v6133
        %6378 = vmatprep.subr.bf16.mxu0 0
        %6379 = vmatpush2.bf16.msra.mxu0 %v6132
        %6380 = vmatprep.subr.bf16.mxu0 0
        %6381 = vmatpush2.bf16.msra.mxu0 %v6131
        %6382 = vmatprep.subr.bf16.mxu0 0
        %6383 = vmatpush2.bf16.msra.mxu0 %v6130
        %6384 = vmatprep.subr.bf16.mxu0 0
        %6385 = vmatpush2.bf16.msra.mxu0 %v6129
        %6386 = vmatprep.subr.bf16.mxu0 0
        %6387 = vmatpush2.bf16.msra.mxu0 %v6128
        %6388 = vmatprep.subr.bf16.mxu0 0
        %6389 = vmatpush2.bf16.msra.mxu0 %v6127
        %6390 = vmatprep.subr.bf16.mxu0 0
        %6391 = vmatpush2.bf16.msra.mxu0 %v6126
        %6392 = vmatprep.mubr.bf16.mxu0 %v5731
        %6393 = vmatmul.mubr.bf16.gmra.mxu0 %v5730
        %v6394 = vpop.f32.mrf.mxu0
        %v6395 = vadd.f32 %v6330, %v6394
        %v6396 = vpop.f32.mrf.mxu0
        %v6397 = vpop.f32.mrf.mxu0
        %v6398 = vadd.f32 %v6333, %v6397
        %v6399 = vpop.f32.mrf.mxu0
        %6400 = vmatprep.mubr.bf16.mxu0 %v5740
        %6401 = vmatmul.mubr.bf16.gmra.mxu0 %v5739
        %v6402 = vpop.f32.mrf.mxu0
        %v6403 = vadd.f32 %v6338, %v6402
        %v6404 = vpop.f32.mrf.mxu0
        %v6405 = vpop.f32.mrf.mxu0
        %v6406 = vadd.f32 %v6341, %v6405
        %v6407 = vpop.f32.mrf.mxu0
        %6408 = vmatprep.mubr.bf16.mxu0 %v5749
        %6409 = vmatmul.mubr.bf16.gmra.mxu0 %v5748
        %v6410 = vpop.f32.mrf.mxu0
        %v6411 = vadd.f32 %v6346, %v6410
        %v6412 = vpop.f32.mrf.mxu0
        %v6413 = vpop.f32.mrf.mxu0
        %v6414 = vadd.f32 %v6349, %v6413
        %v6415 = vpop.f32.mrf.mxu0
        %6416 = vmatprep.mubr.bf16.mxu0 %v5758
        %6417 = vmatmul.mubr.bf16.gmra.mxu0 %v5757
        %v6418 = vpop.f32.mrf.mxu0
        %v6419 = vadd.f32 %v6354, %v6418
        %v6420 = vpop.f32.mrf.mxu0
        %v6421 = vpop.f32.mrf.mxu0
        %v6422 = vadd.f32 %v6357, %v6421
        %v6423 = vpop.f32.mrf.mxu0
        %6424 = vdwg.mxu0
        %6425 = vmatprep.subr.bf16.mxu0 0
        %6426 = vmatpush1.bf16.msra.mxu0 %v6141
        %6427 = vmatprep.subr.bf16.mxu0 0
        %6428 = vmatpush1.bf16.msra.mxu0 %v6140
        %6429 = vmatprep.subr.bf16.mxu0 0
        %6430 = vmatpush1.bf16.msra.mxu0 %v6139
        %6431 = vmatprep.subr.bf16.mxu0 0
        %6432 = vmatpush1.bf16.msra.mxu0 %v6138
        %6433 = vmatprep.subr.bf16.mxu0 0
        %6434 = vmatpush1.bf16.msra.mxu0 %v6137
        %6435 = vmatprep.subr.bf16.mxu0 0
        %6436 = vmatpush1.bf16.msra.mxu0 %v6136
        %6437 = vmatprep.subr.bf16.mxu0 0
        %6438 = vmatpush1.bf16.msra.mxu0 %v6135
        %6439 = vmatprep.subr.bf16.mxu0 0
        %6440 = vmatpush1.bf16.msra.mxu0 %v6134
        %6441 = vmatprep.subr.bf16.mxu0 0
        %6442 = vmatpush2.bf16.msra.mxu0 %v6149
        %6443 = vmatprep.subr.bf16.mxu0 0
        %6444 = vmatpush2.bf16.msra.mxu0 %v6148
        %6445 = vmatprep.subr.bf16.mxu0 0
        %6446 = vmatpush2.bf16.msra.mxu0 %v6147
        %6447 = vmatprep.subr.bf16.mxu0 0
        %6448 = vmatpush2.bf16.msra.mxu0 %v6146
        %6449 = vmatprep.subr.bf16.mxu0 0
        %6450 = vmatpush2.bf16.msra.mxu0 %v6145
        %6451 = vmatprep.subr.bf16.mxu0 0
        %6452 = vmatpush2.bf16.msra.mxu0 %v6144
        %6453 = vmatprep.subr.bf16.mxu0 0
        %6454 = vmatpush2.bf16.msra.mxu0 %v6143
        %6455 = vmatprep.subr.bf16.mxu0 0
        %6456 = vmatpush2.bf16.msra.mxu0 %v6142
        %6457 = vmatprep.mubr.bf16.mxu0 %v5733
        %6458 = vmatmul.mubr.bf16.gmra.mxu0 %v5732
        %v6459 = vpop.f32.mrf.mxu0
        %v6460 = vadd.f32 %v6395, %v6459
        %v6461 = vpop.f32.mrf.mxu0
        %v6462 = vpop.f32.mrf.mxu0
        %v6463 = vadd.f32 %v6398, %v6462
        %v6464 = vpop.f32.mrf.mxu0
        %6465 = vmatprep.mubr.bf16.mxu0 %v5742
        %6466 = vmatmul.mubr.bf16.gmra.mxu0 %v5741
        %v6467 = vpop.f32.mrf.mxu0
        %v6468 = vadd.f32 %v6403, %v6467
        %v6469 = vpop.f32.mrf.mxu0
        %v6470 = vpop.f32.mrf.mxu0
        %v6471 = vadd.f32 %v6406, %v6470
        %v6472 = vpop.f32.mrf.mxu0
        %6473 = vmatprep.mubr.bf16.mxu0 %v5751
        %6474 = vmatmul.mubr.bf16.gmra.mxu0 %v5750
        %v6475 = vpop.f32.mrf.mxu0
        %v6476 = vadd.f32 %v6411, %v6475
        %v6477 = vpop.f32.mrf.mxu0
        %v6478 = vpop.f32.mrf.mxu0
        %v6479 = vadd.f32 %v6414, %v6478
        %v6480 = vpop.f32.mrf.mxu0
        %6481 = vmatprep.mubr.bf16.mxu0 %v5760
        %6482 = vmatmul.mubr.bf16.gmra.mxu0 %v5759
        %v6483 = vpop.f32.mrf.mxu0
        %v6484 = vadd.f32 %v6419, %v6483
        %v6485 = vpop.f32.mrf.mxu0
        %v6486 = vpop.f32.mrf.mxu0
        %v6487 = vadd.f32 %v6422, %v6486
        %v6488 = vpop.f32.mrf.mxu0
        %6489 = vdwg.mxu0
        %6490 = vmatprep.subr.bf16.mxu0 0
        %6491 = vmatpush1.bf16.msra.mxu0 %v6157
        %6492 = vmatprep.subr.bf16.mxu0 0
        %6493 = vmatpush1.bf16.msra.mxu0 %v6156
        %6494 = vmatprep.subr.bf16.mxu0 0
        %6495 = vmatpush1.bf16.msra.mxu0 %v6155
        %6496 = vmatprep.subr.bf16.mxu0 0
        %6497 = vmatpush1.bf16.msra.mxu0 %v6154
        %6498 = vmatprep.subr.bf16.mxu0 0
        %6499 = vmatpush1.bf16.msra.mxu0 %v6153
        %6500 = vmatprep.subr.bf16.mxu0 0
        %6501 = vmatpush1.bf16.msra.mxu0 %v6152
        %6502 = vmatprep.subr.bf16.mxu0 0
        %6503 = vmatpush1.bf16.msra.mxu0 %v6151
        %6504 = vmatprep.subr.bf16.mxu0 0
        %6505 = vmatpush1.bf16.msra.mxu0 %v6150
        %6506 = vmatprep.subr.bf16.mxu0 0
        %6507 = vmatpush2.bf16.msra.mxu0 0
        %6508 = vmatprep.subr.bf16.mxu0 0
        %6509 = vmatpush2.bf16.msra.mxu0 0
        %6510 = vmatprep.subr.bf16.mxu0 0
        %6511 = vmatpush2.bf16.msra.mxu0 0
        %6512 = vmatprep.subr.bf16.mxu0 0
        %6513 = vmatpush2.bf16.msra.mxu0 0
        %6514 = vmatprep.subr.bf16.mxu0 0
        %6515 = vmatpush2.bf16.msra.mxu0 0
        %6516 = vmatprep.subr.bf16.mxu0 0
        %6517 = vmatpush2.bf16.msra.mxu0 0
        %6518 = vmatprep.subr.bf16.mxu0 0
        %6519 = vmatpush2.bf16.msra.mxu0 0
        %6520 = vmatprep.subr.bf16.mxu0 0
        %6521 = vmatpush2.bf16.msra.mxu0 0
        %6522 = vmatprep.mubr.bf16.mxu0 0
        %6523 = vmatmul.mubr.bf16.gmra.mxu0 %v5734
        %v6524 = vpop.f32.mrf.mxu0
        %v6525 = vadd.f32 %v6460, %v6524
        %v6526 = vpop.f32.mrf.mxu0
        %v6527 = vpop.f32.mrf.mxu0
        %v6528 = vadd.f32 %v6463, %v6527
        %v6529 = vpop.f32.mrf.mxu0
        %6530 = vmatprep.mubr.bf16.mxu0 0
        %6531 = vmatmul.mubr.bf16.gmra.mxu0 %v5743
        %v6532 = vpop.f32.mrf.mxu0
        %v6533 = vadd.f32 %v6468, %v6532
        %v6534 = vpop.f32.mrf.mxu0
        %v6535 = vpop.f32.mrf.mxu0
        %v6536 = vadd.f32 %v6471, %v6535
        %v6537 = vpop.f32.mrf.mxu0
        %6538 = vmatprep.mubr.bf16.mxu0 0
        %6539 = vmatmul.mubr.bf16.gmra.mxu0 %v5752
        %v6540 = vpop.f32.mrf.mxu0
        %v6541 = vadd.f32 %v6476, %v6540
        %v6542 = vpop.f32.mrf.mxu0
        %v6543 = vpop.f32.mrf.mxu0
        %v6544 = vadd.f32 %v6479, %v6543
        %v6545 = vpop.f32.mrf.mxu0
        %6546 = vmatprep.mubr.bf16.mxu0 0
        %6547 = vmatmul.mubr.bf16.gmra.mxu0 %v5761
        %v6548 = vpop.f32.mrf.mxu0
        %v6549 = vadd.f32 %v6484, %v6548
        %v6550 = vpop.f32.mrf.mxu0
        %v6551 = vpop.f32.mrf.mxu0
        %v6552 = vadd.f32 %v6487, %v6551
        %v6553 = vpop.f32.mrf.mxu0
        %6554 = vdwg.mxu0
        %v6555 = vmul.f32 %v6525, 0.5
        %v6556 = vmul.f32 %v6528, 0.5
        %v6557 = vmul.f32 %v6533, 0.5
        %v6558 = vmul.f32 %v6536, 0.5
        %v6559 = vmul.f32 %v6541, 0.5
        %v6560 = vmul.f32 %v6544, 0.5
        %v6561 = vmul.f32 %v6549, 0.5
        %v6562 = vmul.f32 %v6552, 0.5
        %v6563 = vtanh.pop %v6555
        %v6564 = vtanh.pop %v6556
        %v6565 = vtanh.pop %v6557
        %v6566 = vtanh.pop %v6558
        %v6567 = vtanh.pop %v6559
        %v6568 = vtanh.pop %v6560
        %v6569 = vtanh.pop %v6561
        %v6570 = vtanh.pop %v6562
        %v6571 = vmul.f32 %v6563, 0.5
        %v6572 = vmul.f32 %v6564, 0.5
        %v6573 = vmul.f32 %v6565, 0.5
        %v6574 = vmul.f32 %v6566, 0.5
        %v6575 = vmul.f32 %v6567, 0.5
        %v6576 = vmul.f32 %v6568, 0.5
        %v6577 = vmul.f32 %v6569, 0.5
        %v6578 = vmul.f32 %v6570, 0.5
        %v6579 = vadd.f32 %v6571, 0.5
        %v6580 = vadd.f32 %v6572, 0.5
        %v6581 = vadd.f32 %v6573, 0.5
        %v6582 = vadd.f32 %v6574, 0.5
        %v6583 = vadd.f32 %v6575, 0.5
        %v6584 = vadd.f32 %v6576, 0.5
        %v6585 = vadd.f32 %v6577, 0.5
        %v6586 = vadd.f32 %v6578, 0.5
        %v6587 = vpack.c.bf16 %v6579, %v6579
        %v6588 = vpack.c.bf16 %v6580, %v6580
        %v6589 = vpack.c.bf16 %v6581, %v6581
        %v6590 = vpack.c.bf16 %v6582, %v6582
        %v6591 = vpack.c.bf16 %v6583, %v6583
        %v6592 = vpack.c.bf16 %v6584, %v6584
        %v6593 = vpack.c.bf16 %v6585, %v6585
        %v6594 = vpack.c.bf16 %v6586, %v6586
        %6595 = vst [vmem:[%s384] sm:$0xf] %v6587
        %6596 = vst [vmem:[%s384 + $0x4] sm:$0xf] %v6588
        %6597 = vst [vmem:[%s384 + $0x8] sm:$0xf] %v6589
        %6598 = vst [vmem:[%s384 + $0xc] sm:$0xf] %v6590
        %6599 = vst [vmem:[%s384 + $0x10] sm:$0xf] %v6591
        %6600 = vst [vmem:[%s384 + $0x14] sm:$0xf] %v6592
        %6601 = vst [vmem:[%s384 + $0x18] sm:$0xf] %v6593
        %6602 = vst [vmem:[%s384 + $0x1c] sm:$0xf] %v6594
        %s6603 = sand.u32 %s189, 1
        %s6604 = scalar_lea.sflag [#allocation6], %s6603
        %s6605 = sand.u32 %s189, 1
        %s6606 = smul.addr %s6605, 32
        %s6607 = scalar_lea.vmem [#allocation12], %s6606
        // Predicated region
        $region65: #{tpu_custom_call.1} parent=43 // pred_check
          %p6608 = pneg %p199
        $region66: #{tpu_custom_call.1} parent=43 // pred_check_branch
          %6610 = sbr.rel (%p6608) target = $region68
        $region67: #{tpu_custom_call.1} parent=43 // pred_region
          %s6612 = ssub.s32 512, 512
          %6613 = vsyncadd %s6604, %s6612
          %s6614 = smul.addr %s29, 8
          %s6615 = smul.addr %s28, 16
          %s6616 = sadd.s32 %s6614, %s6615
          %s6617 = smul.addr %s6616, 64
          %s6618 = scalar_lea.hbm %s6, %s6617
          %s6619 = sshll.u32 %s6607, 4
          %s6620 = int_to_ptr.vmem [resolvable:$true] %s6619
          %6625 = dma.vmem_to_hbm [thread:$0]  %s6620, 512, %s6618, %s6604, 64, 64, 4
        $region68: #{tpu_custom_call.1} parent=43 // pred_fallthru
          _
      $region44: #{tpu_custom_call.1} parent=5 // pred_fallthru
        _
      %p6626 = scmp.le.s32.totalorder 2, %s19
      // Predicated region
      $region69: #{tpu_custom_call.1} parent=5 // pred_check
        %p6627 = pneg %p6626
      $region70: #{tpu_custom_call.1} parent=5 // pred_check_branch
        %6629 = sbr.rel (%p6627) target = $region72
      $region71: #{tpu_custom_call.1} parent=5 // pred_region
        %s6630 = ssub.s32 %s19, 2
        // Predicated region
        $region73: #{tpu_custom_call.1} parent=71 // pred_check
          %p6631 = pneg %p205
        $region74: #{tpu_custom_call.1} parent=71 // pred_check_branch
          %6633 = sbr.rel (%p6631) target = $region76
        $region75: #{tpu_custom_call.1} parent=71 // pred_region
          %s6634 = sand.u32 %s190, 1
          %s6635 = scalar_lea.sflag [#allocation6], %s6634
          %s6636 = sand.u32 %s190, 1
          %s6637 = smul.addr %s6636, 32
          %s6638 = scalar_lea.vmem [#allocation12], %s6637
          %6639 = dma.done %s6635, 512
        $region76: #{tpu_custom_call.1} parent=71 // pred_fallthru
          _
      $region72: #{tpu_custom_call.1} parent=5 // pred_fallthru
        _
    $region6: #{tpu_custom_call.1} parent=1 // loop_footer
      %s23 = sadd.s32 1, %s19
    $region7: #{tpu_custom_call.1} parent=1 // loop_footer_branch
      %18 = sbr.rel target = $region3
    $region8: #{tpu_custom_call.1} parent=1 // loop_exit
      _
    %6640 = vsyncpa [#allocation5], 1
    %s6641 = scalar_lea.sflag [#allocation5], 1
    %6642 = vsyncpa %s6641, 1
    %6643 = vsyncpa [#allocation8], 1
    %6644 = vsyncpa [#allocation6], 1
    %s6645 = scalar_lea.sflag [#allocation6], 1
    %6646 = vsyncpa %s6645, 1

</llo_original>
